<compile_context>
chip_gen: v7x
topology: tpu7x:2x2x1
jax: 0.10.0
libtpu: 0.0.40
codegen_flags: <defaults>
</compile_context>

<pallas_src>
import functools
import math

import jax
import jax.numpy as jnp
from jax.experimental import pallas as pl
from jax.experimental.pallas import tpu as pltpu


# ---------------------------------------------------------------------------
# Pallas kernel: one (Cout tile, batch element) per grid step, all 5 branches.
# ---------------------------------------------------------------------------
def aspp_kernel(x_ref, w1_ref, w2_ref, w3_ref, w4_ref, w5_ref,
                scale_ref, bias_ref, out_ref, acc_ref, *,
                branch_groups, inv_hw):
    x = x_ref[0]                              # (H, Wp, Cin) bf16
    H, Wp, Cin = x.shape
    Ct = out_ref.shape[-1]                    # Cout tile width
    HW = H * Wp
    xf = x.reshape(HW, Cin)                   # free relayout (Wp % 8 == 0)

    def bn_relu(z, b):                        # folded inference BN + ReLU (f32)
        return jnp.maximum(z * scale_ref[b] + bias_ref[b], 0.0)

    # --- branch 0: global average pool -> 1x1 conv -> BN -> ReLU -> broadcast.
    # GAP as a ones-row MXU matmul: no f32 copy of the image, cheap enough to
    # recompute every grid step (padded W columns are zeros -> do not bias it).
    ones = jnp.full((1, HW), 1.0, dtype=jnp.bfloat16)
    gap = jnp.dot(ones, xf, preferred_element_type=jnp.float32) * inv_hw
    f1 = jnp.dot(gap.astype(jnp.bfloat16), w1_ref[...],
                 preferred_element_type=jnp.float32)            # (1, Ct)
    f1 = bn_relu(f1, 0).astype(out_ref.dtype)
    # bilinear upsample(align_corners=True) from a 1x1 map == broadcast.
    out_ref[0, 0] = jnp.broadcast_to(f1.reshape(1, 1, Ct), (H, Wp, Ct))

    # --- branch 1: 1x1 conv -> BN -> ReLU.
    f2 = jnp.dot(xf, w2_ref[...], preferred_element_type=jnp.float32)
    out_ref[0, 1] = bn_relu(f2, 1).reshape(H, Wp, Ct).astype(out_ref.dtype)

    # --- branches 2..4: dilated 3x3 conv (padding == dilation) -> BN -> ReLU.
    def dilated_branch(w_ref, groups, b):
        col = 0
        first_group = True
        for sx, sys in groups:                # one matmul per sx (W-shift) group
            g = len(sys)
            res = jnp.dot(xf, w_ref[0, :, col * Ct:(col + g) * Ct],
                          preferred_element_type=jnp.float32)   # (HW, g*Ct) f32
            col += g
            dw0, dw1 = max(0, -sx), Wp - max(0, sx)             # acc W window
            sw0, sw1 = max(0, sx), Wp - max(0, -sx)             # tap W window
            taps = [res[:, t * Ct:(t + 1) * Ct].reshape(H, Wp, Ct)[:, sw0:sw1, :]
                    for t in range(g)]
            # Static row segments: inside each segment a fixed subset of taps
            # contributes, so the accumulator window is read/written exactly
            # once per row per group (not once per tap).
            bounds = sorted({0, H}
                            | {max(0, -sy) for sy in sys}
                            | {H - max(0, sy) for sy in sys})
            for r0, r1 in zip(bounds[:-1], bounds[1:]):
                if r1 <= r0:
                    continue
                addend = None                 # sy == 0 always contributes
                for t, sy in enumerate(sys):
                    if max(0, -sy) <= r0 and r1 <= H - max(0, sy):
                        piece = taps[t][r0 + sy:r1 + sy]
                        addend = piece if addend is None else addend + piece
                if first_group:               # sx == 0 group first: full init
                    acc_ref[r0:r1, dw0:dw1, :] = addend
                else:
                    acc_ref[r0:r1, dw0:dw1, :] = (
                        acc_ref[r0:r1, dw0:dw1, :] + addend)
            first_group = False
        out_ref[0, b] = bn_relu(acc_ref[...], b).astype(out_ref.dtype)

    dilated_branch(w3_ref, branch_groups[0], 2)
    dilated_branch(w4_ref, branch_groups[1], 3)
    dilated_branch(w5_ref, branch_groups[2], 4)


# ---------------------------------------------------------------------------
# Wrapper-side static preparation.
# ---------------------------------------------------------------------------
def _tap_groups(d, H, W):
    """Taps of a 3x3 conv (dilation d, zero padding d), grouped by W shift sx.
    Taps whose shift lands entirely in the zero padding of the *original*
    image contribute nothing and are dropped.  The sx == 0 group comes first
    and sy == 0 first within each group (used for accumulator init)."""
    sys = tuple(sy for sy in (0, -d, d) if abs(sy) < H)
    return tuple((sx, sys) for sx in (0, -d, d) if abs(sx) < W)


def _flatten_grouped_weight(w, groups, d, n_ct, ct):
    """(3,3,Cin,Cout) HWIO -> (n_ct, Cin, T*ct): per Cout tile, kept taps are
    concatenated on the lane axis in group order so each sx group is a single
    (HW,Cin)x(Cin,g*ct) matmul."""
    tiles = []
    for j in range(n_ct):
        cols = []
        for sx, sys in groups:
            for sy in sys:
                cols.append(w[sy // d + 1, sx // d + 1, :, j * ct:(j + 1) * ct])
        tiles.append(jnp.concatenate(cols, axis=1))
    return jnp.stack(tiles, axis=0)


def _device_kind():
    try:
        return jax.devices()[0].device_kind.lower()
    except Exception:
        return ""


def _pick_ct(cout):
    """Lane-dense Cout tile width; 256 fills the 2x256^2 MXU on v6e/v7x."""
    kind = _device_kind()
    if "v5" not in kind and cout % 256 == 0:
        return 256
    if cout % 128 == 0:
        return 128
    return cout                                # small Cout: one full-width tile


def _vmem_cap_bytes():
    kind = _device_kind()
    if "v5" in kind or "v6" in kind:
        return 100 * 2**20                     # 128 MiB physical per core
    return 52 * 2**20                          # v7x: 64 MiB physical; headroom


# ---------------------------------------------------------------------------
# Pallas call (NHWC, W already padded to a multiple of 8; bf16 in/out).
# ---------------------------------------------------------------------------
def _aspp_pallas_nhwc(x_nhwc, params, dilations, h_orig, w_orig):
    N, H, Wp, Cin = x_nhwc.shape
    Cout = params["w2"].shape[-1]
    ct = _pick_ct(Cout)
    n_ct = Cout // ct

    branch_groups = tuple(_tap_groups(d, h_orig, w_orig) for d in dilations)

    w1 = params["w1"].astype(jnp.bfloat16)
    w2 = params["w2"].astype(jnp.bfloat16)
    w_dil = [
        _flatten_grouped_weight(params[k], g, d, n_ct, ct).astype(jnp.bfloat16)
        for k, g, d in zip(("w3", "w4", "w5"), branch_groups, dilations)
    ]
    scale = params["scale"].astype(jnp.float32)
    bias = params["bias"].astype(jnp.float32)

    kernel = functools.partial(aspp_kernel, branch_groups=branch_groups,
                               inv_hw=1.0 / float(h_orig * w_orig))

    # Size the scoped-VMEM limit from the actual (double-buffered) block bytes,
    # including the live f32 matmul intermediates and the accumulator.
    def nbytes(shape, dt):
        return math.prod(shape) * jnp.dtype(dt).itemsize
    est = (2 * nbytes((H, Wp, Cin), jnp.bfloat16)            # input x2 buffers
           + 4 * nbytes((Cin, ct), jnp.bfloat16)             # w1, w2
           + 2 * sum(nbytes(w.shape[1:], jnp.bfloat16) for w in w_dil)
           + 4 * nbytes((8, 5, max(ct, 128)), jnp.float32)   # scale/bias padded
           + 2 * nbytes((5, H, Wp, ct), jnp.bfloat16)        # bf16 output block
           + nbytes((H, Wp, ct), jnp.float32)                # acc scratch
           + 4 * nbytes((H * Wp, 3 * ct), jnp.float32))      # f32 group result
    vmem_limit = int(min(_vmem_cap_bytes(), max(32 * 2**20, int(est * 1.25))))

    return pl.pallas_call(
        kernel,
        out_shape=jax.ShapeDtypeStruct((N, 5, H, Wp, Cout), jnp.bfloat16),
        grid_spec=pltpu.PrefetchScalarGridSpec(
            num_scalar_prefetch=0,
            # Cout-tile axis outer -> dilated weights stay VMEM-resident
            # across all N inner steps (fetched once per Cout tile).
            grid=(n_ct, N),
            in_specs=[
                pl.BlockSpec((1, H, Wp, Cin), lambda j, n: (n, 0, 0, 0)),
                pl.BlockSpec((Cin, ct), lambda j, n: (0, j)),
                pl.BlockSpec((Cin, ct), lambda j, n: (0, j)),
                pl.BlockSpec((1, Cin, w_dil[0].shape[-1]),
                             lambda j, n: (j, 0, 0)),
                pl.BlockSpec((1, Cin, w_dil[1].shape[-1]),
                             lambda j, n: (j, 0, 0)),
                pl.BlockSpec((1, Cin, w_dil[2].shape[-1]),
                             lambda j, n: (j, 0, 0)),
                pl.BlockSpec((5, 1, ct), lambda j, n: (0, 0, j)),
                pl.BlockSpec((5, 1, ct), lambda j, n: (0, 0, j)),
            ],
            out_specs=pl.BlockSpec((1, 5, H, Wp, ct),
                                   lambda j, n: (n, 0, 0, 0, j)),
            scratch_shapes=[
                pltpu.VMEM((H, Wp, ct), jnp.float32),   # dilated-branch accum
            ],
        ),
        compiler_params=pltpu.CompilerParams(
            # No carried state (GAP recomputed per step, acc fully re-init'd),
            # so both axes are parallel -> megacore-friendly even at N == 1.
            dimension_semantics=("parallel", "parallel"),
            vmem_limit_bytes=vmem_limit),
    )(x_nhwc, w1, w2, w_dil[0], w_dil[1], w_dil[2], scale, bias)


# ---------------------------------------------------------------------------
# NCHW wrapper (matches the PyTorch module interface).
# NOTE: transposes / f32 cast below are interface adapters only; NHWC / bf16
# consumers should take the kernel's native (N, 5, H, Wp, Cout) output.
# ---------------------------------------------------------------------------
def aspp_forward(x_nchw, params, dilations=(12, 24, 36)):
    N, Cin, H, W = x_nchw.shape
    Cout = params["w2"].shape[-1]
    # Single cast NCHW f32 -> NHWC bf16; pad W (the in-kernel sublane dim) to a
    # multiple of 8 with zeros so reshapes / W-window slices are tile aligned.
    x = jnp.transpose(x_nchw, (0, 2, 3, 1)).astype(jnp.bfloat16)
    wp = -(-W // 8) * 8
    if wp != W:
        x = jnp.pad(x, ((0, 0), (0, 0), (0, wp - W), (0, 0)))
    out5 = _aspp_pallas_nhwc(x, params, dilations, H, W)   # (N,5,H,Wp,C) bf16
    out5 = out5[:, :, :, :W, :]
    # (N, 5, H, W, Cout) -> (N, 5*Cout, H, W) == torch.cat(feats, dim=1)
    return (jnp.transpose(out5, (0, 1, 4, 2, 3))
            .reshape(N, 5 * Cout, H, W).astype(jnp.float32))


# ---------------------------------------------------------------------------
# Pure-JAX f32 reference (module semantics) for the correctness check.
# ---------------------------------------------------------------------------
def aspp_reference(x_nchw, params, dilations=(12, 24, 36)):
    x = jnp.transpose(x_nchw, (0, 2, 3, 1)).astype(jnp.float32)     # NHWC
    N, H, W, _ = x.shape
    Cout = params["w2"].shape[-1]
    dn = ("NHWC", "HWIO", "NHWC")

    def bn_relu(z, b):
        return jnp.maximum(z * params["scale"][b, 0] + params["bias"][b, 0], 0.0)

    gap = jnp.mean(x, axis=(1, 2), keepdims=True)
    f1 = bn_relu(jnp.einsum("nhwc,cd->nhwd", gap, params["w1"]), 0)
    f1 = jnp.broadcast_to(f1, (N, H, W, Cout))
    f2 = bn_relu(jnp.einsum("nhwc,cd->nhwd", x, params["w2"]), 1)
    feats = [f1, f2]
    for i, (w, d) in enumerate(
            zip((params["w3"], params["w4"], params["w5"]), dilations)):
        z = jax.lax.conv_general_dilated(
            x, w, window_strides=(1, 1), padding=[(d, d), (d, d)],
            rhs_dilation=(d, d), dimension_numbers=dn)
        feats.append(bn_relu(z, i + 2))
    out = jnp.stack(feats, axis=1)                                  # (N,5,H,W,C)
    return jnp.transpose(out, (0, 1, 4, 2, 3)).reshape(N, 5 * Cout, H, W)


# ---------------------------------------------------------------------------
# Deterministic parameter construction (conv weights in HWIO / (Cin,Cout)).
# ---------------------------------------------------------------------------
def make_params(key, in_planes, inner_planes):
    ks = jax.random.split(key, 10)
    w1 = jax.random.normal(ks[0], (in_planes, inner_planes), jnp.float32) * 0.1
    w2 = jax.random.normal(ks[1], (in_planes, inner_planes), jnp.float32) * 0.1
    w3 = jax.random.normal(ks[2], (3, 3, in_planes, inner_planes), jnp.float32) * 0.1
    w4 = jax.random.normal(ks[3], (3, 3, in_planes, inner_planes), jnp.float32) * 0.1
    w5 = jax.random.normal(ks[4], (3, 3, in_planes, inner_planes), jnp.float32) * 0.1

    # Folded inference-mode BatchNorm per branch: scale = g/sqrt(v+eps),
    # bias = b - m*scale.
    eps = 1e-5
    gamma = jax.random.uniform(ks[5], (5, 1, inner_planes), jnp.float32, 0.5, 1.5)
    beta = jax.random.normal(ks[6], (5, 1, inner_planes), jnp.float32) * 0.1
    mean = jax.random.normal(ks[7], (5, 1, inner_planes), jnp.float32) * 0.1
    var = jax.random.uniform(ks[8], (5, 1, inner_planes), jnp.float32, 0.5, 1.5)
    scale = gamma / jnp.sqrt(var + eps)
    bias = beta - mean * scale

    return dict(w1=w1, w2=w2, w3=w3, w4=w4, w5=w5, scale=scale, bias=bias)


if __name__ == "__main__":
    N, Cin, H, W = 2, 8, 16, 16
    inner = 32
    dilations = (12, 24, 36)

    key = jax.random.PRNGKey(0)
    kx, kp = jax.random.split(key)
    x = jax.random.normal(kx, (N, Cin, H, W), jnp.float32)           # NCHW
    params = make_params(kp, Cin, inner)

    out = jax.block_until_ready(aspp_forward(x, params, dilations))
    ref = jax.block_until_ready(aspp_reference(x, params, dilations))

    assert out.shape == (N, 5 * inner, H, W), out.shape
    # bf16 matmul inputs + bf16 output (f32 accumulation) -> loosened tolerance.
    err = float(jnp.max(jnp.abs(out - ref)))
    assert jnp.allclose(out, ref, atol=7e-2, rtol=7e-2), err

    print("KERNEL_OK")
</pallas_src>

<mosaic_0001>
module attributes {stable_mosaic.version = 11 : i64} {
  func.func @aspp_kernel(%arg0: i32, %arg1: i32, %arg2: memref<1x16x16x8xbf16, #tpu.memory_space<vmem>>, %arg3: memref<8x32xbf16, #tpu.memory_space<vmem>>, %arg4: memref<8x32xbf16, #tpu.memory_space<vmem>>, %arg5: memref<1x8x288xbf16, #tpu.memory_space<vmem>>, %arg6: memref<1x8x32xbf16, #tpu.memory_space<vmem>>, %arg7: memref<1x8x32xbf16, #tpu.memory_space<vmem>>, %arg8: memref<5x1x32xf32, #tpu.memory_space<vmem>>, %arg9: memref<5x1x32xf32, #tpu.memory_space<vmem>>, %arg10: memref<1x5x16x16x32xbf16, #tpu.memory_space<vmem>>, %arg11: memref<16x16x32xf32, #tpu.memory_space<vmem>>) attributes {dimension_semantics = [#tpu.dimension_semantics<parallel>, #tpu.dimension_semantics<parallel>], iteration_bounds = array<i64: 1, 2>, scalar_prefetch = 0 : i64, scratch_operands = 1 : i64, tpu.core_type = #tpu.core_type<tc>, window_params = [{transform_indices = @transform_0, window_bounds = array<i64: 1, 16, 16, 8>}, {transform_indices = @transform_1, window_bounds = array<i64: 8, 32>}, {transform_indices = @transform_2, window_bounds = array<i64: 8, 32>}, {transform_indices = @transform_3, window_bounds = array<i64: 1, 8, 288>}, {transform_indices = @transform_4, window_bounds = array<i64: 1, 8, 32>}, {transform_indices = @transform_5, window_bounds = array<i64: 1, 8, 32>}, {transform_indices = @transform_6, window_bounds = array<i64: 5, 1, 32>}, {transform_indices = @transform_7, window_bounds = array<i64: 5, 1, 32>}, {transform_indices = @transform_8, window_bounds = array<i64: 1, 5, 16, 16, 32>}]} {
    %c0 = arith.constant 0 : index
    %c0_0 = arith.constant 0 : index
    %c0_1 = arith.constant 0 : index
    %c0_2 = arith.constant 0 : index
    %0 = vector.load %arg2[%c0, %c0_0, %c0_1, %c0_2] : memref<1x16x16x8xbf16, #tpu.memory_space<vmem>>, vector<1x16x16x8xbf16>
    %1 = vector.shape_cast %0 : vector<1x16x16x8xbf16> to vector<16x16x8xbf16>
    %2 = vector.shape_cast %1 : vector<16x16x8xbf16> to vector<256x8xbf16>
    %cst = arith.constant 1.000000e+00 : bf16
    %3 = vector.broadcast %cst : bf16 to vector<1x256xbf16>
    %cst_3 = arith.constant dense<0.000000e+00> : vector<1x8xf32>
    %4 = tpu.matmul %3, %2, %cst_3 {dimension_numbers = #tpu.dot_dimension_numbers<[1], [0], [0], [1], [0, 0, 1, 1], [], []>} : vector<1x256xbf16>, vector<256x8xbf16>, vector<1x8xf32> -> vector<1x8xf32>
    %cst_4 = arith.constant 3.906250e-03 : f32
    %5 = vector.broadcast %cst_4 : f32 to vector<1x8xf32>
    %6 = arith.mulf %4, %5 : vector<1x8xf32>
    %7 = arith.truncf %6 : vector<1x8xf32> to vector<1x8xbf16>
    %c0_5 = arith.constant 0 : index
    %c0_6 = arith.constant 0 : index
    %8 = vector.load %arg3[%c0_5, %c0_6] : memref<8x32xbf16, #tpu.memory_space<vmem>>, vector<8x32xbf16>
    %cst_7 = arith.constant dense<0.000000e+00> : vector<1x32xf32>
    %9 = tpu.matmul %7, %8, %cst_7 {dimension_numbers = #tpu.dot_dimension_numbers<[1], [0], [0], [1], [0, 0, 1, 1], [], []>} : vector<1x8xbf16>, vector<8x32xbf16>, vector<1x32xf32> -> vector<1x32xf32>
    %c0_8 = arith.constant 0 : index
    %c0_9 = arith.constant 0 : index
    %c0_10 = arith.constant 0 : index
    %10 = vector.load %arg8[%c0_8, %c0_9, %c0_10] : memref<5x1x32xf32, #tpu.memory_space<vmem>>, vector<1x1x32xf32>
    %11 = vector.shape_cast %10 : vector<1x1x32xf32> to vector<1x32xf32>
    %12 = arith.mulf %9, %11 : vector<1x32xf32>
    %c0_11 = arith.constant 0 : index
    %c0_12 = arith.constant 0 : index
    %c0_13 = arith.constant 0 : index
    %13 = vector.load %arg9[%c0_11, %c0_12, %c0_13] : memref<5x1x32xf32, #tpu.memory_space<vmem>>, vector<1x1x32xf32>
    %14 = vector.shape_cast %13 : vector<1x1x32xf32> to vector<1x32xf32>
    %15 = arith.addf %12, %14 : vector<1x32xf32>
    %cst_14 = arith.constant 0.000000e+00 : f32
    %16 = vector.broadcast %cst_14 : f32 to vector<1x32xf32>
    %17 = arith.maximumf %15, %16 : vector<1x32xf32>
    %18 = arith.truncf %17 : vector<1x32xf32> to vector<1x32xbf16>
    %19 = vector.shape_cast %18 : vector<1x32xbf16> to vector<1x1x32xbf16>
    %20 = vector.shape_cast %19 : vector<1x1x32xbf16> to vector<1x1x32xbf16>
    %21 = vector.broadcast %20 : vector<1x1x32xbf16> to vector<16x16x32xbf16>
    %c0_15 = arith.constant 0 : index
    %c0_16 = arith.constant 0 : index
    %c0_17 = arith.constant 0 : index
    %c0_18 = arith.constant 0 : index
    %c0_19 = arith.constant 0 : index
    %22 = vector.load %arg10[%c0_15, %c0_16, %c0_17, %c0_18, %c0_19] : memref<1x5x16x16x32xbf16, #tpu.memory_space<vmem>>, vector<1x1x16x16x32xbf16>
    %23 = vector.shape_cast %22 : vector<1x1x16x16x32xbf16> to vector<16x16x32xbf16>
    %24 = vector.shape_cast %21 : vector<16x16x32xbf16> to vector<1x1x16x16x32xbf16>
    tpu.vector_store %arg10[%c0_15, %c0_16, %c0_17, %c0_18, %c0_19], %24 {strides = array<i32>} : memref<1x5x16x16x32xbf16, #tpu.memory_space<vmem>>, vector<1x1x16x16x32xbf16>,
    %c0_20 = arith.constant 0 : index
    %c0_21 = arith.constant 0 : index
    %25 = vector.load %arg4[%c0_20, %c0_21] : memref<8x32xbf16, #tpu.memory_space<vmem>>, vector<8x32xbf16>
    %cst_22 = arith.constant dense<0.000000e+00> : vector<256x32xf32>
    %26 = tpu.matmul %2, %25, %cst_22 {dimension_numbers = #tpu.dot_dimension_numbers<[1], [0], [0], [1], [0, 0, 1, 1], [], []>} : vector<256x8xbf16>, vector<8x32xbf16>, vector<256x32xf32> -> vector<256x32xf32>
    %c1 = arith.constant 1 : index
    %c0_23 = arith.constant 0 : index
    %c0_24 = arith.constant 0 : index
    %27 = vector.load %arg8[%c1, %c0_23, %c0_24] : memref<5x1x32xf32, #tpu.memory_space<vmem>>, vector<1x1x32xf32>
    %28 = vector.shape_cast %27 : vector<1x1x32xf32> to vector<1x32xf32>
    %29 = vector.broadcast %28 : vector<1x32xf32> to vector<256x32xf32>
    %30 = arith.mulf %26, %29 : vector<256x32xf32>
    %c1_25 = arith.constant 1 : index
    %c0_26 = arith.constant 0 : index
    %c0_27 = arith.constant 0 : index
    %31 = vector.load %arg9[%c1_25, %c0_26, %c0_27] : memref<5x1x32xf32, #tpu.memory_space<vmem>>, vector<1x1x32xf32>
    %32 = vector.shape_cast %31 : vector<1x1x32xf32> to vector<1x32xf32>
    %33 = vector.broadcast %32 : vector<1x32xf32> to vector<256x32xf32>
    %34 = arith.addf %30, %33 : vector<256x32xf32>
    %cst_28 = arith.constant 0.000000e+00 : f32
    %35 = vector.broadcast %cst_28 : f32 to vector<256x32xf32>
    %36 = arith.maximumf %34, %35 : vector<256x32xf32>
    %37 = vector.shape_cast %36 : vector<256x32xf32> to vector<16x16x32xf32>
    %38 = arith.truncf %37 : vector<16x16x32xf32> to vector<16x16x32xbf16>
    %c0_29 = arith.constant 0 : index
    %c1_30 = arith.constant 1 : index
    %c0_31 = arith.constant 0 : index
    %c0_32 = arith.constant 0 : index
    %c0_33 = arith.constant 0 : index
    %39 = vector.load %arg10[%c0_29, %c1_30, %c0_31, %c0_32, %c0_33] : memref<1x5x16x16x32xbf16, #tpu.memory_space<vmem>>, vector<1x1x16x16x32xbf16>
    %40 = vector.shape_cast %39 : vector<1x1x16x16x32xbf16> to vector<16x16x32xbf16>
    %41 = vector.shape_cast %38 : vector<16x16x32xbf16> to vector<1x1x16x16x32xbf16>
    tpu.vector_store %arg10[%c0_29, %c1_30, %c0_31, %c0_32, %c0_33], %41 {strides = array<i32>} : memref<1x5x16x16x32xbf16, #tpu.memory_space<vmem>>, vector<1x1x16x16x32xbf16>,
    %c0_34 = arith.constant 0 : index
    %c0_35 = arith.constant 0 : index
    %c0_36 = arith.constant 0 : index
    %42 = vector.load %arg5[%c0_34, %c0_35, %c0_36] : memref<1x8x288xbf16, #tpu.memory_space<vmem>>, vector<1x8x96xbf16>
    %43 = vector.shape_cast %42 : vector<1x8x96xbf16> to vector<8x96xbf16>
    %cst_37 = arith.constant dense<0.000000e+00> : vector<256x96xf32>
    %44 = tpu.matmul %2, %43, %cst_37 {dimension_numbers = #tpu.dot_dimension_numbers<[1], [0], [0], [1], [0, 0, 1, 1], [], []>} : vector<256x8xbf16>, vector<8x96xbf16>, vector<256x96xf32> -> vector<256x96xf32>
    %45 = vector.extract_strided_slice %44 {offsets = [0, 0], sizes = [256, 32], strides = [1, 1]} : vector<256x96xf32> to vector<256x32xf32>
    %46 = vector.shape_cast %45 : vector<256x32xf32> to vector<16x16x32xf32>
    %47 = vector.extract_strided_slice %44 {offsets = [0, 32], sizes = [256, 32], strides = [1, 1]} : vector<256x96xf32> to vector<256x32xf32>
    %48 = vector.shape_cast %47 : vector<256x32xf32> to vector<16x16x32xf32>
    %49 = vector.extract_strided_slice %44 {offsets = [0, 64], sizes = [256, 32], strides = [1, 1]} : vector<256x96xf32> to vector<256x32xf32>
    %50 = vector.shape_cast %49 : vector<256x32xf32> to vector<16x16x32xf32>
    %51 = vector.extract_strided_slice %46 {offsets = [0, 0, 0], sizes = [4, 16, 32], strides = [1, 1, 1]} : vector<16x16x32xf32> to vector<4x16x32xf32>
    %52 = vector.extract_strided_slice %50 {offsets = [12, 0, 0], sizes = [4, 16, 32], strides = [1, 1, 1]} : vector<16x16x32xf32> to vector<4x16x32xf32>
    %53 = arith.addf %51, %52 : vector<4x16x32xf32>
    %c0_38 = arith.constant 0 : index
    %c0_39 = arith.constant 0 : index
    %c0_40 = arith.constant 0 : index
    %54 = vector.load %arg11[%c0_38, %c0_39, %c0_40] : memref<16x16x32xf32, #tpu.memory_space<vmem>>, vector<4x16x32xf32>
    tpu.vector_store %arg11[%c0_38, %c0_39, %c0_40], %53 {strides = array<i32>} : memref<16x16x32xf32, #tpu.memory_space<vmem>>, vector<4x16x32xf32>,
    %55 = vector.extract_strided_slice %46 {offsets = [4, 0, 0], sizes = [8, 16, 32], strides = [1, 1, 1]} : vector<16x16x32xf32> to vector<8x16x32xf32>
    %c4 = arith.constant 4 : index
    %c0_41 = arith.constant 0 : index
    %c0_42 = arith.constant 0 : index
    %56 = vector.load %arg11[%c4, %c0_41, %c0_42] : memref<16x16x32xf32, #tpu.memory_space<vmem>>, vector<8x16x32xf32>
    tpu.vector_store %arg11[%c4, %c0_41, %c0_42], %55 {strides = array<i32>} : memref<16x16x32xf32, #tpu.memory_space<vmem>>, vector<8x16x32xf32>,
    %57 = vector.extract_strided_slice %46 {offsets = [12, 0, 0], sizes = [4, 16, 32], strides = [1, 1, 1]} : vector<16x16x32xf32> to vector<4x16x32xf32>
    %58 = vector.extract_strided_slice %48 {offsets = [0, 0, 0], sizes = [4, 16, 32], strides = [1, 1, 1]} : vector<16x16x32xf32> to vector<4x16x32xf32>
    %59 = arith.addf %57, %58 : vector<4x16x32xf32>
    %c12 = arith.constant 12 : index
    %c0_43 = arith.constant 0 : index
    %c0_44 = arith.constant 0 : index
    %60 = vector.load %arg11[%c12, %c0_43, %c0_44] : memref<16x16x32xf32, #tpu.memory_space<vmem>>, vector<4x16x32xf32>
    tpu.vector_store %arg11[%c12, %c0_43, %c0_44], %59 {strides = array<i32>} : memref<16x16x32xf32, #tpu.memory_space<vmem>>, vector<4x16x32xf32>,
    %c0_45 = arith.constant 0 : index
    %c0_46 = arith.constant 0 : index
    %c96 = arith.constant 96 : index
    %61 = vector.load %arg5[%c0_45, %c0_46, %c96] : memref<1x8x288xbf16, #tpu.memory_space<vmem>>, vector<1x8x96xbf16>
    %62 = vector.shape_cast %61 : vector<1x8x96xbf16> to vector<8x96xbf16>
    %cst_47 = arith.constant dense<0.000000e+00> : vector<256x96xf32>
    %63 = tpu.matmul %2, %62, %cst_47 {dimension_numbers = #tpu.dot_dimension_numbers<[1], [0], [0], [1], [0, 0, 1, 1], [], []>} : vector<256x8xbf16>, vector<8x96xbf16>, vector<256x96xf32> -> vector<256x96xf32>
    %64 = vector.extract_strided_slice %63 {offsets = [0, 0], sizes = [256, 32], strides = [1, 1]} : vector<256x96xf32> to vector<256x32xf32>
    %65 = vector.shape_cast %64 : vector<256x32xf32> to vector<16x16x32xf32>
    %66 = vector.extract_strided_slice %65 {offsets = [0, 0, 0], sizes = [16, 4, 32], strides = [1, 1, 1]} : vector<16x16x32xf32> to vector<16x4x32xf32>
    %67 = vector.extract_strided_slice %63 {offsets = [0, 32], sizes = [256, 32], strides = [1, 1]} : vector<256x96xf32> to vector<256x32xf32>
    %68 = vector.shape_cast %67 : vector<256x32xf32> to vector<16x16x32xf32>
    %69 = vector.extract_strided_slice %68 {offsets = [0, 0, 0], sizes = [16, 4, 32], strides = [1, 1, 1]} : vector<16x16x32xf32> to vector<16x4x32xf32>
    %70 = vector.extract_strided_slice %63 {offsets = [0, 64], sizes = [256, 32], strides = [1, 1]} : vector<256x96xf32> to vector<256x32xf32>
    %71 = vector.shape_cast %70 : vector<256x32xf32> to vector<16x16x32xf32>
    %72 = vector.extract_strided_slice %71 {offsets = [0, 0, 0], sizes = [16, 4, 32], strides = [1, 1, 1]} : vector<16x16x32xf32> to vector<16x4x32xf32>
    %73 = vector.extract_strided_slice %66 {offsets = [0, 0, 0], sizes = [4, 4, 32], strides = [1, 1, 1]} : vector<16x4x32xf32> to vector<4x4x32xf32>
    %74 = vector.extract_strided_slice %72 {offsets = [12, 0, 0], sizes = [4, 4, 32], strides = [1, 1, 1]} : vector<16x4x32xf32> to vector<4x4x32xf32>
    %75 = arith.addf %73, %74 : vector<4x4x32xf32>
    %c0_48 = arith.constant 0 : index
    %c12_49 = arith.constant 12 : index
    %c0_50 = arith.constant 0 : index
    %76 = vector.load %arg11[%c0_48, %c12_49, %c0_50] : memref<16x16x32xf32, #tpu.memory_space<vmem>>, vector<4x4x32xf32>
    %77 = arith.addf %76, %75 : vector<4x4x32xf32>
    %c0_51 = arith.constant 0 : index
    %c12_52 = arith.constant 12 : index
    %c0_53 = arith.constant 0 : index
    %78 = vector.load %arg11[%c0_51, %c12_52, %c0_53] : memref<16x16x32xf32, #tpu.memory_space<vmem>>, vector<4x4x32xf32>
    tpu.vector_store %arg11[%c0_51, %c12_52, %c0_53], %77 {strides = array<i32>} : memref<16x16x32xf32, #tpu.memory_space<vmem>>, vector<4x4x32xf32>,
    %79 = vector.extract_strided_slice %66 {offsets = [4, 0, 0], sizes = [8, 4, 32], strides = [1, 1, 1]} : vector<16x4x32xf32> to vector<8x4x32xf32>
    %c4_54 = arith.constant 4 : index
    %c12_55 = arith.constant 12 : index
    %c0_56 = arith.constant 0 : index
    %80 = vector.load %arg11[%c4_54, %c12_55, %c0_56] : memref<16x16x32xf32, #tpu.memory_space<vmem>>, vector<8x4x32xf32>
    %81 = arith.addf %80, %79 : vector<8x4x32xf32>
    %c4_57 = arith.constant 4 : index
    %c12_58 = arith.constant 12 : index
    %c0_59 = arith.constant 0 : index
    %82 = vector.load %arg11[%c4_57, %c12_58, %c0_59] : memref<16x16x32xf32, #tpu.memory_space<vmem>>, vector<8x4x32xf32>
    tpu.vector_store %arg11[%c4_57, %c12_58, %c0_59], %81 {strides = array<i32>} : memref<16x16x32xf32, #tpu.memory_space<vmem>>, vector<8x4x32xf32>,
    %83 = vector.extract_strided_slice %66 {offsets = [12, 0, 0], sizes = [4, 4, 32], strides = [1, 1, 1]} : vector<16x4x32xf32> to vector<4x4x32xf32>
    %84 = vector.extract_strided_slice %69 {offsets = [0, 0, 0], sizes = [4, 4, 32], strides = [1, 1, 1]} : vector<16x4x32xf32> to vector<4x4x32xf32>
    %85 = arith.addf %83, %84 : vector<4x4x32xf32>
    %c12_60 = arith.constant 12 : index
    %c12_61 = arith.constant 12 : index
    %c0_62 = arith.constant 0 : index
    %86 = vector.load %arg11[%c12_60, %c12_61, %c0_62] : memref<16x16x32xf32, #tpu.memory_space<vmem>>, vector<4x4x32xf32>
    %87 = arith.addf %86, %85 : vector<4x4x32xf32>
    %c12_63 = arith.constant 12 : index
    %c12_64 = arith.constant 12 : index
    %c0_65 = arith.constant 0 : index
    %88 = vector.load %arg11[%c12_63, %c12_64, %c0_65] : memref<16x16x32xf32, #tpu.memory_space<vmem>>, vector<4x4x32xf32>
    tpu.vector_store %arg11[%c12_63, %c12_64, %c0_65], %87 {strides = array<i32>} : memref<16x16x32xf32, #tpu.memory_space<vmem>>, vector<4x4x32xf32>,
    %c0_66 = arith.constant 0 : index
    %c0_67 = arith.constant 0 : index
    %c192 = arith.constant 192 : index
    %89 = vector.load %arg5[%c0_66, %c0_67, %c192] : memref<1x8x288xbf16, #tpu.memory_space<vmem>>, vector<1x8x96xbf16>
    %90 = vector.shape_cast %89 : vector<1x8x96xbf16> to vector<8x96xbf16>
    %cst_68 = arith.constant dense<0.000000e+00> : vector<256x96xf32>
    %91 = tpu.matmul %2, %90, %cst_68 {dimension_numbers = #tpu.dot_dimension_numbers<[1], [0], [0], [1], [0, 0, 1, 1], [], []>} : vector<256x8xbf16>, vector<8x96xbf16>, vector<256x96xf32> -> vector<256x96xf32>
    %92 = vector.extract_strided_slice %91 {offsets = [0, 0], sizes = [256, 32], strides = [1, 1]} : vector<256x96xf32> to vector<256x32xf32>
    %93 = vector.shape_cast %92 : vector<256x32xf32> to vector<16x16x32xf32>
    %94 = vector.extract_strided_slice %93 {offsets = [0, 12, 0], sizes = [16, 4, 32], strides = [1, 1, 1]} : vector<16x16x32xf32> to vector<16x4x32xf32>
    %95 = vector.extract_strided_slice %91 {offsets = [0, 32], sizes = [256, 32], strides = [1, 1]} : vector<256x96xf32> to vector<256x32xf32>
    %96 = vector.shape_cast %95 : vector<256x32xf32> to vector<16x16x32xf32>
    %97 = vector.extract_strided_slice %96 {offsets = [0, 12, 0], sizes = [16, 4, 32], strides = [1, 1, 1]} : vector<16x16x32xf32> to vector<16x4x32xf32>
    %98 = vector.extract_strided_slice %91 {offsets = [0, 64], sizes = [256, 32], strides = [1, 1]} : vector<256x96xf32> to vector<256x32xf32>
    %99 = vector.shape_cast %98 : vector<256x32xf32> to vector<16x16x32xf32>
    %100 = vector.extract_strided_slice %99 {offsets = [0, 12, 0], sizes = [16, 4, 32], strides = [1, 1, 1]} : vector<16x16x32xf32> to vector<16x4x32xf32>
    %101 = vector.extract_strided_slice %94 {offsets = [0, 0, 0], sizes = [4, 4, 32], strides = [1, 1, 1]} : vector<16x4x32xf32> to vector<4x4x32xf32>
    %102 = vector.extract_strided_slice %100 {offsets = [12, 0, 0], sizes = [4, 4, 32], strides = [1, 1, 1]} : vector<16x4x32xf32> to vector<4x4x32xf32>
    %103 = arith.addf %101, %102 : vector<4x4x32xf32>
    %c0_69 = arith.constant 0 : index
    %c0_70 = arith.constant 0 : index
    %c0_71 = arith.constant 0 : index
    %104 = vector.load %arg11[%c0_69, %c0_70, %c0_71] : memref<16x16x32xf32, #tpu.memory_space<vmem>>, vector<4x4x32xf32>
    %105 = arith.addf %104, %103 : vector<4x4x32xf32>
    %c0_72 = arith.constant 0 : index
    %c0_73 = arith.constant 0 : index
    %c0_74 = arith.constant 0 : index
    %106 = vector.load %arg11[%c0_72, %c0_73, %c0_74] : memref<16x16x32xf32, #tpu.memory_space<vmem>>, vector<4x4x32xf32>
    tpu.vector_store %arg11[%c0_72, %c0_73, %c0_74], %105 {strides = array<i32>} : memref<16x16x32xf32, #tpu.memory_space<vmem>>, vector<4x4x32xf32>,
    %107 = vector.extract_strided_slice %94 {offsets = [4, 0, 0], sizes = [8, 4, 32], strides = [1, 1, 1]} : vector<16x4x32xf32> to vector<8x4x32xf32>
    %c4_75 = arith.constant 4 : index
    %c0_76 = arith.constant 0 : index
    %c0_77 = arith.constant 0 : index
    %108 = vector.load %arg11[%c4_75, %c0_76, %c0_77] : memref<16x16x32xf32, #tpu.memory_space<vmem>>, vector<8x4x32xf32>
    %109 = arith.addf %108, %107 : vector<8x4x32xf32>
    %c4_78 = arith.constant 4 : index
    %c0_79 = arith.constant 0 : index
    %c0_80 = arith.constant 0 : index
    %110 = vector.load %arg11[%c4_78, %c0_79, %c0_80] : memref<16x16x32xf32, #tpu.memory_space<vmem>>, vector<8x4x32xf32>
    tpu.vector_store %arg11[%c4_78, %c0_79, %c0_80], %109 {strides = array<i32>} : memref<16x16x32xf32, #tpu.memory_space<vmem>>, vector<8x4x32xf32>,
    %111 = vector.extract_strided_slice %94 {offsets = [12, 0, 0], sizes = [4, 4, 32], strides = [1, 1, 1]} : vector<16x4x32xf32> to vector<4x4x32xf32>
    %112 = vector.extract_strided_slice %97 {offsets = [0, 0, 0], sizes = [4, 4, 32], strides = [1, 1, 1]} : vector<16x4x32xf32> to vector<4x4x32xf32>
    %113 = arith.addf %111, %112 : vector<4x4x32xf32>
    %c12_81 = arith.constant 12 : index
    %c0_82 = arith.constant 0 : index
    %c0_83 = arith.constant 0 : index
    %114 = vector.load %arg11[%c12_81, %c0_82, %c0_83] : memref<16x16x32xf32, #tpu.memory_space<vmem>>, vector<4x4x32xf32>
    %115 = arith.addf %114, %113 : vector<4x4x32xf32>
    %c12_84 = arith.constant 12 : index
    %c0_85 = arith.constant 0 : index
    %c0_86 = arith.constant 0 : index
    %116 = vector.load %arg11[%c12_84, %c0_85, %c0_86] : memref<16x16x32xf32, #tpu.memory_space<vmem>>, vector<4x4x32xf32>
    tpu.vector_store %arg11[%c12_84, %c0_85, %c0_86], %115 {strides = array<i32>} : memref<16x16x32xf32, #tpu.memory_space<vmem>>, vector<4x4x32xf32>,
    %c0_87 = arith.constant 0 : index
    %c0_88 = arith.constant 0 : index
    %c0_89 = arith.constant 0 : index
    %117 = vector.load %arg11[%c0_87, %c0_88, %c0_89] : memref<16x16x32xf32, #tpu.memory_space<vmem>>, vector<16x16x32xf32>
    %c2 = arith.constant 2 : index
    %c0_90 = arith.constant 0 : index
    %c0_91 = arith.constant 0 : index
    %118 = vector.load %arg8[%c2, %c0_90, %c0_91] : memref<5x1x32xf32, #tpu.memory_space<vmem>>, vector<1x1x32xf32>
    %119 = vector.shape_cast %118 : vector<1x1x32xf32> to vector<1x32xf32>
    %120 = vector.shape_cast %119 : vector<1x32xf32> to vector<1x1x32xf32>
    %121 = vector.broadcast %120 : vector<1x1x32xf32> to vector<16x16x32xf32>
    %122 = arith.mulf %117, %121 : vector<16x16x32xf32>
    %c2_92 = arith.constant 2 : index
    %c0_93 = arith.constant 0 : index
    %c0_94 = arith.constant 0 : index
    %123 = vector.load %arg9[%c2_92, %c0_93, %c0_94] : memref<5x1x32xf32, #tpu.memory_space<vmem>>, vector<1x1x32xf32>
    %124 = vector.shape_cast %123 : vector<1x1x32xf32> to vector<1x32xf32>
    %125 = vector.shape_cast %124 : vector<1x32xf32> to vector<1x1x32xf32>
    %126 = vector.broadcast %125 : vector<1x1x32xf32> to vector<16x16x32xf32>
    %127 = arith.addf %122, %126 : vector<16x16x32xf32>
    %cst_95 = arith.constant 0.000000e+00 : f32
    %128 = vector.broadcast %cst_95 : f32 to vector<16x16x32xf32>
    %129 = arith.maximumf %127, %128 : vector<16x16x32xf32>
    %130 = arith.truncf %129 : vector<16x16x32xf32> to vector<16x16x32xbf16>
    %c0_96 = arith.constant 0 : index
    %c2_97 = arith.constant 2 : index
    %c0_98 = arith.constant 0 : index
    %c0_99 = arith.constant 0 : index
    %c0_100 = arith.constant 0 : index
    %131 = vector.load %arg10[%c0_96, %c2_97, %c0_98, %c0_99, %c0_100] : memref<1x5x16x16x32xbf16, #tpu.memory_space<vmem>>, vector<1x1x16x16x32xbf16>
    %132 = vector.shape_cast %131 : vector<1x1x16x16x32xbf16> to vector<16x16x32xbf16>
    %133 = vector.shape_cast %130 : vector<16x16x32xbf16> to vector<1x1x16x16x32xbf16>
    tpu.vector_store %arg10[%c0_96, %c2_97, %c0_98, %c0_99, %c0_100], %133 {strides = array<i32>} : memref<1x5x16x16x32xbf16, #tpu.memory_space<vmem>>, vector<1x1x16x16x32xbf16>,
    %c0_101 = arith.constant 0 : index
    %c0_102 = arith.constant 0 : index
    %c0_103 = arith.constant 0 : index
    %134 = vector.load %arg6[%c0_101, %c0_102, %c0_103] : memref<1x8x32xbf16, #tpu.memory_space<vmem>>, vector<1x8x32xbf16>
    %135 = vector.shape_cast %134 : vector<1x8x32xbf16> to vector<8x32xbf16>
    %cst_104 = arith.constant dense<0.000000e+00> : vector<256x32xf32>
    %136 = tpu.matmul %2, %135, %cst_104 {dimension_numbers = #tpu.dot_dimension_numbers<[1], [0], [0], [1], [0, 0, 1, 1], [], []>} : vector<256x8xbf16>, vector<8x32xbf16>, vector<256x32xf32> -> vector<256x32xf32>
    %137 = vector.shape_cast %136 : vector<256x32xf32> to vector<16x16x32xf32>
    %c0_105 = arith.constant 0 : index
    %c0_106 = arith.constant 0 : index
    %c0_107 = arith.constant 0 : index
    %138 = vector.load %arg11[%c0_105, %c0_106, %c0_107] : memref<16x16x32xf32, #tpu.memory_space<vmem>>, vector<16x16x32xf32>
    tpu.vector_store %arg11[%c0_105, %c0_106, %c0_107], %137 {strides = array<i32>} : memref<16x16x32xf32, #tpu.memory_space<vmem>>, vector<16x16x32xf32>,
    %c0_108 = arith.constant 0 : index
    %c0_109 = arith.constant 0 : index
    %c0_110 = arith.constant 0 : index
    %139 = vector.load %arg11[%c0_108, %c0_109, %c0_110] : memref<16x16x32xf32, #tpu.memory_space<vmem>>, vector<16x16x32xf32>
    %c3 = arith.constant 3 : index
    %c0_111 = arith.constant 0 : index
    %c0_112 = arith.constant 0 : index
    %140 = vector.load %arg8[%c3, %c0_111, %c0_112] : memref<5x1x32xf32, #tpu.memory_space<vmem>>, vector<1x1x32xf32>
    %141 = vector.shape_cast %140 : vector<1x1x32xf32> to vector<1x32xf32>
    %142 = vector.shape_cast %141 : vector<1x32xf32> to vector<1x1x32xf32>
    %143 = vector.broadcast %142 : vector<1x1x32xf32> to vector<16x16x32xf32>
    %144 = arith.mulf %139, %143 : vector<16x16x32xf32>
    %c3_113 = arith.constant 3 : index
    %c0_114 = arith.constant 0 : index
    %c0_115 = arith.constant 0 : index
    %145 = vector.load %arg9[%c3_113, %c0_114, %c0_115] : memref<5x1x32xf32, #tpu.memory_space<vmem>>, vector<1x1x32xf32>
    %146 = vector.shape_cast %145 : vector<1x1x32xf32> to vector<1x32xf32>
    %147 = vector.shape_cast %146 : vector<1x32xf32> to vector<1x1x32xf32>
    %148 = vector.broadcast %147 : vector<1x1x32xf32> to vector<16x16x32xf32>
    %149 = arith.addf %144, %148 : vector<16x16x32xf32>
    %cst_116 = arith.constant 0.000000e+00 : f32
    %150 = vector.broadcast %cst_116 : f32 to vector<16x16x32xf32>
    %151 = arith.maximumf %149, %150 : vector<16x16x32xf32>
    %152 = arith.truncf %151 : vector<16x16x32xf32> to vector<16x16x32xbf16>
    %c0_117 = arith.constant 0 : index
    %c3_118 = arith.constant 3 : index
    %c0_119 = arith.constant 0 : index
    %c0_120 = arith.constant 0 : index
    %c0_121 = arith.constant 0 : index
    %153 = vector.load %arg10[%c0_117, %c3_118, %c0_119, %c0_120, %c0_121] : memref<1x5x16x16x32xbf16, #tpu.memory_space<vmem>>, vector<1x1x16x16x32xbf16>
    %154 = vector.shape_cast %153 : vector<1x1x16x16x32xbf16> to vector<16x16x32xbf16>
    %155 = vector.shape_cast %152 : vector<16x16x32xbf16> to vector<1x1x16x16x32xbf16>
    tpu.vector_store %arg10[%c0_117, %c3_118, %c0_119, %c0_120, %c0_121], %155 {strides = array<i32>} : memref<1x5x16x16x32xbf16, #tpu.memory_space<vmem>>, vector<1x1x16x16x32xbf16>,
    %c0_122 = arith.constant 0 : index
    %c0_123 = arith.constant 0 : index
    %c0_124 = arith.constant 0 : index
    %156 = vector.load %arg7[%c0_122, %c0_123, %c0_124] : memref<1x8x32xbf16, #tpu.memory_space<vmem>>, vector<1x8x32xbf16>
    %157 = vector.shape_cast %156 : vector<1x8x32xbf16> to vector<8x32xbf16>
    %cst_125 = arith.constant dense<0.000000e+00> : vector<256x32xf32>
    %158 = tpu.matmul %2, %157, %cst_125 {dimension_numbers = #tpu.dot_dimension_numbers<[1], [0], [0], [1], [0, 0, 1, 1], [], []>} : vector<256x8xbf16>, vector<8x32xbf16>, vector<256x32xf32> -> vector<256x32xf32>
    %159 = vector.shape_cast %158 : vector<256x32xf32> to vector<16x16x32xf32>
    %c0_126 = arith.constant 0 : index
    %c0_127 = arith.constant 0 : index
    %c0_128 = arith.constant 0 : index
    %160 = vector.load %arg11[%c0_126, %c0_127, %c0_128] : memref<16x16x32xf32, #tpu.memory_space<vmem>>, vector<16x16x32xf32>
    tpu.vector_store %arg11[%c0_126, %c0_127, %c0_128], %159 {strides = array<i32>} : memref<16x16x32xf32, #tpu.memory_space<vmem>>, vector<16x16x32xf32>,
    %c0_129 = arith.constant 0 : index
    %c0_130 = arith.constant 0 : index
    %c0_131 = arith.constant 0 : index
    %161 = vector.load %arg11[%c0_129, %c0_130, %c0_131] : memref<16x16x32xf32, #tpu.memory_space<vmem>>, vector<16x16x32xf32>
    %c4_132 = arith.constant 4 : index
    %c0_133 = arith.constant 0 : index
    %c0_134 = arith.constant 0 : index
    %162 = vector.load %arg8[%c4_132, %c0_133, %c0_134] : memref<5x1x32xf32, #tpu.memory_space<vmem>>, vector<1x1x32xf32>
    %163 = vector.shape_cast %162 : vector<1x1x32xf32> to vector<1x32xf32>
    %164 = vector.shape_cast %163 : vector<1x32xf32> to vector<1x1x32xf32>
    %165 = vector.broadcast %164 : vector<1x1x32xf32> to vector<16x16x32xf32>
    %166 = arith.mulf %161, %165 : vector<16x16x32xf32>
    %c4_135 = arith.constant 4 : index
    %c0_136 = arith.constant 0 : index
    %c0_137 = arith.constant 0 : index
    %167 = vector.load %arg9[%c4_135, %c0_136, %c0_137] : memref<5x1x32xf32, #tpu.memory_space<vmem>>, vector<1x1x32xf32>
    %168 = vector.shape_cast %167 : vector<1x1x32xf32> to vector<1x32xf32>
    %169 = vector.shape_cast %168 : vector<1x32xf32> to vector<1x1x32xf32>
    %170 = vector.broadcast %169 : vector<1x1x32xf32> to vector<16x16x32xf32>
    %171 = arith.addf %166, %170 : vector<16x16x32xf32>
    %cst_138 = arith.constant 0.000000e+00 : f32
    %172 = vector.broadcast %cst_138 : f32 to vector<16x16x32xf32>
    %173 = arith.maximumf %171, %172 : vector<16x16x32xf32>
    %174 = arith.truncf %173 : vector<16x16x32xf32> to vector<16x16x32xbf16>
    %c0_139 = arith.constant 0 : index
    %c4_140 = arith.constant 4 : index
    %c0_141 = arith.constant 0 : index
    %c0_142 = arith.constant 0 : index
    %c0_143 = arith.constant 0 : index
    %175 = vector.load %arg10[%c0_139, %c4_140, %c0_141, %c0_142, %c0_143] : memref<1x5x16x16x32xbf16, #tpu.memory_space<vmem>>, vector<1x1x16x16x32xbf16>
    %176 = vector.shape_cast %175 : vector<1x1x16x16x32xbf16> to vector<16x16x32xbf16>
    %177 = vector.shape_cast %174 : vector<16x16x32xbf16> to vector<1x1x16x16x32xbf16>
    tpu.vector_store %arg10[%c0_139, %c4_140, %c0_141, %c0_142, %c0_143], %177 {strides = array<i32>} : memref<1x5x16x16x32xbf16, #tpu.memory_space<vmem>>, vector<1x1x16x16x32xbf16>,
    return
  }
  func.func @transform_0(%arg0: i32, %arg1: i32) -> (i32, i32, i32, i32) {
    %c0_i32 = arith.constant 0 : i32
    %c0_i32_0 = arith.constant 0 : i32
    %c0_i32_1 = arith.constant 0 : i32
    %c0_i32_2 = arith.constant 0 : i32
    return %arg1, %c0_i32, %c0_i32_0, %c0_i32_1 : i32, i32, i32, i32
  }
  func.func @transform_1(%arg0: i32, %arg1: i32) -> (i32, i32) {
    %c0_i32 = arith.constant 0 : i32
    %c0_i32_0 = arith.constant 0 : i32
    return %c0_i32, %arg0 : i32, i32
  }
  func.func @transform_2(%arg0: i32, %arg1: i32) -> (i32, i32) {
    %c0_i32 = arith.constant 0 : i32
    %c0_i32_0 = arith.constant 0 : i32
    return %c0_i32, %arg0 : i32, i32
  }
  func.func @transform_3(%arg0: i32, %arg1: i32) -> (i32, i32, i32) {
    %c0_i32 = arith.constant 0 : i32
    %c0_i32_0 = arith.constant 0 : i32
    %c0_i32_1 = arith.constant 0 : i32
    return %arg0, %c0_i32, %c0_i32_0 : i32, i32, i32
  }
  func.func @transform_4(%arg0: i32, %arg1: i32) -> (i32, i32, i32) {
    %c0_i32 = arith.constant 0 : i32
    %c0_i32_0 = arith.constant 0 : i32
    %c0_i32_1 = arith.constant 0 : i32
    return %arg0, %c0_i32, %c0_i32_0 : i32, i32, i32
  }
  func.func @transform_5(%arg0: i32, %arg1: i32) -> (i32, i32, i32) {
    %c0_i32 = arith.constant 0 : i32
    %c0_i32_0 = arith.constant 0 : i32
    %c0_i32_1 = arith.constant 0 : i32
    return %arg0, %c0_i32, %c0_i32_0 : i32, i32, i32
  }
  func.func @transform_6(%arg0: i32, %arg1: i32) -> (i32, i32, i32) {
    %c0_i32 = arith.constant 0 : i32
    %c0_i32_0 = arith.constant 0 : i32
    %c0_i32_1 = arith.constant 0 : i32
    return %c0_i32, %c0_i32_0, %arg0 : i32, i32, i32
  }
  func.func @transform_7(%arg0: i32, %arg1: i32) -> (i32, i32, i32) {
    %c0_i32 = arith.constant 0 : i32
    %c0_i32_0 = arith.constant 0 : i32
    %c0_i32_1 = arith.constant 0 : i32
    return %c0_i32, %c0_i32_0, %arg0 : i32, i32, i32
  }
  func.func @transform_8(%arg0: i32, %arg1: i32) -> (i32, i32, i32, i32, i32) {
    %c0_i32 = arith.constant 0 : i32
    %c0_i32_0 = arith.constant 0 : i32
    %c0_i32_1 = arith.constant 0 : i32
    %c0_i32_2 = arith.constant 0 : i32
    return %arg1, %c0_i32, %c0_i32_0, %c0_i32_1, %arg0 : i32, i32, i32, i32, i32
  }
}

</mosaic_0001>

<llo_original>
// kernel: tpu_custom_call.1
$region0: #{tpu_custom_call.1}
  #allocation0 [shape = 'u32[]', space=smem, size = 0x4, offset = 0x4, fixed_abs, tag = 'smem constant byte address 0x4 - core index']
  #allocation1 [shape = 'u32[144,128]{1,0:T(1,128)}', space=vmem, size = 0x12000, scoped, tag = 'internal scratch']
  #allocation2 [shape = 'f32[16,16,32]{2,1,0:T(8,128)}', space=vmem, size = 0x20000, scoped, tag = 'scratch operand']
  %s0 = inlined_call_operand.vmem [shape: bf16[2,16,16,8], index: 0, kind: input, shape index: {}]
  %s1 = inlined_call_operand.vmem [shape: bf16[8,32], index: 1, kind: input, shape index: {}]
  %s2 = inlined_call_operand.vmem [shape: bf16[8,32], index: 2, kind: input, shape index: {}]
  %s3 = inlined_call_operand.vmem [shape: bf16[1,8,288], index: 3, kind: input, shape index: {}]
  %s4 = inlined_call_operand.vmem [shape: bf16[1,8,32], index: 4, kind: input, shape index: {}]
  %s5 = inlined_call_operand.vmem [shape: bf16[1,8,32], index: 5, kind: input, shape index: {}]
  %s6 = inlined_call_operand.vmem [shape: f32[5,1,32], index: 6, kind: input, shape index: {}]
  %s7 = inlined_call_operand.vmem [shape: f32[5,1,32], index: 7, kind: input, shape index: {}]
  %s8 = inlined_call_operand.hbm [shape: bf16[2,5,16,16,32], index: 8, kind: output, shape index: {}]
  %s9 = sld [smem:[#allocation0]]
  $region65: #{tpu_custom_call.1} parent=0
    _
  %s11 = ssub.s32 1, %s9
  %s12 = scalar_select 0, %s11, %s9
  $region1: #{tpu_custom_call.1} parent=0
    #allocation3 [shape = 'u8[655360]{0}', space=vmem, size = 0xa0000, scoped, tag = 'output window, operand 0']
    #allocation4 [shape = 's32[2]{0}', space=sflag, size = 0x8, scoped, tag = 'scoped memory for tpu_custom_call.1']
    %13 = vsyncpa [#allocation4], 0
    %s14 = scalar_lea.sflag [#allocation4], 1
    %15 = vsyncpa %s14, 0
    loop: start=0, step=1, limit=4
    $region2: #{tpu_custom_call.1} parent=1 // loop_pre_header
      _
    $region3: #{tpu_custom_call.1} parent=1 // loop_header
      %s17 = sphi 0, %s21
      %p18 = scmp.ge.s32.totalorder %s17, 4
      %s24 = sphi 0, %s36
      %s25 = sphi 0, %s32
      %s26 = sphi 0, %s24
      %s27 = sphi 0, %s25
      %s28 = sphi 0, %s26
      %s29 = sphi 0, %s27
      %s39 = sphi 0, %s41
      %s42 = sphi 0, %s39
      %s43 = sphi 0, %s42
      %s59 = sphi 0, %s43
      %s65 = sphi 0, %s67
      %s68 = sphi 0, %s65
      %s69 = sphi 0, %s68
      %s85 = sphi 0, %s69
      %s91 = sphi 0, %s93
      %s94 = sphi 0, %s91
      %s95 = sphi 0, %s94
      %s111 = sphi 0, %s95
      %s117 = sphi 0, %s119
      %s120 = sphi 0, %s117
      %s121 = sphi 0, %s120
      %s137 = sphi 0, %s121
      %s143 = sphi 0, %s145
      %s146 = sphi 0, %s143
      %s147 = sphi 0, %s146
      %s163 = sphi 0, %s147
      %s169 = sphi 0, %s171
      %s172 = sphi 0, %s169
      %s173 = sphi 0, %s172
      %s189 = sphi 0, %s173
      %s195 = sphi 0, %s197
      %s198 = sphi 0, %s195
      %s199 = sphi 0, %s198
      %s215 = sphi 0, %s199
      %s221 = sphi 0, %s223
      %s224 = sphi 0, %s221
      %s225 = sphi 0, %s224
      %s241 = sphi 0, %s225
      %s249 = sphi 0, %s251
      %s252 = sphi 0, %s249
      %s253 = sphi 0, %s252
      %s269 = sphi 0, %s253
    $region4: #{tpu_custom_call.1} parent=1 // loop_header_branch
      %20 = sbr.rel (%p18) target = $region8
    $region5: #{tpu_custom_call.1} parent=1 // loop_body
      %s22 = ssub.s32 %s17, 1
      %s23 = ssub.s32 %s17, 2
      %s30 = sadd.s32 1, %s25
      %p31 = scmp.ge.s32.totalorder %s30, 2
      %s32 = scalar_select %p31, 0, %s30
      %s33 = sadd.s32 1, %s24
      %s34 = scalar_select %p31, %s33, %s24
      %p35 = scmp.ge.s32.totalorder %s34, 1
      %s36 = scalar_select %p35, 0, %s34
      %s37 = ssub.s32 %s25, %s32
      %p38 = scmp.eq.s32.totalorder %s37, 0
      %s40 = sadd.s32 %s39, 1
      %s41 = scalar_select %p38, %s39, %s40
      %p44 = pneg %p38
      %p45 = scmp.eq.s32.totalorder %s17, 1
      %p46 = por %p44, %p45
      %p47 = scmp.ne.s32.totalorder %s39, %s42
      %p48 = scmp.eq.s32.totalorder %s17, 0
      %p49 = por %p47, %p48
      %p50 = scmp.ne.s32.totalorder %s39, %s42
      %p51 = scmp.eq.s32.totalorder %s22, 1
      %p52 = por %p50, %p51
      %p53 = scmp.ne.s32.totalorder %s42, %s43
      %p54 = scmp.eq.s32.totalorder %s22, 0
      %p55 = por %p53, %p54
      %p56 = scmp.ne.s32.totalorder %s42, %s43
      %p57 = scmp.eq.s32.totalorder %s23, 1
      %p58 = por %p56, %p57
      %p60 = scmp.ne.s32.totalorder %s43, %s59
      %p61 = scmp.eq.s32.totalorder %s23, 0
      %p62 = por %p60, %p61
      %s63 = ssub.s32 %s24, %s36
      %p64 = scmp.eq.s32.totalorder %s63, 0
      %s66 = sadd.s32 %s65, 1
      %s67 = scalar_select %p64, %s65, %s66
      %p70 = pneg %p64
      %p71 = scmp.eq.s32.totalorder %s17, 1
      %p72 = por %p70, %p71
      %p73 = scmp.ne.s32.totalorder %s65, %s68
      %p74 = scmp.eq.s32.totalorder %s17, 0
      %p75 = por %p73, %p74
      %p76 = scmp.ne.s32.totalorder %s65, %s68
      %p77 = scmp.eq.s32.totalorder %s22, 1
      %p78 = por %p76, %p77
      %p79 = scmp.ne.s32.totalorder %s68, %s69
      %p80 = scmp.eq.s32.totalorder %s22, 0
      %p81 = por %p79, %p80
      %p82 = scmp.ne.s32.totalorder %s68, %s69
      %p83 = scmp.eq.s32.totalorder %s23, 1
      %p84 = por %p82, %p83
      %p86 = scmp.ne.s32.totalorder %s69, %s85
      %p87 = scmp.eq.s32.totalorder %s23, 0
      %p88 = por %p86, %p87
      %s89 = ssub.s32 %s24, %s36
      %p90 = scmp.eq.s32.totalorder %s89, 0
      %s92 = sadd.s32 %s91, 1
      %s93 = scalar_select %p90, %s91, %s92
      %p96 = pneg %p90
      %p97 = scmp.eq.s32.totalorder %s17, 1
      %p98 = por %p96, %p97
      %p99 = scmp.ne.s32.totalorder %s91, %s94
      %p100 = scmp.eq.s32.totalorder %s17, 0
      %p101 = por %p99, %p100
      %p102 = scmp.ne.s32.totalorder %s91, %s94
      %p103 = scmp.eq.s32.totalorder %s22, 1
      %p104 = por %p102, %p103
      %p105 = scmp.ne.s32.totalorder %s94, %s95
      %p106 = scmp.eq.s32.totalorder %s22, 0
      %p107 = por %p105, %p106
      %p108 = scmp.ne.s32.totalorder %s94, %s95
      %p109 = scmp.eq.s32.totalorder %s23, 1
      %p110 = por %p108, %p109
      %p112 = scmp.ne.s32.totalorder %s95, %s111
      %p113 = scmp.eq.s32.totalorder %s23, 0
      %p114 = por %p112, %p113
      %s115 = ssub.s32 %s24, %s36
      %p116 = scmp.eq.s32.totalorder %s115, 0
      %s118 = sadd.s32 %s117, 1
      %s119 = scalar_select %p116, %s117, %s118
      %p122 = pneg %p116
      %p123 = scmp.eq.s32.totalorder %s17, 1
      %p124 = por %p122, %p123
      %p125 = scmp.ne.s32.totalorder %s117, %s120
      %p126 = scmp.eq.s32.totalorder %s17, 0
      %p127 = por %p125, %p126
      %p128 = scmp.ne.s32.totalorder %s117, %s120
      %p129 = scmp.eq.s32.totalorder %s22, 1
      %p130 = por %p128, %p129
      %p131 = scmp.ne.s32.totalorder %s120, %s121
      %p132 = scmp.eq.s32.totalorder %s22, 0
      %p133 = por %p131, %p132
      %p134 = scmp.ne.s32.totalorder %s120, %s121
      %p135 = scmp.eq.s32.totalorder %s23, 1
      %p136 = por %p134, %p135
      %p138 = scmp.ne.s32.totalorder %s121, %s137
      %p139 = scmp.eq.s32.totalorder %s23, 0
      %p140 = por %p138, %p139
      %s141 = ssub.s32 %s24, %s36
      %p142 = scmp.eq.s32.totalorder %s141, 0
      %s144 = sadd.s32 %s143, 1
      %s145 = scalar_select %p142, %s143, %s144
      %p148 = pneg %p142
      %p149 = scmp.eq.s32.totalorder %s17, 1
      %p150 = por %p148, %p149
      %p151 = scmp.ne.s32.totalorder %s143, %s146
      %p152 = scmp.eq.s32.totalorder %s17, 0
      %p153 = por %p151, %p152
      %p154 = scmp.ne.s32.totalorder %s143, %s146
      %p155 = scmp.eq.s32.totalorder %s22, 1
      %p156 = por %p154, %p155
      %p157 = scmp.ne.s32.totalorder %s146, %s147
      %p158 = scmp.eq.s32.totalorder %s22, 0
      %p159 = por %p157, %p158
      %p160 = scmp.ne.s32.totalorder %s146, %s147
      %p161 = scmp.eq.s32.totalorder %s23, 1
      %p162 = por %p160, %p161
      %p164 = scmp.ne.s32.totalorder %s147, %s163
      %p165 = scmp.eq.s32.totalorder %s23, 0
      %p166 = por %p164, %p165
      %s167 = ssub.s32 %s24, %s36
      %p168 = scmp.eq.s32.totalorder %s167, 0
      %s170 = sadd.s32 %s169, 1
      %s171 = scalar_select %p168, %s169, %s170
      %p174 = pneg %p168
      %p175 = scmp.eq.s32.totalorder %s17, 1
      %p176 = por %p174, %p175
      %p177 = scmp.ne.s32.totalorder %s169, %s172
      %p178 = scmp.eq.s32.totalorder %s17, 0
      %p179 = por %p177, %p178
      %p180 = scmp.ne.s32.totalorder %s169, %s172
      %p181 = scmp.eq.s32.totalorder %s22, 1
      %p182 = por %p180, %p181
      %p183 = scmp.ne.s32.totalorder %s172, %s173
      %p184 = scmp.eq.s32.totalorder %s22, 0
      %p185 = por %p183, %p184
      %p186 = scmp.ne.s32.totalorder %s172, %s173
      %p187 = scmp.eq.s32.totalorder %s23, 1
      %p188 = por %p186, %p187
      %p190 = scmp.ne.s32.totalorder %s173, %s189
      %p191 = scmp.eq.s32.totalorder %s23, 0
      %p192 = por %p190, %p191
      %s193 = ssub.s32 %s24, %s36
      %p194 = scmp.eq.s32.totalorder %s193, 0
      %s196 = sadd.s32 %s195, 1
      %s197 = scalar_select %p194, %s195, %s196
      %p200 = pneg %p194
      %p201 = scmp.eq.s32.totalorder %s17, 1
      %p202 = por %p200, %p201
      %p203 = scmp.ne.s32.totalorder %s195, %s198
      %p204 = scmp.eq.s32.totalorder %s17, 0
      %p205 = por %p203, %p204
      %p206 = scmp.ne.s32.totalorder %s195, %s198
      %p207 = scmp.eq.s32.totalorder %s22, 1
      %p208 = por %p206, %p207
      %p209 = scmp.ne.s32.totalorder %s198, %s199
      %p210 = scmp.eq.s32.totalorder %s22, 0
      %p211 = por %p209, %p210
      %p212 = scmp.ne.s32.totalorder %s198, %s199
      %p213 = scmp.eq.s32.totalorder %s23, 1
      %p214 = por %p212, %p213
      %p216 = scmp.ne.s32.totalorder %s199, %s215
      %p217 = scmp.eq.s32.totalorder %s23, 0
      %p218 = por %p216, %p217
      %s219 = ssub.s32 %s24, %s36
      %p220 = scmp.eq.s32.totalorder %s219, 0
      %s222 = sadd.s32 %s221, 1
      %s223 = scalar_select %p220, %s221, %s222
      %p226 = pneg %p220
      %p227 = scmp.eq.s32.totalorder %s17, 1
      %p228 = por %p226, %p227
      %p229 = scmp.ne.s32.totalorder %s221, %s224
      %p230 = scmp.eq.s32.totalorder %s17, 0
      %p231 = por %p229, %p230
      %p232 = scmp.ne.s32.totalorder %s221, %s224
      %p233 = scmp.eq.s32.totalorder %s22, 1
      %p234 = por %p232, %p233
      %p235 = scmp.ne.s32.totalorder %s224, %s225
      %p236 = scmp.eq.s32.totalorder %s22, 0
      %p237 = por %p235, %p236
      %p238 = scmp.ne.s32.totalorder %s224, %s225
      %p239 = scmp.eq.s32.totalorder %s23, 1
      %p240 = por %p238, %p239
      %p242 = scmp.ne.s32.totalorder %s225, %s241
      %p243 = scmp.eq.s32.totalorder %s23, 0
      %p244 = por %p242, %p243
      %s245 = ssub.s32 %s25, %s32
      %s246 = ssub.s32 %s24, %s36
      %s247 = sor.u32 %s245, %s246
      %p248 = scmp.eq.s32.totalorder %s247, 0
      %s250 = sadd.s32 %s249, 1
      %s251 = scalar_select %p248, %s249, %s250
      %p254 = pneg %p248
      %p255 = scmp.eq.s32.totalorder %s17, 1
      %p256 = por %p254, %p255
      %p257 = scmp.ne.s32.totalorder %s249, %s252
      %p258 = scmp.eq.s32.totalorder %s17, 0
      %p259 = por %p257, %p258
      %p260 = scmp.ne.s32.totalorder %s249, %s252
      %p261 = scmp.eq.s32.totalorder %s22, 1
      %p262 = por %p260, %p261
      %p263 = scmp.ne.s32.totalorder %s252, %s253
      %p264 = scmp.eq.s32.totalorder %s22, 0
      %p265 = por %p263, %p264
      %p266 = scmp.ne.s32.totalorder %s252, %s253
      %p267 = scmp.eq.s32.totalorder %s23, 1
      %p268 = por %p266, %p267
      %p270 = scmp.ne.s32.totalorder %s253, %s269
      %p271 = scmp.eq.s32.totalorder %s23, 0
      %p272 = por %p270, %p271
      %p273 = scmp.le.s32.totalorder 1, %s17
      %p274 = scmp.lt.s32.totalorder %s17, 3
      %p275 = pnand %p273, %p274
      %p276 = pneg %p275
      // Predicated region
      $region9: #{tpu_custom_call.1} parent=5 // pred_check
        _
      $region10: #{tpu_custom_call.1} parent=5 // pred_check_branch
        %278 = sbr.rel (%p275) target = $region12
      $region11: #{tpu_custom_call.1} parent=5 // pred_region
        %s279 = ssub.s32 %s17, 1
        // Predicated region
        $region13: #{tpu_custom_call.1} parent=11 // pred_check
          %p280 = pneg %p81
        $region14: #{tpu_custom_call.1} parent=11 // pred_check_branch
          %282 = sbr.rel (%p280) target = $region16
        $region15: #{tpu_custom_call.1} parent=11 // pred_region
          %p283 = scmp.lt.s32.totalorder %s26, 0
          %s284 = scalar_select %p283, %s26, 0
          %s285 = smul.addr %s284, 4
          %s286 = scalar_lea.vmem %s1, %s285
        $region16: #{tpu_custom_call.1} parent=11 // pred_fallthru
          _
        // Predicated region
        $region17: #{tpu_custom_call.1} parent=11 // pred_check
          %p287 = pneg %p107
        $region18: #{tpu_custom_call.1} parent=11 // pred_check_branch
          %289 = sbr.rel (%p287) target = $region20
        $region19: #{tpu_custom_call.1} parent=11 // pred_region
          %p290 = scmp.lt.s32.totalorder %s26, 0
          %s291 = scalar_select %p290, %s26, 0
          %s292 = smul.addr %s291, 4
          %s293 = scalar_lea.vmem %s2, %s292
        $region20: #{tpu_custom_call.1} parent=11 // pred_fallthru
          _
        // Predicated region
        $region21: #{tpu_custom_call.1} parent=11 // pred_check
          %p294 = pneg %p133
        $region22: #{tpu_custom_call.1} parent=11 // pred_check_branch
          %296 = sbr.rel (%p294) target = $region24
        $region23: #{tpu_custom_call.1} parent=11 // pred_region
          %p297 = scmp.lt.s32.totalorder %s26, 0
          %s298 = scalar_select %p297, %s26, 0
          %s299 = smul.addr %s298, 3
          %s300 = smul.addr %s299, 4
          %s301 = scalar_lea.vmem %s3, %s300
        $region24: #{tpu_custom_call.1} parent=11 // pred_fallthru
          _
        // Predicated region
        $region25: #{tpu_custom_call.1} parent=11 // pred_check
          %p302 = pneg %p159
        $region26: #{tpu_custom_call.1} parent=11 // pred_check_branch
          %304 = sbr.rel (%p302) target = $region28
        $region27: #{tpu_custom_call.1} parent=11 // pred_region
          %p305 = scmp.lt.s32.totalorder %s26, 0
          %s306 = scalar_select %p305, %s26, 0
          %s307 = smul.addr %s306, 4
          %s308 = scalar_lea.vmem %s4, %s307
        $region28: #{tpu_custom_call.1} parent=11 // pred_fallthru
          _
        // Predicated region
        $region29: #{tpu_custom_call.1} parent=11 // pred_check
          %p309 = pneg %p185
        $region30: #{tpu_custom_call.1} parent=11 // pred_check_branch
          %311 = sbr.rel (%p309) target = $region32
        $region31: #{tpu_custom_call.1} parent=11 // pred_region
          %p312 = scmp.lt.s32.totalorder %s26, 0
          %s313 = scalar_select %p312, %s26, 0
          %s314 = smul.addr %s313, 4
          %s315 = scalar_lea.vmem %s5, %s314
        $region32: #{tpu_custom_call.1} parent=11 // pred_fallthru
          _
        // Predicated region
        $region33: #{tpu_custom_call.1} parent=11 // pred_check
          %p316 = pneg %p211
        $region34: #{tpu_custom_call.1} parent=11 // pred_check_branch
          %318 = sbr.rel (%p316) target = $region36
        $region35: #{tpu_custom_call.1} parent=11 // pred_region
          %p319 = scmp.lt.s32.totalorder %s26, 0
          %s320 = scalar_select %p319, %s26, 0
          %s321 = scalar_lea.vmem %s6, %s320
        $region36: #{tpu_custom_call.1} parent=11 // pred_fallthru
          _
        // Predicated region
        $region37: #{tpu_custom_call.1} parent=11 // pred_check
          %p322 = pneg %p237
        $region38: #{tpu_custom_call.1} parent=11 // pred_check_branch
          %324 = sbr.rel (%p322) target = $region40
        $region39: #{tpu_custom_call.1} parent=11 // pred_region
          %p325 = scmp.lt.s32.totalorder %s26, 0
          %s326 = scalar_select %p325, %s26, 0
          %s327 = scalar_lea.vmem %s7, %s326
        $region40: #{tpu_custom_call.1} parent=11 // pred_fallthru
          _
      $region12: #{tpu_custom_call.1} parent=5 // pred_fallthru
        _
      %p328 = scmp.lt.s32.totalorder %s17, 2
      // Predicated region
      $region41: #{tpu_custom_call.1} parent=5 // pred_check
        %p329 = pneg %p328
      $region42: #{tpu_custom_call.1} parent=5 // pred_check_branch
        %331 = sbr.rel (%p329) target = $region44
      $region43: #{tpu_custom_call.1} parent=5 // pred_region
        // Predicated region
        $region45: #{tpu_custom_call.1} parent=43 // pred_check
          %p332 = pneg %p49
        $region46: #{tpu_custom_call.1} parent=43 // pred_check_branch
          %334 = sbr.rel (%p332) target = $region48
        $region47: #{tpu_custom_call.1} parent=43 // pred_region
          %p335 = scmp.lt.s32.totalorder %s25, 1
          %s336 = scalar_select %p335, %s25, 1
          %s337 = smul.addr %s336, 32
          %s338 = smul.addr %s337, 4
          %s339 = scalar_lea.vmem %s0, %s338
        $region48: #{tpu_custom_call.1} parent=43 // pred_fallthru
          _
      $region44: #{tpu_custom_call.1} parent=5 // pred_fallthru
        _
      %p340 = scmp.le.s32.totalorder 1, %s17
      %p341 = scmp.lt.s32.totalorder %s17, 3
      %p342 = pnand %p340, %p341
      %p343 = pneg %p342
      // Predicated region
      $region49: #{tpu_custom_call.1} parent=5 // pred_check
        _
      $region50: #{tpu_custom_call.1} parent=5 // pred_check_branch
        %345 = sbr.rel (%p342) target = $region52
      $region51: #{tpu_custom_call.1} parent=5 // pred_region
        %s346 = ssub.s32 %s17, 1
        %p347 = scmp.lt.s32.totalorder %s27, 1
        %s348 = scalar_select %p347, %s27, 1
        %s349 = smul.addr %s348, 32
        %s350 = smul.addr %s349, 4
        %s351 = scalar_lea.vmem %s0, %s350
        %p352 = pneg %p55
        %p353 = pneg %p52
        %p354 = scmp.lt.s32.totalorder %s26, 0
        %s355 = scalar_select %p354, %s26, 0
        %s356 = smul.addr %s355, 4
        %s357 = scalar_lea.vmem %s1, %s356
        %p358 = pneg %p81
        %p359 = pneg %p78
        %p360 = scmp.lt.s32.totalorder %s26, 0
        %s361 = scalar_select %p360, %s26, 0
        %s362 = smul.addr %s361, 4
        %s363 = scalar_lea.vmem %s2, %s362
        %p364 = pneg %p107
        %p365 = pneg %p104
        %p366 = scmp.lt.s32.totalorder %s26, 0
        %s367 = scalar_select %p366, %s26, 0
        %s368 = smul.addr %s367, 3
        %s369 = smul.addr %s368, 4
        %s370 = scalar_lea.vmem %s3, %s369
        %p371 = pneg %p133
        %p372 = pneg %p130
        %p373 = scmp.lt.s32.totalorder %s26, 0
        %s374 = scalar_select %p373, %s26, 0
        %s375 = smul.addr %s374, 4
        %s376 = scalar_lea.vmem %s4, %s375
        %p377 = pneg %p159
        %p378 = pneg %p156
        %p379 = scmp.lt.s32.totalorder %s26, 0
        %s380 = scalar_select %p379, %s26, 0
        %s381 = smul.addr %s380, 4
        %s382 = scalar_lea.vmem %s5, %s381
        %p383 = pneg %p185
        %p384 = pneg %p182
        %p385 = scmp.lt.s32.totalorder %s26, 0
        %s386 = scalar_select %p385, %s26, 0
        %s387 = scalar_lea.vmem %s6, %s386
        %p388 = pneg %p211
        %p389 = pneg %p208
        %p390 = scmp.lt.s32.totalorder %s26, 0
        %s391 = scalar_select %p390, %s26, 0
        %s392 = scalar_lea.vmem %s7, %s391
        %p393 = pneg %p237
        %p394 = pneg %p234
        %p395 = pneg %p265
        %p396 = pneg %p262
        %s397 = sand.u32 %s252, 1
        %s398 = scalar_lea.sflag [#allocation4], %s397
        %s399 = sand.u32 %s252, 1
        %s400 = smul.addr %s399, 640
        %s401 = scalar_lea.vmem [#allocation3], %s400
        %p402 = scmp.lt.s32.totalorder %s27, 1
        %s403 = scalar_select %p402, %s27, 1
        %s404 = smul.addr %s403, 32
        %s405 = smul.addr %s404, 4
        %s406 = scalar_lea.vmem %s0, %s405
        %p407 = scmp.lt.s32.totalorder %s26, 0
        %s408 = scalar_select %p407, %s26, 0
        %s409 = smul.addr %s408, 4
        %s410 = scalar_lea.vmem %s1, %s409
        %p411 = scmp.lt.s32.totalorder %s26, 0
        %s412 = scalar_select %p411, %s26, 0
        %s413 = smul.addr %s412, 4
        %s414 = scalar_lea.vmem %s2, %s413
        %p415 = scmp.lt.s32.totalorder %s26, 0
        %s416 = scalar_select %p415, %s26, 0
        %s417 = smul.addr %s416, 3
        %s418 = smul.addr %s417, 4
        %s419 = scalar_lea.vmem %s3, %s418
        %p420 = scmp.lt.s32.totalorder %s26, 0
        %s421 = scalar_select %p420, %s26, 0
        %s422 = smul.addr %s421, 4
        %s423 = scalar_lea.vmem %s4, %s422
        %p424 = scmp.lt.s32.totalorder %s26, 0
        %s425 = scalar_select %p424, %s26, 0
        %s426 = smul.addr %s425, 4
        %s427 = scalar_lea.vmem %s5, %s426
        %p428 = scmp.lt.s32.totalorder %s26, 0
        %s429 = scalar_select %p428, %s26, 0
        %s430 = scalar_lea.vmem %s6, %s429
        %p431 = scmp.lt.s32.totalorder %s26, 0
        %s432 = scalar_select %p431, %s26, 0
        %s433 = scalar_lea.vmem %s7, %s432
        %v436 = vld [vmem:[%s406] sm:$0xf]
        %v437 = vld [vmem:[%s406 + $0x4] sm:$0xf]
        %v438 = vld [vmem:[%s406 + $0x8] sm:$0xf]
        %v439 = vld [vmem:[%s406 + $0xc] sm:$0xf]
        %v440 = vld [vmem:[%s406 + $0x10] sm:$0xf]
        %v441 = vld [vmem:[%s406 + $0x14] sm:$0xf]
        %v442 = vld [vmem:[%s406 + $0x18] sm:$0xf]
        %v443 = vld [vmem:[%s406 + $0x1c] sm:$0xf]
        %v444 = vld [vmem:[%s406 + $0x20] sm:$0xf]
        %v445 = vld [vmem:[%s406 + $0x24] sm:$0xf]
        %v446 = vld [vmem:[%s406 + $0x28] sm:$0xf]
        %v447 = vld [vmem:[%s406 + $0x2c] sm:$0xf]
        %v448 = vld [vmem:[%s406 + $0x30] sm:$0xf]
        %v449 = vld [vmem:[%s406 + $0x34] sm:$0xf]
        %v450 = vld [vmem:[%s406 + $0x38] sm:$0xf]
        %v451 = vld [vmem:[%s406 + $0x3c] sm:$0xf]
        %v452 = vld [vmem:[%s406 + $0x40] sm:$0xf]
        %v453 = vld [vmem:[%s406 + $0x44] sm:$0xf]
        %v454 = vld [vmem:[%s406 + $0x48] sm:$0xf]
        %v455 = vld [vmem:[%s406 + $0x4c] sm:$0xf]
        %v456 = vld [vmem:[%s406 + $0x50] sm:$0xf]
        %v457 = vld [vmem:[%s406 + $0x54] sm:$0xf]
        %v458 = vld [vmem:[%s406 + $0x58] sm:$0xf]
        %v459 = vld [vmem:[%s406 + $0x5c] sm:$0xf]
        %v460 = vld [vmem:[%s406 + $0x60] sm:$0xf]
        %v461 = vld [vmem:[%s406 + $0x64] sm:$0xf]
        %v462 = vld [vmem:[%s406 + $0x68] sm:$0xf]
        %v463 = vld [vmem:[%s406 + $0x6c] sm:$0xf]
        %v464 = vld [vmem:[%s406 + $0x70] sm:$0xf]
        %v465 = vld [vmem:[%s406 + $0x74] sm:$0xf]
        %v466 = vld [vmem:[%s406 + $0x78] sm:$0xf]
        %v467 = vld [vmem:[%s406 + $0x7c] sm:$0xf]
        %v500 = vunpack.c.l.b16 %v436
        %v501 = vunpack.c.l.b16 %v437
        %v502 = vunpack.c.l.b16 %v438
        %v503 = vunpack.c.l.b16 %v439
        %v504 = vunpack.c.l.b16 %v440
        %v505 = vunpack.c.l.b16 %v441
        %v506 = vunpack.c.l.b16 %v442
        %v507 = vunpack.c.l.b16 %v443
        %v508 = vunpack.c.l.b16 %v444
        %v509 = vunpack.c.l.b16 %v445
        %v510 = vunpack.c.l.b16 %v446
        %v511 = vunpack.c.l.b16 %v447
        %v512 = vunpack.c.l.b16 %v448
        %v513 = vunpack.c.l.b16 %v449
        %v514 = vunpack.c.l.b16 %v450
        %v515 = vunpack.c.l.b16 %v451
        %v516 = vunpack.c.l.b16 %v452
        %v517 = vunpack.c.l.b16 %v453
        %v518 = vunpack.c.l.b16 %v454
        %v519 = vunpack.c.l.b16 %v455
        %v520 = vunpack.c.l.b16 %v456
        %v521 = vunpack.c.l.b16 %v457
        %v522 = vunpack.c.l.b16 %v458
        %v523 = vunpack.c.l.b16 %v459
        %v524 = vunpack.c.l.b16 %v460
        %v525 = vunpack.c.l.b16 %v461
        %v526 = vunpack.c.l.b16 %v462
        %v527 = vunpack.c.l.b16 %v463
        %v528 = vunpack.c.l.b16 %v464
        %v529 = vunpack.c.l.b16 %v465
        %v530 = vunpack.c.l.b16 %v466
        %v531 = vunpack.c.l.b16 %v467
        %v532 = vpack.c.b16 %v501, %v500
        %v533 = vpack.c.b16 %v503, %v502
        %v534 = vpack.c.b16 %v505, %v504
        %v535 = vpack.c.b16 %v507, %v506
        %v536 = vpack.c.b16 %v509, %v508
        %v537 = vpack.c.b16 %v511, %v510
        %v538 = vpack.c.b16 %v513, %v512
        %v539 = vpack.c.b16 %v515, %v514
        %v540 = vpack.c.b16 %v517, %v516
        %v541 = vpack.c.b16 %v519, %v518
        %v542 = vpack.c.b16 %v521, %v520
        %v543 = vpack.c.b16 %v523, %v522
        %v544 = vpack.c.b16 %v525, %v524
        %v545 = vpack.c.b16 %v527, %v526
        %v546 = vpack.c.b16 %v529, %v528
        %v547 = vpack.c.b16 %v531, %v530
        %564 = vmatprep.subr.bf16.mxu0 0
        %565 = vmatpush1.bf16.msra.mxu0 %v532
        %566 = vmatprep.subr.bf16.mxu0 0
        %567 = vmatpush1.bf16.msra.mxu0 %v533
        %568 = vmatprep.subr.bf16.mxu0 0
        %569 = vmatpush1.bf16.msra.mxu0 %v534
        %570 = vmatprep.subr.bf16.mxu0 0
        %571 = vmatpush1.bf16.msra.mxu0 %v535
        %572 = vmatprep.subr.bf16.mxu0 0
        %573 = vmatpush1.bf16.msra.mxu0 %v536
        %574 = vmatprep.subr.bf16.mxu0 0
        %575 = vmatpush1.bf16.msra.mxu0 %v537
        %576 = vmatprep.subr.bf16.mxu0 0
        %577 = vmatpush1.bf16.msra.mxu0 %v538
        %578 = vmatprep.subr.bf16.mxu0 0
        %579 = vmatpush1.bf16.msra.mxu0 %v539
        %580 = vmatprep.subr.bf16.mxu0 0
        %581 = vmatpush1.bf16.msra.mxu0 %v540
        %582 = vmatprep.subr.bf16.mxu0 0
        %583 = vmatpush1.bf16.msra.mxu0 %v541
        %584 = vmatprep.subr.bf16.mxu0 0
        %585 = vmatpush1.bf16.msra.mxu0 %v542
        %586 = vmatprep.subr.bf16.mxu0 0
        %587 = vmatpush1.bf16.msra.mxu0 %v543
        %588 = vmatprep.subr.bf16.mxu0 0
        %589 = vmatpush1.bf16.msra.mxu0 %v544
        %590 = vmatprep.subr.bf16.mxu0 0
        %591 = vmatpush1.bf16.msra.mxu0 %v545
        %592 = vmatprep.subr.bf16.mxu0 0
        %593 = vmatpush1.bf16.msra.mxu0 %v546
        %594 = vmatprep.subr.bf16.mxu0 0
        %595 = vmatpush1.bf16.msra.mxu0 %v547
        %596 = vmatprep.mubr.bf16.mxu0 1065369472
        %597 = vmatmul.mubr.bf16.gmra.mrb[0].mxu0 1065369472
        %v598 = vpop.f32.mrb[0].mxu0
        %v599 = vadd.f32 0.0, %v598
        %v600 = vpop.f32.mrb[0].mxu0
        %v601 = vpop.f32.mrb[0].mxu0
        %v602 = vpop.f32.mrb[0].mxu0
        %603 = vdwg.mxu0
        %v604 = vmul.f32 %v599, 0.00390625
        %v605 = vpack.c.bf16 %v604, %v604
        %v606 = vld [vmem:[%s410] sm:$0xf]
        %vm607 = vcmask 64512
        %v609 = vsel %vm607, %v605, 0
        %vm611 = vcmask 1043456
        %v613 = vsel %vm611, %v606, 0
        %615 = vmatprep.subr.bf16.mxu0 0
        %616 = vmatpush1.bf16.msra.mxu0 %v613
        %617 = vmatprep.subr.bf16.mxu0 0
        %618 = vmatpush1.bf16.msra.mxu0 0
        %619 = vmatprep.subr.bf16.mxu0 0
        %620 = vmatpush1.bf16.msra.mxu0 0
        %621 = vmatprep.subr.bf16.mxu0 0
        %622 = vmatpush1.bf16.msra.mxu0 0
        %623 = vmatprep.subr.bf16.mxu0 0
        %624 = vmatpush1.bf16.msra.mxu0 0
        %625 = vmatprep.subr.bf16.mxu0 0
        %626 = vmatpush1.bf16.msra.mxu0 0
        %627 = vmatprep.subr.bf16.mxu0 0
        %628 = vmatpush1.bf16.msra.mxu0 0
        %629 = vmatprep.subr.bf16.mxu0 0
        %630 = vmatpush1.bf16.msra.mxu0 0
        %631 = vmatprep.subr.bf16.mxu0 0
        %632 = vmatpush1.bf16.msra.mxu0 0
        %633 = vmatprep.subr.bf16.mxu0 0
        %634 = vmatpush1.bf16.msra.mxu0 0
        %635 = vmatprep.subr.bf16.mxu0 0
        %636 = vmatpush1.bf16.msra.mxu0 0
        %637 = vmatprep.subr.bf16.mxu0 0
        %638 = vmatpush1.bf16.msra.mxu0 0
        %639 = vmatprep.subr.bf16.mxu0 0
        %640 = vmatpush1.bf16.msra.mxu0 0
        %641 = vmatprep.subr.bf16.mxu0 0
        %642 = vmatpush1.bf16.msra.mxu0 0
        %643 = vmatprep.subr.bf16.mxu0 0
        %644 = vmatpush1.bf16.msra.mxu0 0
        %645 = vmatprep.subr.bf16.mxu0 0
        %646 = vmatpush1.bf16.msra.mxu0 0
        %647 = vmatprep.mubr.bf16.mxu0 0
        %648 = vmatmul.mubr.bf16.gmra.mrb[0].mxu0 %v609
        %v649 = vpop.f32.mrb[0].mxu0
        %v650 = vadd.f32 0.0, %v649
        %v651 = vpop.f32.mrb[0].mxu0
        %v652 = vpop.f32.mrb[0].mxu0
        %v653 = vpop.f32.mrb[0].mxu0
        %654 = vdwg.mxu0
        %v655 = vld [vmem:[%s430] sm:$0x1]
        %v656 = vmul.f32 %v650, %v655
        %v657 = vld [vmem:[%s433] sm:$0x1]
        %v658 = vadd.f32 %v656, %v657
        %v659 = vmax.f32 %v658, 0.0
        %v660 = vpack.c.bf16 %v659, %v659
        %v662 = vpack.i.b16 %v660, %v660
        %v664 = vlaneseq
        %v665 = vshrl.u32 %v664, 7
        %v666 = vsub.s32 0, %v665
        %v667 = vrot.slane %v662, %v666
        %v669 = vunpack.c.l.b16 %v667
        %v670 = vpack.c.b16 %v669, %v669
        %vm672 = vcmask 257024
        %673 = vst.msk [vmem:[%s401] sm:$0xf] %vm672, %v670
        %674 = vst.msk [vmem:[%s401 + $0x4] sm:$0xf] %vm672, %v670
        %675 = vst.msk [vmem:[%s401 + $0x8] sm:$0xf] %vm672, %v670
        %676 = vst.msk [vmem:[%s401 + $0xc] sm:$0xf] %vm672, %v670
        %677 = vst.msk [vmem:[%s401 + $0x10] sm:$0xf] %vm672, %v670
        %678 = vst.msk [vmem:[%s401 + $0x14] sm:$0xf] %vm672, %v670
        %679 = vst.msk [vmem:[%s401 + $0x18] sm:$0xf] %vm672, %v670
        %680 = vst.msk [vmem:[%s401 + $0x1c] sm:$0xf] %vm672, %v670
        %681 = vst.msk [vmem:[%s401 + $0x20] sm:$0xf] %vm672, %v670
        %682 = vst.msk [vmem:[%s401 + $0x24] sm:$0xf] %vm672, %v670
        %683 = vst.msk [vmem:[%s401 + $0x28] sm:$0xf] %vm672, %v670
        %684 = vst.msk [vmem:[%s401 + $0x2c] sm:$0xf] %vm672, %v670
        %685 = vst.msk [vmem:[%s401 + $0x30] sm:$0xf] %vm672, %v670
        %686 = vst.msk [vmem:[%s401 + $0x34] sm:$0xf] %vm672, %v670
        %687 = vst.msk [vmem:[%s401 + $0x38] sm:$0xf] %vm672, %v670
        %688 = vst.msk [vmem:[%s401 + $0x3c] sm:$0xf] %vm672, %v670
        %689 = vst.msk [vmem:[%s401 + $0x40] sm:$0xf] %vm672, %v670
        %690 = vst.msk [vmem:[%s401 + $0x44] sm:$0xf] %vm672, %v670
        %691 = vst.msk [vmem:[%s401 + $0x48] sm:$0xf] %vm672, %v670
        %692 = vst.msk [vmem:[%s401 + $0x4c] sm:$0xf] %vm672, %v670
        %693 = vst.msk [vmem:[%s401 + $0x50] sm:$0xf] %vm672, %v670
        %694 = vst.msk [vmem:[%s401 + $0x54] sm:$0xf] %vm672, %v670
        %695 = vst.msk [vmem:[%s401 + $0x58] sm:$0xf] %vm672, %v670
        %696 = vst.msk [vmem:[%s401 + $0x5c] sm:$0xf] %vm672, %v670
        %697 = vst.msk [vmem:[%s401 + $0x60] sm:$0xf] %vm672, %v670
        %698 = vst.msk [vmem:[%s401 + $0x64] sm:$0xf] %vm672, %v670
        %699 = vst.msk [vmem:[%s401 + $0x68] sm:$0xf] %vm672, %v670
        %700 = vst.msk [vmem:[%s401 + $0x6c] sm:$0xf] %vm672, %v670
        %701 = vst.msk [vmem:[%s401 + $0x70] sm:$0xf] %vm672, %v670
        %702 = vst.msk [vmem:[%s401 + $0x74] sm:$0xf] %vm672, %v670
        %703 = vst.msk [vmem:[%s401 + $0x78] sm:$0xf] %vm672, %v670
        %704 = vst.msk [vmem:[%s401 + $0x7c] sm:$0xf] %vm672, %v670
        %v705 = vld [vmem:[%s414] sm:$0xf]
        %v707 = vsel %vm607, %v532, 0
        %v710 = vsel %vm607, %v533, 0
        %v713 = vsel %vm607, %v534, 0
        %v716 = vsel %vm607, %v535, 0
        %v719 = vsel %vm607, %v536, 0
        %v722 = vsel %vm607, %v537, 0
        %v725 = vsel %vm607, %v538, 0
        %v728 = vsel %vm607, %v539, 0
        %v731 = vsel %vm607, %v540, 0
        %v734 = vsel %vm607, %v541, 0
        %v737 = vsel %vm607, %v542, 0
        %v740 = vsel %vm607, %v543, 0
        %v743 = vsel %vm607, %v544, 0
        %v746 = vsel %vm607, %v545, 0
        %v749 = vsel %vm607, %v546, 0
        %v752 = vsel %vm607, %v547, 0
        %v755 = vsel %vm611, %v705, 0
        %757 = vmatprep.subr.bf16.mxu0 0
        %758 = vmatpush1.bf16.msra.mxu0 %v755
        %759 = vmatprep.subr.bf16.mxu0 0
        %760 = vmatpush1.bf16.msra.mxu0 0
        %761 = vmatprep.subr.bf16.mxu0 0
        %762 = vmatpush1.bf16.msra.mxu0 0
        %763 = vmatprep.subr.bf16.mxu0 0
        %764 = vmatpush1.bf16.msra.mxu0 0
        %765 = vmatprep.subr.bf16.mxu0 0
        %766 = vmatpush1.bf16.msra.mxu0 0
        %767 = vmatprep.subr.bf16.mxu0 0
        %768 = vmatpush1.bf16.msra.mxu0 0
        %769 = vmatprep.subr.bf16.mxu0 0
        %770 = vmatpush1.bf16.msra.mxu0 0
        %771 = vmatprep.subr.bf16.mxu0 0
        %772 = vmatpush1.bf16.msra.mxu0 0
        %773 = vmatprep.subr.bf16.mxu0 0
        %774 = vmatpush1.bf16.msra.mxu0 0
        %775 = vmatprep.subr.bf16.mxu0 0
        %776 = vmatpush1.bf16.msra.mxu0 0
        %777 = vmatprep.subr.bf16.mxu0 0
        %778 = vmatpush1.bf16.msra.mxu0 0
        %779 = vmatprep.subr.bf16.mxu0 0
        %780 = vmatpush1.bf16.msra.mxu0 0
        %781 = vmatprep.subr.bf16.mxu0 0
        %782 = vmatpush1.bf16.msra.mxu0 0
        %783 = vmatprep.subr.bf16.mxu0 0
        %784 = vmatpush1.bf16.msra.mxu0 0
        %785 = vmatprep.subr.bf16.mxu0 0
        %786 = vmatpush1.bf16.msra.mxu0 0
        %787 = vmatprep.subr.bf16.mxu0 0
        %788 = vmatpush1.bf16.msra.mxu0 0
        %789 = vmatprep.mubr.bf16.mxu0 0
        %790 = vmatmul.mubr.bf16.gmra.mrb[0].mxu0 %v707
        %v791 = vpop.f32.mrb[0].mxu0
        %v792 = vadd.f32 0.0, %v791
        %v793 = vpop.f32.mrb[0].mxu0
        %v794 = vpop.f32.mrb[0].mxu0
        %v795 = vadd.f32 0.0, %v794
        %v796 = vpop.f32.mrb[0].mxu0
        %797 = vmatprep.mubr.bf16.mxu0 0
        %798 = vmatmul.mubr.bf16.gmra.mrb[0].mxu0 %v710
        %v799 = vpop.f32.mrb[0].mxu0
        %v800 = vadd.f32 0.0, %v799
        %v801 = vpop.f32.mrb[0].mxu0
        %v802 = vpop.f32.mrb[0].mxu0
        %v803 = vadd.f32 0.0, %v802
        %v804 = vpop.f32.mrb[0].mxu0
        %805 = vmatprep.mubr.bf16.mxu0 0
        %806 = vmatmul.mubr.bf16.gmra.mrb[0].mxu0 %v713
        %v807 = vpop.f32.mrb[0].mxu0
        %v808 = vadd.f32 0.0, %v807
        %v809 = vpop.f32.mrb[0].mxu0
        %v810 = vpop.f32.mrb[0].mxu0
        %v811 = vadd.f32 0.0, %v810
        %v812 = vpop.f32.mrb[0].mxu0
        %813 = vmatprep.mubr.bf16.mxu0 0
        %814 = vmatmul.mubr.bf16.gmra.mrb[0].mxu0 %v716
        %v815 = vpop.f32.mrb[0].mxu0
        %v816 = vadd.f32 0.0, %v815
        %v817 = vpop.f32.mrb[0].mxu0
        %v818 = vpop.f32.mrb[0].mxu0
        %v819 = vadd.f32 0.0, %v818
        %v820 = vpop.f32.mrb[0].mxu0
        %821 = vmatprep.mubr.bf16.mxu0 0
        %822 = vmatmul.mubr.bf16.gmra.mrb[0].mxu0 %v719
        %v823 = vpop.f32.mrb[0].mxu0
        %v824 = vadd.f32 0.0, %v823
        %v825 = vpop.f32.mrb[0].mxu0
        %v826 = vpop.f32.mrb[0].mxu0
        %v827 = vadd.f32 0.0, %v826
        %v828 = vpop.f32.mrb[0].mxu0
        %829 = vmatprep.mubr.bf16.mxu0 0
        %830 = vmatmul.mubr.bf16.gmra.mrb[0].mxu0 %v722
        %v831 = vpop.f32.mrb[0].mxu0
        %v832 = vadd.f32 0.0, %v831
        %v833 = vpop.f32.mrb[0].mxu0
        %v834 = vpop.f32.mrb[0].mxu0
        %v835 = vadd.f32 0.0, %v834
        %v836 = vpop.f32.mrb[0].mxu0
        %837 = vmatprep.mubr.bf16.mxu0 0
        %838 = vmatmul.mubr.bf16.gmra.mrb[0].mxu0 %v725
        %v839 = vpop.f32.mrb[0].mxu0
        %v840 = vadd.f32 0.0, %v839
        %v841 = vpop.f32.mrb[0].mxu0
        %v842 = vpop.f32.mrb[0].mxu0
        %v843 = vadd.f32 0.0, %v842
        %v844 = vpop.f32.mrb[0].mxu0
        %845 = vmatprep.mubr.bf16.mxu0 0
        %846 = vmatmul.mubr.bf16.gmra.mrb[0].mxu0 %v728
        %v847 = vpop.f32.mrb[0].mxu0
        %v848 = vadd.f32 0.0, %v847
        %v849 = vpop.f32.mrb[0].mxu0
        %v850 = vpop.f32.mrb[0].mxu0
        %v851 = vadd.f32 0.0, %v850
        %v852 = vpop.f32.mrb[0].mxu0
        %853 = vmatprep.mubr.bf16.mxu0 0
        %854 = vmatmul.mubr.bf16.gmra.mrb[0].mxu0 %v731
        %v855 = vpop.f32.mrb[0].mxu0
        %v856 = vadd.f32 0.0, %v855
        %v857 = vpop.f32.mrb[0].mxu0
        %v858 = vpop.f32.mrb[0].mxu0
        %v859 = vadd.f32 0.0, %v858
        %v860 = vpop.f32.mrb[0].mxu0
        %861 = vmatprep.mubr.bf16.mxu0 0
        %862 = vmatmul.mubr.bf16.gmra.mrb[0].mxu0 %v734
        %v863 = vpop.f32.mrb[0].mxu0
        %v864 = vadd.f32 0.0, %v863
        %v865 = vpop.f32.mrb[0].mxu0
        %v866 = vpop.f32.mrb[0].mxu0
        %v867 = vadd.f32 0.0, %v866
        %v868 = vpop.f32.mrb[0].mxu0
        %869 = vmatprep.mubr.bf16.mxu0 0
        %870 = vmatmul.mubr.bf16.gmra.mrb[0].mxu0 %v737
        %v871 = vpop.f32.mrb[0].mxu0
        %v872 = vadd.f32 0.0, %v871
        %v873 = vpop.f32.mrb[0].mxu0
        %v874 = vpop.f32.mrb[0].mxu0
        %v875 = vadd.f32 0.0, %v874
        %v876 = vpop.f32.mrb[0].mxu0
        %877 = vmatprep.mubr.bf16.mxu0 0
        %878 = vmatmul.mubr.bf16.gmra.mrb[0].mxu0 %v740
        %v879 = vpop.f32.mrb[0].mxu0
        %v880 = vadd.f32 0.0, %v879
        %v881 = vpop.f32.mrb[0].mxu0
        %v882 = vpop.f32.mrb[0].mxu0
        %v883 = vadd.f32 0.0, %v882
        %v884 = vpop.f32.mrb[0].mxu0
        %885 = vmatprep.mubr.bf16.mxu0 0
        %886 = vmatmul.mubr.bf16.gmra.mrb[0].mxu0 %v743
        %v887 = vpop.f32.mrb[0].mxu0
        %v888 = vadd.f32 0.0, %v887
        %v889 = vpop.f32.mrb[0].mxu0
        %v890 = vpop.f32.mrb[0].mxu0
        %v891 = vadd.f32 0.0, %v890
        %v892 = vpop.f32.mrb[0].mxu0
        %893 = vmatprep.mubr.bf16.mxu0 0
        %894 = vmatmul.mubr.bf16.gmra.mrb[0].mxu0 %v746
        %v895 = vpop.f32.mrb[0].mxu0
        %v896 = vadd.f32 0.0, %v895
        %v897 = vpop.f32.mrb[0].mxu0
        %v898 = vpop.f32.mrb[0].mxu0
        %v899 = vadd.f32 0.0, %v898
        %v900 = vpop.f32.mrb[0].mxu0
        %901 = vmatprep.mubr.bf16.mxu0 0
        %902 = vmatmul.mubr.bf16.gmra.mrb[0].mxu0 %v749
        %v903 = vpop.f32.mrb[0].mxu0
        %v904 = vadd.f32 0.0, %v903
        %v905 = vpop.f32.mrb[0].mxu0
        %v906 = vpop.f32.mrb[0].mxu0
        %v907 = vadd.f32 0.0, %v906
        %v908 = vpop.f32.mrb[0].mxu0
        %909 = vmatprep.mubr.bf16.mxu0 0
        %910 = vmatmul.mubr.bf16.gmra.mrb[0].mxu0 %v752
        %v911 = vpop.f32.mrb[0].mxu0
        %v912 = vadd.f32 0.0, %v911
        %v913 = vpop.f32.mrb[0].mxu0
        %v914 = vpop.f32.mrb[0].mxu0
        %v915 = vadd.f32 0.0, %v914
        %v916 = vpop.f32.mrb[0].mxu0
        %917 = vdwg.mxu0
        %s918 = scalar_lea.vmem %s430, 1
        %v919 = vld [vmem:[%s918] sm:$0x1]
        %v921 = vlaneseq
        %v922 = vshrl.u32 %v921, 7
        %v923 = vsub.s32 0, %v922
        %v924 = vrot.slane %v919, %v923
        %v926 = vmul.f32 %v792, %v924
        %v927 = vmul.f32 %v795, %v924
        %v928 = vmul.f32 %v800, %v924
        %v929 = vmul.f32 %v803, %v924
        %v930 = vmul.f32 %v808, %v924
        %v931 = vmul.f32 %v811, %v924
        %v932 = vmul.f32 %v816, %v924
        %v933 = vmul.f32 %v819, %v924
        %v934 = vmul.f32 %v824, %v924
        %v935 = vmul.f32 %v827, %v924
        %v936 = vmul.f32 %v832, %v924
        %v937 = vmul.f32 %v835, %v924
        %v938 = vmul.f32 %v840, %v924
        %v939 = vmul.f32 %v843, %v924
        %v940 = vmul.f32 %v848, %v924
        %v941 = vmul.f32 %v851, %v924
        %v942 = vmul.f32 %v856, %v924
        %v943 = vmul.f32 %v859, %v924
        %v944 = vmul.f32 %v864, %v924
        %v945 = vmul.f32 %v867, %v924
        %v946 = vmul.f32 %v872, %v924
        %v947 = vmul.f32 %v875, %v924
        %v948 = vmul.f32 %v880, %v924
        %v949 = vmul.f32 %v883, %v924
        %v950 = vmul.f32 %v888, %v924
        %v951 = vmul.f32 %v891, %v924
        %v952 = vmul.f32 %v896, %v924
        %v953 = vmul.f32 %v899, %v924
        %v954 = vmul.f32 %v904, %v924
        %v955 = vmul.f32 %v907, %v924
        %v956 = vmul.f32 %v912, %v924
        %v957 = vmul.f32 %v915, %v924
        %s958 = scalar_lea.vmem %s433, 1
        %v959 = vld [vmem:[%s958] sm:$0x1]
        %v961 = vlaneseq
        %v962 = vshrl.u32 %v961, 7
        %v963 = vsub.s32 0, %v962
        %v964 = vrot.slane %v959, %v963
        %v966 = vadd.f32 %v926, %v964
        %v967 = vadd.f32 %v927, %v964
        %v968 = vadd.f32 %v928, %v964
        %v969 = vadd.f32 %v929, %v964
        %v970 = vadd.f32 %v930, %v964
        %v971 = vadd.f32 %v931, %v964
        %v972 = vadd.f32 %v932, %v964
        %v973 = vadd.f32 %v933, %v964
        %v974 = vadd.f32 %v934, %v964
        %v975 = vadd.f32 %v935, %v964
        %v976 = vadd.f32 %v936, %v964
        %v977 = vadd.f32 %v937, %v964
        %v978 = vadd.f32 %v938, %v964
        %v979 = vadd.f32 %v939, %v964
        %v980 = vadd.f32 %v940, %v964
        %v981 = vadd.f32 %v941, %v964
        %v982 = vadd.f32 %v942, %v964
        %v983 = vadd.f32 %v943, %v964
        %v984 = vadd.f32 %v944, %v964
        %v985 = vadd.f32 %v945, %v964
        %v986 = vadd.f32 %v946, %v964
        %v987 = vadd.f32 %v947, %v964
        %v988 = vadd.f32 %v948, %v964
        %v989 = vadd.f32 %v949, %v964
        %v990 = vadd.f32 %v950, %v964
        %v991 = vadd.f32 %v951, %v964
        %v992 = vadd.f32 %v952, %v964
        %v993 = vadd.f32 %v953, %v964
        %v994 = vadd.f32 %v954, %v964
        %v995 = vadd.f32 %v955, %v964
        %v996 = vadd.f32 %v956, %v964
        %v997 = vadd.f32 %v957, %v964
        %v998 = vmax.f32 %v966, 0.0
        %v999 = vmax.f32 %v967, 0.0
        %v1000 = vmax.f32 %v968, 0.0
        %v1001 = vmax.f32 %v969, 0.0
        %v1002 = vmax.f32 %v970, 0.0
        %v1003 = vmax.f32 %v971, 0.0
        %v1004 = vmax.f32 %v972, 0.0
        %v1005 = vmax.f32 %v973, 0.0
        %v1006 = vmax.f32 %v974, 0.0
        %v1007 = vmax.f32 %v975, 0.0
        %v1008 = vmax.f32 %v976, 0.0
        %v1009 = vmax.f32 %v977, 0.0
        %v1010 = vmax.f32 %v978, 0.0
        %v1011 = vmax.f32 %v979, 0.0
        %v1012 = vmax.f32 %v980, 0.0
        %v1013 = vmax.f32 %v981, 0.0
        %v1014 = vmax.f32 %v982, 0.0
        %v1015 = vmax.f32 %v983, 0.0
        %v1016 = vmax.f32 %v984, 0.0
        %v1017 = vmax.f32 %v985, 0.0
        %v1018 = vmax.f32 %v986, 0.0
        %v1019 = vmax.f32 %v987, 0.0
        %v1020 = vmax.f32 %v988, 0.0
        %v1021 = vmax.f32 %v989, 0.0
        %v1022 = vmax.f32 %v990, 0.0
        %v1023 = vmax.f32 %v991, 0.0
        %v1024 = vmax.f32 %v992, 0.0
        %v1025 = vmax.f32 %v993, 0.0
        %v1026 = vmax.f32 %v994, 0.0
        %v1027 = vmax.f32 %v995, 0.0
        %v1028 = vmax.f32 %v996, 0.0
        %v1029 = vmax.f32 %v997, 0.0
        %v1030 = vpack.c.bf16 %v999, %v998
        %v1031 = vpack.c.bf16 %v1001, %v1000
        %v1032 = vpack.c.bf16 %v1003, %v1002
        %v1033 = vpack.c.bf16 %v1005, %v1004
        %v1034 = vpack.c.bf16 %v1007, %v1006
        %v1035 = vpack.c.bf16 %v1009, %v1008
        %v1036 = vpack.c.bf16 %v1011, %v1010
        %v1037 = vpack.c.bf16 %v1013, %v1012
        %v1038 = vpack.c.bf16 %v1015, %v1014
        %v1039 = vpack.c.bf16 %v1017, %v1016
        %v1040 = vpack.c.bf16 %v1019, %v1018
        %v1041 = vpack.c.bf16 %v1021, %v1020
        %v1042 = vpack.c.bf16 %v1023, %v1022
        %v1043 = vpack.c.bf16 %v1025, %v1024
        %v1044 = vpack.c.bf16 %v1027, %v1026
        %v1045 = vpack.c.bf16 %v1029, %v1028
        %v1062 = vunpack.c.l.b16 %v1030
        %v1063 = vunpack.c.h.b16 %v1030
        %v1064 = vunpack.c.l.b16 %v1031
        %v1065 = vunpack.c.h.b16 %v1031
        %v1066 = vunpack.c.l.b16 %v1032
        %v1067 = vunpack.c.h.b16 %v1032
        %v1068 = vunpack.c.l.b16 %v1033
        %v1069 = vunpack.c.h.b16 %v1033
        %v1070 = vunpack.c.l.b16 %v1034
        %v1071 = vunpack.c.h.b16 %v1034
        %v1072 = vunpack.c.l.b16 %v1035
        %v1073 = vunpack.c.h.b16 %v1035
        %v1074 = vunpack.c.l.b16 %v1036
        %v1075 = vunpack.c.h.b16 %v1036
        %v1076 = vunpack.c.l.b16 %v1037
        %v1077 = vunpack.c.h.b16 %v1037
        %v1078 = vunpack.c.l.b16 %v1038
        %v1079 = vunpack.c.h.b16 %v1038
        %v1080 = vunpack.c.l.b16 %v1039
        %v1081 = vunpack.c.h.b16 %v1039
        %v1082 = vunpack.c.l.b16 %v1040
        %v1083 = vunpack.c.h.b16 %v1040
        %v1084 = vunpack.c.l.b16 %v1041
        %v1085 = vunpack.c.h.b16 %v1041
        %v1086 = vunpack.c.l.b16 %v1042
        %v1087 = vunpack.c.h.b16 %v1042
        %v1088 = vunpack.c.l.b16 %v1043
        %v1089 = vunpack.c.h.b16 %v1043
        %v1090 = vunpack.c.l.b16 %v1044
        %v1091 = vunpack.c.h.b16 %v1044
        %v1092 = vunpack.c.l.b16 %v1045
        %v1093 = vunpack.c.h.b16 %v1045
        %v1094 = vpack.c.b16 %v1062, %v1062
        %v1095 = vpack.c.b16 %v1063, %v1063
        %v1096 = vpack.c.b16 %v1064, %v1064
        %v1097 = vpack.c.b16 %v1065, %v1065
        %v1098 = vpack.c.b16 %v1066, %v1066
        %v1099 = vpack.c.b16 %v1067, %v1067
        %v1100 = vpack.c.b16 %v1068, %v1068
        %v1101 = vpack.c.b16 %v1069, %v1069
        %v1102 = vpack.c.b16 %v1070, %v1070
        %v1103 = vpack.c.b16 %v1071, %v1071
        %v1104 = vpack.c.b16 %v1072, %v1072
        %v1105 = vpack.c.b16 %v1073, %v1073
        %v1106 = vpack.c.b16 %v1074, %v1074
        %v1107 = vpack.c.b16 %v1075, %v1075
        %v1108 = vpack.c.b16 %v1076, %v1076
        %v1109 = vpack.c.b16 %v1077, %v1077
        %v1110 = vpack.c.b16 %v1078, %v1078
        %v1111 = vpack.c.b16 %v1079, %v1079
        %v1112 = vpack.c.b16 %v1080, %v1080
        %v1113 = vpack.c.b16 %v1081, %v1081
        %v1114 = vpack.c.b16 %v1082, %v1082
        %v1115 = vpack.c.b16 %v1083, %v1083
        %v1116 = vpack.c.b16 %v1084, %v1084
        %v1117 = vpack.c.b16 %v1085, %v1085
        %v1118 = vpack.c.b16 %v1086, %v1086
        %v1119 = vpack.c.b16 %v1087, %v1087
        %v1120 = vpack.c.b16 %v1088, %v1088
        %v1121 = vpack.c.b16 %v1089, %v1089
        %v1122 = vpack.c.b16 %v1090, %v1090
        %v1123 = vpack.c.b16 %v1091, %v1091
        %v1124 = vpack.c.b16 %v1092, %v1092
        %v1125 = vpack.c.b16 %v1093, %v1093
        %s1158 = scalar_lea.vmem %s401, 128 [#allocation3]
        %1159 = vst.msk [vmem:[%s1158] sm:$0xf] %vm672, %v1094
        %1160 = vst.msk [vmem:[%s1158 + $0x4] sm:$0xf] %vm672, %v1095
        %1161 = vst.msk [vmem:[%s1158 + $0x8] sm:$0xf] %vm672, %v1096
        %1162 = vst.msk [vmem:[%s1158 + $0xc] sm:$0xf] %vm672, %v1097
        %1163 = vst.msk [vmem:[%s1158 + $0x10] sm:$0xf] %vm672, %v1098
        %1164 = vst.msk [vmem:[%s1158 + $0x14] sm:$0xf] %vm672, %v1099
        %1165 = vst.msk [vmem:[%s1158 + $0x18] sm:$0xf] %vm672, %v1100
        %1166 = vst.msk [vmem:[%s1158 + $0x1c] sm:$0xf] %vm672, %v1101
        %1167 = vst.msk [vmem:[%s1158 + $0x20] sm:$0xf] %vm672, %v1102
        %1168 = vst.msk [vmem:[%s1158 + $0x24] sm:$0xf] %vm672, %v1103
        %1169 = vst.msk [vmem:[%s1158 + $0x28] sm:$0xf] %vm672, %v1104
        %1170 = vst.msk [vmem:[%s1158 + $0x2c] sm:$0xf] %vm672, %v1105
        %1171 = vst.msk [vmem:[%s1158 + $0x30] sm:$0xf] %vm672, %v1106
        %1172 = vst.msk [vmem:[%s1158 + $0x34] sm:$0xf] %vm672, %v1107
        %1173 = vst.msk [vmem:[%s1158 + $0x38] sm:$0xf] %vm672, %v1108
        %1174 = vst.msk [vmem:[%s1158 + $0x3c] sm:$0xf] %vm672, %v1109
        %1175 = vst.msk [vmem:[%s1158 + $0x40] sm:$0xf] %vm672, %v1110
        %1176 = vst.msk [vmem:[%s1158 + $0x44] sm:$0xf] %vm672, %v1111
        %1177 = vst.msk [vmem:[%s1158 + $0x48] sm:$0xf] %vm672, %v1112
        %1178 = vst.msk [vmem:[%s1158 + $0x4c] sm:$0xf] %vm672, %v1113
        %1179 = vst.msk [vmem:[%s1158 + $0x50] sm:$0xf] %vm672, %v1114
        %1180 = vst.msk [vmem:[%s1158 + $0x54] sm:$0xf] %vm672, %v1115
        %1181 = vst.msk [vmem:[%s1158 + $0x58] sm:$0xf] %vm672, %v1116
        %1182 = vst.msk [vmem:[%s1158 + $0x5c] sm:$0xf] %vm672, %v1117
        %1183 = vst.msk [vmem:[%s1158 + $0x60] sm:$0xf] %vm672, %v1118
        %1184 = vst.msk [vmem:[%s1158 + $0x64] sm:$0xf] %vm672, %v1119
        %1185 = vst.msk [vmem:[%s1158 + $0x68] sm:$0xf] %vm672, %v1120
        %1186 = vst.msk [vmem:[%s1158 + $0x6c] sm:$0xf] %vm672, %v1121
        %1187 = vst.msk [vmem:[%s1158 + $0x70] sm:$0xf] %vm672, %v1122
        %1188 = vst.msk [vmem:[%s1158 + $0x74] sm:$0xf] %vm672, %v1123
        %1189 = vst.msk [vmem:[%s1158 + $0x78] sm:$0xf] %vm672, %v1124
        %1190 = vst.msk [vmem:[%s1158 + $0x7c] sm:$0xf] %vm672, %v1125
        %v1191 = vld [vmem:[%s419] sm:$0xf]
        %v1193 = vsel %vm611, %v1191, 0
        %1195 = vmatprep.subr.bf16.mxu0 0
        %1196 = vmatpush1.bf16.msra.mxu0 %v1193
        %1197 = vmatprep.subr.bf16.mxu0 0
        %1198 = vmatpush1.bf16.msra.mxu0 0
        %1199 = vmatprep.subr.bf16.mxu0 0
        %1200 = vmatpush1.bf16.msra.mxu0 0
        %1201 = vmatprep.subr.bf16.mxu0 0
        %1202 = vmatpush1.bf16.msra.mxu0 0
        %1203 = vmatprep.subr.bf16.mxu0 0
        %1204 = vmatpush1.bf16.msra.mxu0 0
        %1205 = vmatprep.subr.bf16.mxu0 0
        %1206 = vmatpush1.bf16.msra.mxu0 0
        %1207 = vmatprep.subr.bf16.mxu0 0
        %1208 = vmatpush1.bf16.msra.mxu0 0
        %1209 = vmatprep.subr.bf16.mxu0 0
        %1210 = vmatpush1.bf16.msra.mxu0 0
        %1211 = vmatprep.subr.bf16.mxu0 0
        %1212 = vmatpush1.bf16.msra.mxu0 0
        %1213 = vmatprep.subr.bf16.mxu0 0
        %1214 = vmatpush1.bf16.msra.mxu0 0
        %1215 = vmatprep.subr.bf16.mxu0 0
        %1216 = vmatpush1.bf16.msra.mxu0 0
        %1217 = vmatprep.subr.bf16.mxu0 0
        %1218 = vmatpush1.bf16.msra.mxu0 0
        %1219 = vmatprep.subr.bf16.mxu0 0
        %1220 = vmatpush1.bf16.msra.mxu0 0
        %1221 = vmatprep.subr.bf16.mxu0 0
        %1222 = vmatpush1.bf16.msra.mxu0 0
        %1223 = vmatprep.subr.bf16.mxu0 0
        %1224 = vmatpush1.bf16.msra.mxu0 0
        %1225 = vmatprep.subr.bf16.mxu0 0
        %1226 = vmatpush1.bf16.msra.mxu0 0
        %1227 = vmatprep.mubr.bf16.mxu0 0
        %1228 = vmatmul.mubr.bf16.gmra.mrb[0].mxu0 %v707
        %v1229 = vpop.f32.mrb[0].mxu0
        %v1230 = vadd.f32 0.0, %v1229
        %v1231 = vpop.f32.mrb[0].mxu0
        %v1232 = vpop.f32.mrb[0].mxu0
        %v1233 = vadd.f32 0.0, %v1232
        %v1234 = vpop.f32.mrb[0].mxu0
        %1235 = vmatprep.mubr.bf16.mxu0 0
        %1236 = vmatmul.mubr.bf16.gmra.mrb[0].mxu0 %v710
        %v1237 = vpop.f32.mrb[0].mxu0
        %v1238 = vadd.f32 0.0, %v1237
        %v1239 = vpop.f32.mrb[0].mxu0
        %v1240 = vpop.f32.mrb[0].mxu0
        %v1241 = vadd.f32 0.0, %v1240
        %v1242 = vpop.f32.mrb[0].mxu0
        %1243 = vmatprep.mubr.bf16.mxu0 0
        %1244 = vmatmul.mubr.bf16.gmra.mrb[0].mxu0 %v713
        %v1245 = vpop.f32.mrb[0].mxu0
        %v1246 = vadd.f32 0.0, %v1245
        %v1247 = vpop.f32.mrb[0].mxu0
        %v1248 = vpop.f32.mrb[0].mxu0
        %v1249 = vadd.f32 0.0, %v1248
        %v1250 = vpop.f32.mrb[0].mxu0
        %1251 = vmatprep.mubr.bf16.mxu0 0
        %1252 = vmatmul.mubr.bf16.gmra.mrb[0].mxu0 %v716
        %v1253 = vpop.f32.mrb[0].mxu0
        %v1254 = vadd.f32 0.0, %v1253
        %v1255 = vpop.f32.mrb[0].mxu0
        %v1256 = vpop.f32.mrb[0].mxu0
        %v1257 = vadd.f32 0.0, %v1256
        %v1258 = vpop.f32.mrb[0].mxu0
        %1259 = vmatprep.mubr.bf16.mxu0 0
        %1260 = vmatmul.mubr.bf16.gmra.mrb[0].mxu0 %v719
        %v1261 = vpop.f32.mrb[0].mxu0
        %v1262 = vadd.f32 0.0, %v1261
        %v1263 = vpop.f32.mrb[0].mxu0
        %v1264 = vpop.f32.mrb[0].mxu0
        %v1265 = vadd.f32 0.0, %v1264
        %v1266 = vpop.f32.mrb[0].mxu0
        %1267 = vmatprep.mubr.bf16.mxu0 0
        %1268 = vmatmul.mubr.bf16.gmra.mrb[0].mxu0 %v722
        %v1269 = vpop.f32.mrb[0].mxu0
        %v1270 = vadd.f32 0.0, %v1269
        %v1271 = vpop.f32.mrb[0].mxu0
        %v1272 = vpop.f32.mrb[0].mxu0
        %v1273 = vadd.f32 0.0, %v1272
        %v1274 = vpop.f32.mrb[0].mxu0
        %1275 = vmatprep.mubr.bf16.mxu0 0
        %1276 = vmatmul.mubr.bf16.gmra.mrb[0].mxu0 %v725
        %v1277 = vpop.f32.mrb[0].mxu0
        %v1278 = vadd.f32 0.0, %v1277
        %v1279 = vpop.f32.mrb[0].mxu0
        %v1280 = vpop.f32.mrb[0].mxu0
        %v1281 = vadd.f32 0.0, %v1280
        %v1282 = vpop.f32.mrb[0].mxu0
        %1283 = vmatprep.mubr.bf16.mxu0 0
        %1284 = vmatmul.mubr.bf16.gmra.mrb[0].mxu0 %v728
        %v1285 = vpop.f32.mrb[0].mxu0
        %v1286 = vadd.f32 0.0, %v1285
        %v1287 = vpop.f32.mrb[0].mxu0
        %v1288 = vpop.f32.mrb[0].mxu0
        %v1289 = vadd.f32 0.0, %v1288
        %v1290 = vpop.f32.mrb[0].mxu0
        %1291 = vmatprep.mubr.bf16.mxu0 0
        %1292 = vmatmul.mubr.bf16.gmra.mrb[0].mxu0 %v731
        %v1293 = vpop.f32.mrb[0].mxu0
        %v1294 = vadd.f32 0.0, %v1293
        %v1295 = vpop.f32.mrb[0].mxu0
        %v1296 = vpop.f32.mrb[0].mxu0
        %v1297 = vadd.f32 0.0, %v1296
        %v1298 = vpop.f32.mrb[0].mxu0
        %1299 = vmatprep.mubr.bf16.mxu0 0
        %1300 = vmatmul.mubr.bf16.gmra.mrb[0].mxu0 %v734
        %v1301 = vpop.f32.mrb[0].mxu0
        %v1302 = vadd.f32 0.0, %v1301
        %v1303 = vpop.f32.mrb[0].mxu0
        %v1304 = vpop.f32.mrb[0].mxu0
        %v1305 = vadd.f32 0.0, %v1304
        %v1306 = vpop.f32.mrb[0].mxu0
        %1307 = vmatprep.mubr.bf16.mxu0 0
        %1308 = vmatmul.mubr.bf16.gmra.mrb[0].mxu0 %v737
        %v1309 = vpop.f32.mrb[0].mxu0
        %v1310 = vadd.f32 0.0, %v1309
        %v1311 = vpop.f32.mrb[0].mxu0
        %v1312 = vpop.f32.mrb[0].mxu0
        %v1313 = vadd.f32 0.0, %v1312
        %v1314 = vpop.f32.mrb[0].mxu0
        %1315 = vmatprep.mubr.bf16.mxu0 0
        %1316 = vmatmul.mubr.bf16.gmra.mrb[0].mxu0 %v740
        %v1317 = vpop.f32.mrb[0].mxu0
        %v1318 = vadd.f32 0.0, %v1317
        %v1319 = vpop.f32.mrb[0].mxu0
        %v1320 = vpop.f32.mrb[0].mxu0
        %v1321 = vadd.f32 0.0, %v1320
        %v1322 = vpop.f32.mrb[0].mxu0
        %1323 = vmatprep.mubr.bf16.mxu0 0
        %1324 = vmatmul.mubr.bf16.gmra.mrb[0].mxu0 %v743
        %v1325 = vpop.f32.mrb[0].mxu0
        %v1326 = vadd.f32 0.0, %v1325
        %v1327 = vpop.f32.mrb[0].mxu0
        %v1328 = vpop.f32.mrb[0].mxu0
        %v1329 = vadd.f32 0.0, %v1328
        %v1330 = vpop.f32.mrb[0].mxu0
        %1331 = vmatprep.mubr.bf16.mxu0 0
        %1332 = vmatmul.mubr.bf16.gmra.mrb[0].mxu0 %v746
        %v1333 = vpop.f32.mrb[0].mxu0
        %v1334 = vadd.f32 0.0, %v1333
        %v1335 = vpop.f32.mrb[0].mxu0
        %v1336 = vpop.f32.mrb[0].mxu0
        %v1337 = vadd.f32 0.0, %v1336
        %v1338 = vpop.f32.mrb[0].mxu0
        %1339 = vmatprep.mubr.bf16.mxu0 0
        %1340 = vmatmul.mubr.bf16.gmra.mrb[0].mxu0 %v749
        %v1341 = vpop.f32.mrb[0].mxu0
        %v1342 = vadd.f32 0.0, %v1341
        %v1343 = vpop.f32.mrb[0].mxu0
        %v1344 = vpop.f32.mrb[0].mxu0
        %v1345 = vadd.f32 0.0, %v1344
        %v1346 = vpop.f32.mrb[0].mxu0
        %1347 = vmatprep.mubr.bf16.mxu0 0
        %1348 = vmatmul.mubr.bf16.gmra.mrb[0].mxu0 %v752
        %v1349 = vpop.f32.mrb[0].mxu0
        %v1350 = vadd.f32 0.0, %v1349
        %v1351 = vpop.f32.mrb[0].mxu0
        %v1352 = vpop.f32.mrb[0].mxu0
        %v1353 = vadd.f32 0.0, %v1352
        %v1354 = vpop.f32.mrb[0].mxu0
        %1355 = vdwg.mxu0
        %1364 = vrot.lane.b32.xlu0 %v1326, 64
        %v1365 = vpop.permute.xlu0 %1364
        %1366 = vrot.lane.b32.xlu0 %v1329, 64
        %v1367 = vpop.permute.xlu0 %1366
        %1368 = vrot.lane.b32.xlu0 %v1334, 64
        %v1369 = vpop.permute.xlu0 %1368
        %1370 = vrot.lane.b32.xlu0 %v1337, 64
        %v1371 = vpop.permute.xlu0 %1370
        %1372 = vrot.lane.b32.xlu0 %v1342, 64
        %v1373 = vpop.permute.xlu0 %1372
        %1374 = vrot.lane.b32.xlu0 %v1345, 64
        %v1375 = vpop.permute.xlu0 %1374
        %1376 = vrot.lane.b32.xlu0 %v1350, 64
        %v1377 = vpop.permute.xlu0 %1376
        %1378 = vrot.lane.b32.xlu0 %v1353, 64
        %v1379 = vpop.permute.xlu0 %1378
        %v1388 = vadd.f32 %v1230, %v1365
        %v1389 = vadd.f32 %v1233, %v1367
        %v1390 = vadd.f32 %v1238, %v1369
        %v1391 = vadd.f32 %v1241, %v1371
        %v1392 = vadd.f32 %v1246, %v1373
        %v1393 = vadd.f32 %v1249, %v1375
        %v1394 = vadd.f32 %v1254, %v1377
        %v1395 = vadd.f32 %v1257, %v1379
        %vm1396 = vcmask 261120
        %1397 = vst.msk [vmem:[#allocation2] sm:$0xff] %vm1396, %v1388
        %1398 = vst.msk [vmem:[#allocation2 + $0x8] sm:$0xff] %vm1396, %v1389
        %1399 = vst.msk [vmem:[#allocation2 + $0x10] sm:$0xff] %vm1396, %v1390
        %1400 = vst.msk [vmem:[#allocation2 + $0x18] sm:$0xff] %vm1396, %v1391
        %1401 = vst.msk [vmem:[#allocation2 + $0x20] sm:$0xff] %vm1396, %v1392
        %1402 = vst.msk [vmem:[#allocation2 + $0x28] sm:$0xff] %vm1396, %v1393
        %1403 = vst.msk [vmem:[#allocation2 + $0x30] sm:$0xff] %vm1396, %v1394
        %1404 = vst.msk [vmem:[#allocation2 + $0x38] sm:$0xff] %vm1396, %v1395
        %s1405 = scalar_lea.vmem [#allocation2], 64
        %1406 = vst.msk [vmem:[%s1405] sm:$0xff] %vm1396, %v1262
        %1407 = vst.msk [vmem:[%s1405 + $0x8] sm:$0xff] %vm1396, %v1265
        %1408 = vst.msk [vmem:[%s1405 + $0x10] sm:$0xff] %vm1396, %v1270
        %1409 = vst.msk [vmem:[%s1405 + $0x18] sm:$0xff] %vm1396, %v1273
        %1410 = vst.msk [vmem:[%s1405 + $0x20] sm:$0xff] %vm1396, %v1278
        %1411 = vst.msk [vmem:[%s1405 + $0x28] sm:$0xff] %vm1396, %v1281
        %1412 = vst.msk [vmem:[%s1405 + $0x30] sm:$0xff] %vm1396, %v1286
        %1413 = vst.msk [vmem:[%s1405 + $0x38] sm:$0xff] %vm1396, %v1289
        %1414 = vst.msk [vmem:[%s1405 + $0x40] sm:$0xff] %vm1396, %v1294
        %1415 = vst.msk [vmem:[%s1405 + $0x48] sm:$0xff] %vm1396, %v1297
        %1416 = vst.msk [vmem:[%s1405 + $0x50] sm:$0xff] %vm1396, %v1302
        %1417 = vst.msk [vmem:[%s1405 + $0x58] sm:$0xff] %vm1396, %v1305
        %1418 = vst.msk [vmem:[%s1405 + $0x60] sm:$0xff] %vm1396, %v1310
        %1419 = vst.msk [vmem:[%s1405 + $0x68] sm:$0xff] %vm1396, %v1313
        %1420 = vst.msk [vmem:[%s1405 + $0x70] sm:$0xff] %vm1396, %v1318
        %1421 = vst.msk [vmem:[%s1405 + $0x78] sm:$0xff] %vm1396, %v1321
        %1430 = vrot.lane.b32.xlu0 %v1230, 96
        %v1431 = vpop.permute.xlu0 %1430
        %1432 = vrot.lane.b32.xlu0 %v1233, 96
        %v1433 = vpop.permute.xlu0 %1432
        %1434 = vrot.lane.b32.xlu0 %v1238, 96
        %v1435 = vpop.permute.xlu0 %1434
        %1436 = vrot.lane.b32.xlu0 %v1241, 96
        %v1437 = vpop.permute.xlu0 %1436
        %1438 = vrot.lane.b32.xlu0 %v1246, 96
        %v1439 = vpop.permute.xlu0 %1438
        %1440 = vrot.lane.b32.xlu0 %v1249, 96
        %v1441 = vpop.permute.xlu0 %1440
        %1442 = vrot.lane.b32.xlu0 %v1254, 96
        %v1443 = vpop.permute.xlu0 %1442
        %1444 = vrot.lane.b32.xlu0 %v1257, 96
        %v1445 = vpop.permute.xlu0 %1444
        %v1454 = vadd.f32 %v1326, %v1431
        %v1455 = vadd.f32 %v1329, %v1433
        %v1456 = vadd.f32 %v1334, %v1435
        %v1457 = vadd.f32 %v1337, %v1437
        %v1458 = vadd.f32 %v1342, %v1439
        %v1459 = vadd.f32 %v1345, %v1441
        %v1460 = vadd.f32 %v1350, %v1443
        %v1461 = vadd.f32 %v1353, %v1445
        %s1462 = scalar_lea.vmem [#allocation2], 192
        %1463 = vst.msk [vmem:[%s1462] sm:$0xff] %vm1396, %v1454
        %1464 = vst.msk [vmem:[%s1462 + $0x8] sm:$0xff] %vm1396, %v1455
        %1465 = vst.msk [vmem:[%s1462 + $0x10] sm:$0xff] %vm1396, %v1456
        %1466 = vst.msk [vmem:[%s1462 + $0x18] sm:$0xff] %vm1396, %v1457
        %1467 = vst.msk [vmem:[%s1462 + $0x20] sm:$0xff] %vm1396, %v1458
        %1468 = vst.msk [vmem:[%s1462 + $0x28] sm:$0xff] %vm1396, %v1459
        %1469 = vst.msk [vmem:[%s1462 + $0x30] sm:$0xff] %vm1396, %v1460
        %1470 = vst.msk [vmem:[%s1462 + $0x38] sm:$0xff] %vm1396, %v1461
        %v1471 = vld [vmem:[%s419] sm:$0xff]
        %v1473 = vunpack.c.l.b16 %v1471
        %v1474 = vunpack.c.h.b16 %v1471
        %v1475 = vpack.c.b16 %v1473, %v1473
        %v1476 = vpack.c.b16 %v1474, %v1474
        %1477 = vrot.lane.b32.xlu0 %v1475, 32
        %v1478 = vpop.permute.xlu0 %1477
        %1479 = vrot.lane.b32.xlu0 %v1476, 32
        %v1480 = vpop.permute.xlu0 %1479
        %vm1481 = vcmask 261120
        %v1482 = vsel %vm1481, %v1478, %v1480
        %v1484 = vsel %vm611, %v1482, 0
        %1486 = vmatprep.subr.bf16.mxu0 0
        %1487 = vmatpush1.bf16.msra.mxu0 %v1484
        %1488 = vmatprep.subr.bf16.mxu0 0
        %1489 = vmatpush1.bf16.msra.mxu0 0
        %1490 = vmatprep.subr.bf16.mxu0 0
        %1491 = vmatpush1.bf16.msra.mxu0 0
        %1492 = vmatprep.subr.bf16.mxu0 0
        %1493 = vmatpush1.bf16.msra.mxu0 0
        %1494 = vmatprep.subr.bf16.mxu0 0
        %1495 = vmatpush1.bf16.msra.mxu0 0
        %1496 = vmatprep.subr.bf16.mxu0 0
        %1497 = vmatpush1.bf16.msra.mxu0 0
        %1498 = vmatprep.subr.bf16.mxu0 0
        %1499 = vmatpush1.bf16.msra.mxu0 0
        %1500 = vmatprep.subr.bf16.mxu0 0
        %1501 = vmatpush1.bf16.msra.mxu0 0
        %1502 = vmatprep.subr.bf16.mxu0 0
        %1503 = vmatpush1.bf16.msra.mxu0 0
        %1504 = vmatprep.subr.bf16.mxu0 0
        %1505 = vmatpush1.bf16.msra.mxu0 0
        %1506 = vmatprep.subr.bf16.mxu0 0
        %1507 = vmatpush1.bf16.msra.mxu0 0
        %1508 = vmatprep.subr.bf16.mxu0 0
        %1509 = vmatpush1.bf16.msra.mxu0 0
        %1510 = vmatprep.subr.bf16.mxu0 0
        %1511 = vmatpush1.bf16.msra.mxu0 0
        %1512 = vmatprep.subr.bf16.mxu0 0
        %1513 = vmatpush1.bf16.msra.mxu0 0
        %1514 = vmatprep.subr.bf16.mxu0 0
        %1515 = vmatpush1.bf16.msra.mxu0 0
        %1516 = vmatprep.subr.bf16.mxu0 0
        %1517 = vmatpush1.bf16.msra.mxu0 0
        %1518 = vmatprep.mubr.bf16.mxu0 0
        %1519 = vmatmul.mubr.bf16.gmra.mrb[0].mxu0 %v707
        %v1520 = vpop.f32.mrb[0].mxu0
        %v1521 = vadd.f32 0.0, %v1520
        %v1522 = vpop.f32.mrb[0].mxu0
        %v1523 = vpop.f32.mrb[0].mxu0
        %v1524 = vpop.f32.mrb[0].mxu0
        %1525 = vmatprep.mubr.bf16.mxu0 0
        %1526 = vmatmul.mubr.bf16.gmra.mrb[0].mxu0 %v710
        %v1527 = vpop.f32.mrb[0].mxu0
        %v1528 = vadd.f32 0.0, %v1527
        %v1529 = vpop.f32.mrb[0].mxu0
        %v1530 = vpop.f32.mrb[0].mxu0
        %v1531 = vpop.f32.mrb[0].mxu0
        %1532 = vmatprep.mubr.bf16.mxu0 0
        %1533 = vmatmul.mubr.bf16.gmra.mrb[0].mxu0 %v713
        %v1534 = vpop.f32.mrb[0].mxu0
        %v1535 = vadd.f32 0.0, %v1534
        %v1536 = vpop.f32.mrb[0].mxu0
        %v1537 = vpop.f32.mrb[0].mxu0
        %v1538 = vpop.f32.mrb[0].mxu0
        %1539 = vmatprep.mubr.bf16.mxu0 0
        %1540 = vmatmul.mubr.bf16.gmra.mrb[0].mxu0 %v716
        %v1541 = vpop.f32.mrb[0].mxu0
        %v1542 = vadd.f32 0.0, %v1541
        %v1543 = vpop.f32.mrb[0].mxu0
        %v1544 = vpop.f32.mrb[0].mxu0
        %v1545 = vpop.f32.mrb[0].mxu0
        %1546 = vmatprep.mubr.bf16.mxu0 0
        %1547 = vmatmul.mubr.bf16.gmra.mrb[0].mxu0 %v719
        %v1548 = vpop.f32.mrb[0].mxu0
        %v1549 = vadd.f32 0.0, %v1548
        %v1550 = vpop.f32.mrb[0].mxu0
        %v1551 = vpop.f32.mrb[0].mxu0
        %v1552 = vpop.f32.mrb[0].mxu0
        %1553 = vmatprep.mubr.bf16.mxu0 0
        %1554 = vmatmul.mubr.bf16.gmra.mrb[0].mxu0 %v722
        %v1555 = vpop.f32.mrb[0].mxu0
        %v1556 = vadd.f32 0.0, %v1555
        %v1557 = vpop.f32.mrb[0].mxu0
        %v1558 = vpop.f32.mrb[0].mxu0
        %v1559 = vpop.f32.mrb[0].mxu0
        %1560 = vmatprep.mubr.bf16.mxu0 0
        %1561 = vmatmul.mubr.bf16.gmra.mrb[0].mxu0 %v725
        %v1562 = vpop.f32.mrb[0].mxu0
        %v1563 = vadd.f32 0.0, %v1562
        %v1564 = vpop.f32.mrb[0].mxu0
        %v1565 = vpop.f32.mrb[0].mxu0
        %v1566 = vpop.f32.mrb[0].mxu0
        %1567 = vmatprep.mubr.bf16.mxu0 0
        %1568 = vmatmul.mubr.bf16.gmra.mrb[0].mxu0 %v728
        %v1569 = vpop.f32.mrb[0].mxu0
        %v1570 = vadd.f32 0.0, %v1569
        %v1571 = vpop.f32.mrb[0].mxu0
        %v1572 = vpop.f32.mrb[0].mxu0
        %v1573 = vpop.f32.mrb[0].mxu0
        %1574 = vmatprep.mubr.bf16.mxu0 0
        %1575 = vmatmul.mubr.bf16.gmra.mrb[0].mxu0 %v731
        %v1576 = vpop.f32.mrb[0].mxu0
        %v1577 = vadd.f32 0.0, %v1576
        %v1578 = vpop.f32.mrb[0].mxu0
        %v1579 = vpop.f32.mrb[0].mxu0
        %v1580 = vpop.f32.mrb[0].mxu0
        %1581 = vmatprep.mubr.bf16.mxu0 0
        %1582 = vmatmul.mubr.bf16.gmra.mrb[0].mxu0 %v734
        %v1583 = vpop.f32.mrb[0].mxu0
        %v1584 = vadd.f32 0.0, %v1583
        %v1585 = vpop.f32.mrb[0].mxu0
        %v1586 = vpop.f32.mrb[0].mxu0
        %v1587 = vpop.f32.mrb[0].mxu0
        %1588 = vmatprep.mubr.bf16.mxu0 0
        %1589 = vmatmul.mubr.bf16.gmra.mrb[0].mxu0 %v737
        %v1590 = vpop.f32.mrb[0].mxu0
        %v1591 = vadd.f32 0.0, %v1590
        %v1592 = vpop.f32.mrb[0].mxu0
        %v1593 = vpop.f32.mrb[0].mxu0
        %v1594 = vpop.f32.mrb[0].mxu0
        %1595 = vmatprep.mubr.bf16.mxu0 0
        %1596 = vmatmul.mubr.bf16.gmra.mrb[0].mxu0 %v740
        %v1597 = vpop.f32.mrb[0].mxu0
        %v1598 = vadd.f32 0.0, %v1597
        %v1599 = vpop.f32.mrb[0].mxu0
        %v1600 = vpop.f32.mrb[0].mxu0
        %v1601 = vpop.f32.mrb[0].mxu0
        %1602 = vmatprep.mubr.bf16.mxu0 0
        %1603 = vmatmul.mubr.bf16.gmra.mrb[0].mxu0 %v743
        %v1604 = vpop.f32.mrb[0].mxu0
        %v1605 = vadd.f32 0.0, %v1604
        %v1606 = vpop.f32.mrb[0].mxu0
        %v1607 = vpop.f32.mrb[0].mxu0
        %v1608 = vpop.f32.mrb[0].mxu0
        %1609 = vmatprep.mubr.bf16.mxu0 0
        %1610 = vmatmul.mubr.bf16.gmra.mrb[0].mxu0 %v746
        %v1611 = vpop.f32.mrb[0].mxu0
        %v1612 = vadd.f32 0.0, %v1611
        %v1613 = vpop.f32.mrb[0].mxu0
        %v1614 = vpop.f32.mrb[0].mxu0
        %v1615 = vpop.f32.mrb[0].mxu0
        %1616 = vmatprep.mubr.bf16.mxu0 0
        %1617 = vmatmul.mubr.bf16.gmra.mrb[0].mxu0 %v749
        %v1618 = vpop.f32.mrb[0].mxu0
        %v1619 = vadd.f32 0.0, %v1618
        %v1620 = vpop.f32.mrb[0].mxu0
        %v1621 = vpop.f32.mrb[0].mxu0
        %v1622 = vpop.f32.mrb[0].mxu0
        %1623 = vmatprep.mubr.bf16.mxu0 0
        %1624 = vmatmul.mubr.bf16.gmra.mrb[0].mxu0 %v752
        %v1625 = vpop.f32.mrb[0].mxu0
        %v1626 = vadd.f32 0.0, %v1625
        %v1627 = vpop.f32.mrb[0].mxu0
        %v1628 = vpop.f32.mrb[0].mxu0
        %v1629 = vpop.f32.mrb[0].mxu0
        %1630 = vdwg.mxu0
        %1635 = vrot.lane.b32.xlu0 %v1605, 64
        %v1636 = vpop.permute.xlu0 %1635
        %1637 = vrot.lane.b32.xlu0 %v1612, 64
        %v1638 = vpop.permute.xlu0 %1637
        %1639 = vrot.lane.b32.xlu0 %v1619, 64
        %v1640 = vpop.permute.xlu0 %1639
        %1641 = vrot.lane.b32.xlu0 %v1626, 64
        %v1642 = vpop.permute.xlu0 %1641
        %v1647 = vadd.f32 %v1521, %v1636
        %v1648 = vadd.f32 %v1528, %v1638
        %v1649 = vadd.f32 %v1535, %v1640
        %v1650 = vadd.f32 %v1542, %v1642
        %v1651 = vld [vmem:[#allocation2 + $0xc] sm:$0xf]
        %v1652 = vld [vmem:[#allocation2 + $0x1c] sm:$0xf]
        %v1653 = vld [vmem:[#allocation2 + $0x2c] sm:$0xf]
        %v1654 = vld [vmem:[#allocation2 + $0x3c] sm:$0xf]
        %v1655 = vadd.f32 %v1651, %v1647
        %v1656 = vadd.f32 %v1652, %v1648
        %v1657 = vadd.f32 %v1653, %v1649
        %v1658 = vadd.f32 %v1654, %v1650
        %1659 = vst.msk [vmem:[#allocation2 + $0xc] sm:$0xf] %vm672, %v1655
        %1660 = vst.msk [vmem:[#allocation2 + $0x1c] sm:$0xf] %vm672, %v1656
        %1661 = vst.msk [vmem:[#allocation2 + $0x2c] sm:$0xf] %vm672, %v1657
        %1662 = vst.msk [vmem:[#allocation2 + $0x3c] sm:$0xf] %vm672, %v1658
        %v1663 = vld [vmem:[%s1405 + $0xc] sm:$0xf]
        %v1664 = vld [vmem:[%s1405 + $0x1c] sm:$0xf]
        %v1665 = vld [vmem:[%s1405 + $0x2c] sm:$0xf]
        %v1666 = vld [vmem:[%s1405 + $0x3c] sm:$0xf]
        %v1667 = vld [vmem:[%s1405 + $0x4c] sm:$0xf]
        %v1668 = vld [vmem:[%s1405 + $0x5c] sm:$0xf]
        %v1669 = vld [vmem:[%s1405 + $0x6c] sm:$0xf]
        %v1670 = vld [vmem:[%s1405 + $0x7c] sm:$0xf]
        %v1671 = vadd.f32 %v1663, %v1549
        %v1672 = vadd.f32 %v1664, %v1556
        %v1673 = vadd.f32 %v1665, %v1563
        %v1674 = vadd.f32 %v1666, %v1570
        %v1675 = vadd.f32 %v1667, %v1577
        %v1676 = vadd.f32 %v1668, %v1584
        %v1677 = vadd.f32 %v1669, %v1591
        %v1678 = vadd.f32 %v1670, %v1598
        %1679 = vst.msk [vmem:[%s1405 + $0xc] sm:$0xf] %vm672, %v1671
        %1680 = vst.msk [vmem:[%s1405 + $0x1c] sm:$0xf] %vm672, %v1672
        %1681 = vst.msk [vmem:[%s1405 + $0x2c] sm:$0xf] %vm672, %v1673
        %1682 = vst.msk [vmem:[%s1405 + $0x3c] sm:$0xf] %vm672, %v1674
        %1683 = vst.msk [vmem:[%s1405 + $0x4c] sm:$0xf] %vm672, %v1675
        %1684 = vst.msk [vmem:[%s1405 + $0x5c] sm:$0xf] %vm672, %v1676
        %1685 = vst.msk [vmem:[%s1405 + $0x6c] sm:$0xf] %vm672, %v1677
        %1686 = vst.msk [vmem:[%s1405 + $0x7c] sm:$0xf] %vm672, %v1678
        %1691 = vrot.lane.b32.xlu0 %v1521, 96
        %v1692 = vpop.permute.xlu0 %1691
        %1693 = vrot.lane.b32.xlu0 %v1528, 96
        %v1694 = vpop.permute.xlu0 %1693
        %1695 = vrot.lane.b32.xlu0 %v1535, 96
        %v1696 = vpop.permute.xlu0 %1695
        %1697 = vrot.lane.b32.xlu0 %v1542, 96
        %v1698 = vpop.permute.xlu0 %1697
        %v1703 = vadd.f32 %v1605, %v1692
        %v1704 = vadd.f32 %v1612, %v1694
        %v1705 = vadd.f32 %v1619, %v1696
        %v1706 = vadd.f32 %v1626, %v1698
        %v1707 = vld [vmem:[%s1462 + $0xc] sm:$0xf]
        %v1708 = vld [vmem:[%s1462 + $0x1c] sm:$0xf]
        %v1709 = vld [vmem:[%s1462 + $0x2c] sm:$0xf]
        %v1710 = vld [vmem:[%s1462 + $0x3c] sm:$0xf]
        %v1711 = vadd.f32 %v1707, %v1703
        %v1712 = vadd.f32 %v1708, %v1704
        %v1713 = vadd.f32 %v1709, %v1705
        %v1714 = vadd.f32 %v1710, %v1706
        %1715 = vst.msk [vmem:[%s1462 + $0xc] sm:$0xf] %vm672, %v1711
        %1716 = vst.msk [vmem:[%s1462 + $0x1c] sm:$0xf] %vm672, %v1712
        %1717 = vst.msk [vmem:[%s1462 + $0x2c] sm:$0xf] %vm672, %v1713
        %1718 = vst.msk [vmem:[%s1462 + $0x3c] sm:$0xf] %vm672, %v1714
        %v1719 = vld [vmem:[%s419 + $0x4] sm:$0xff]
        %v1721 = vunpack.c.l.b16 %v1719
        %v1722 = vunpack.c.h.b16 %v1719
        %v1723 = vpack.c.b16 %v1721, %v1721
        %v1724 = vpack.c.b16 %v1722, %v1722
        %1725 = vrot.lane.b32.xlu0 %v1723, 64
        %v1726 = vpop.permute.xlu0 %1725
        %1727 = vrot.lane.b32.xlu0 %v1724, 64
        %v1728 = vpop.permute.xlu0 %1727
        %vm1729 = vcmask 523264
        %v1730 = vsel %vm1729, %v1726, %v1728
        %v1732 = vsel %vm611, %v1730, 0
        %1734 = vmatprep.subr.bf16.mxu0 0
        %1735 = vmatpush1.bf16.msra.mxu0 %v1732
        %1736 = vmatprep.subr.bf16.mxu0 0
        %1737 = vmatpush1.bf16.msra.mxu0 0
        %1738 = vmatprep.subr.bf16.mxu0 0
        %1739 = vmatpush1.bf16.msra.mxu0 0
        %1740 = vmatprep.subr.bf16.mxu0 0
        %1741 = vmatpush1.bf16.msra.mxu0 0
        %1742 = vmatprep.subr.bf16.mxu0 0
        %1743 = vmatpush1.bf16.msra.mxu0 0
        %1744 = vmatprep.subr.bf16.mxu0 0
        %1745 = vmatpush1.bf16.msra.mxu0 0
        %1746 = vmatprep.subr.bf16.mxu0 0
        %1747 = vmatpush1.bf16.msra.mxu0 0
        %1748 = vmatprep.subr.bf16.mxu0 0
        %1749 = vmatpush1.bf16.msra.mxu0 0
        %1750 = vmatprep.subr.bf16.mxu0 0
        %1751 = vmatpush1.bf16.msra.mxu0 0
        %1752 = vmatprep.subr.bf16.mxu0 0
        %1753 = vmatpush1.bf16.msra.mxu0 0
        %1754 = vmatprep.subr.bf16.mxu0 0
        %1755 = vmatpush1.bf16.msra.mxu0 0
        %1756 = vmatprep.subr.bf16.mxu0 0
        %1757 = vmatpush1.bf16.msra.mxu0 0
        %1758 = vmatprep.subr.bf16.mxu0 0
        %1759 = vmatpush1.bf16.msra.mxu0 0
        %1760 = vmatprep.subr.bf16.mxu0 0
        %1761 = vmatpush1.bf16.msra.mxu0 0
        %1762 = vmatprep.subr.bf16.mxu0 0
        %1763 = vmatpush1.bf16.msra.mxu0 0
        %1764 = vmatprep.subr.bf16.mxu0 0
        %1765 = vmatpush1.bf16.msra.mxu0 0
        %1766 = vmatprep.mubr.bf16.mxu0 0
        %1767 = vmatmul.mubr.bf16.gmra.mrb[0].mxu0 %v707
        %v1768 = vpop.f32.mrb[0].mxu0
        %v1769 = vpop.f32.mrb[0].mxu0
        %v1770 = vpop.f32.mrb[0].mxu0
        %v1771 = vadd.f32 0.0, %v1770
        %v1772 = vpop.f32.mrb[0].mxu0
        %1773 = vmatprep.mubr.bf16.mxu0 0
        %1774 = vmatmul.mubr.bf16.gmra.mrb[0].mxu0 %v710
        %v1775 = vpop.f32.mrb[0].mxu0
        %v1776 = vpop.f32.mrb[0].mxu0
        %v1777 = vpop.f32.mrb[0].mxu0
        %v1778 = vadd.f32 0.0, %v1777
        %v1779 = vpop.f32.mrb[0].mxu0
        %1780 = vmatprep.mubr.bf16.mxu0 0
        %1781 = vmatmul.mubr.bf16.gmra.mrb[0].mxu0 %v713
        %v1782 = vpop.f32.mrb[0].mxu0
        %v1783 = vpop.f32.mrb[0].mxu0
        %v1784 = vpop.f32.mrb[0].mxu0
        %v1785 = vadd.f32 0.0, %v1784
        %v1786 = vpop.f32.mrb[0].mxu0
        %1787 = vmatprep.mubr.bf16.mxu0 0
        %1788 = vmatmul.mubr.bf16.gmra.mrb[0].mxu0 %v716
        %v1789 = vpop.f32.mrb[0].mxu0
        %v1790 = vpop.f32.mrb[0].mxu0
        %v1791 = vpop.f32.mrb[0].mxu0
        %v1792 = vadd.f32 0.0, %v1791
        %v1793 = vpop.f32.mrb[0].mxu0
        %1794 = vmatprep.mubr.bf16.mxu0 0
        %1795 = vmatmul.mubr.bf16.gmra.mrb[0].mxu0 %v719
        %v1796 = vpop.f32.mrb[0].mxu0
        %v1797 = vpop.f32.mrb[0].mxu0
        %v1798 = vpop.f32.mrb[0].mxu0
        %v1799 = vadd.f32 0.0, %v1798
        %v1800 = vpop.f32.mrb[0].mxu0
        %1801 = vmatprep.mubr.bf16.mxu0 0
        %1802 = vmatmul.mubr.bf16.gmra.mrb[0].mxu0 %v722
        %v1803 = vpop.f32.mrb[0].mxu0
        %v1804 = vpop.f32.mrb[0].mxu0
        %v1805 = vpop.f32.mrb[0].mxu0
        %v1806 = vadd.f32 0.0, %v1805
        %v1807 = vpop.f32.mrb[0].mxu0
        %1808 = vmatprep.mubr.bf16.mxu0 0
        %1809 = vmatmul.mubr.bf16.gmra.mrb[0].mxu0 %v725
        %v1810 = vpop.f32.mrb[0].mxu0
        %v1811 = vpop.f32.mrb[0].mxu0
        %v1812 = vpop.f32.mrb[0].mxu0
        %v1813 = vadd.f32 0.0, %v1812
        %v1814 = vpop.f32.mrb[0].mxu0
        %1815 = vmatprep.mubr.bf16.mxu0 0
        %1816 = vmatmul.mubr.bf16.gmra.mrb[0].mxu0 %v728
        %v1817 = vpop.f32.mrb[0].mxu0
        %v1818 = vpop.f32.mrb[0].mxu0
        %v1819 = vpop.f32.mrb[0].mxu0
        %v1820 = vadd.f32 0.0, %v1819
        %v1821 = vpop.f32.mrb[0].mxu0
        %1822 = vmatprep.mubr.bf16.mxu0 0
        %1823 = vmatmul.mubr.bf16.gmra.mrb[0].mxu0 %v731
        %v1824 = vpop.f32.mrb[0].mxu0
        %v1825 = vpop.f32.mrb[0].mxu0
        %v1826 = vpop.f32.mrb[0].mxu0
        %v1827 = vadd.f32 0.0, %v1826
        %v1828 = vpop.f32.mrb[0].mxu0
        %1829 = vmatprep.mubr.bf16.mxu0 0
        %1830 = vmatmul.mubr.bf16.gmra.mrb[0].mxu0 %v734
        %v1831 = vpop.f32.mrb[0].mxu0
        %v1832 = vpop.f32.mrb[0].mxu0
        %v1833 = vpop.f32.mrb[0].mxu0
        %v1834 = vadd.f32 0.0, %v1833
        %v1835 = vpop.f32.mrb[0].mxu0
        %1836 = vmatprep.mubr.bf16.mxu0 0
        %1837 = vmatmul.mubr.bf16.gmra.mrb[0].mxu0 %v737
        %v1838 = vpop.f32.mrb[0].mxu0
        %v1839 = vpop.f32.mrb[0].mxu0
        %v1840 = vpop.f32.mrb[0].mxu0
        %v1841 = vadd.f32 0.0, %v1840
        %v1842 = vpop.f32.mrb[0].mxu0
        %1843 = vmatprep.mubr.bf16.mxu0 0
        %1844 = vmatmul.mubr.bf16.gmra.mrb[0].mxu0 %v740
        %v1845 = vpop.f32.mrb[0].mxu0
        %v1846 = vpop.f32.mrb[0].mxu0
        %v1847 = vpop.f32.mrb[0].mxu0
        %v1848 = vadd.f32 0.0, %v1847
        %v1849 = vpop.f32.mrb[0].mxu0
        %1850 = vmatprep.mubr.bf16.mxu0 0
        %1851 = vmatmul.mubr.bf16.gmra.mrb[0].mxu0 %v743
        %v1852 = vpop.f32.mrb[0].mxu0
        %v1853 = vpop.f32.mrb[0].mxu0
        %v1854 = vpop.f32.mrb[0].mxu0
        %v1855 = vadd.f32 0.0, %v1854
        %v1856 = vpop.f32.mrb[0].mxu0
        %1857 = vmatprep.mubr.bf16.mxu0 0
        %1858 = vmatmul.mubr.bf16.gmra.mrb[0].mxu0 %v746
        %v1859 = vpop.f32.mrb[0].mxu0
        %v1860 = vpop.f32.mrb[0].mxu0
        %v1861 = vpop.f32.mrb[0].mxu0
        %v1862 = vadd.f32 0.0, %v1861
        %v1863 = vpop.f32.mrb[0].mxu0
        %1864 = vmatprep.mubr.bf16.mxu0 0
        %1865 = vmatmul.mubr.bf16.gmra.mrb[0].mxu0 %v749
        %v1866 = vpop.f32.mrb[0].mxu0
        %v1867 = vpop.f32.mrb[0].mxu0
        %v1868 = vpop.f32.mrb[0].mxu0
        %v1869 = vadd.f32 0.0, %v1868
        %v1870 = vpop.f32.mrb[0].mxu0
        %1871 = vmatprep.mubr.bf16.mxu0 0
        %1872 = vmatmul.mubr.bf16.gmra.mrb[0].mxu0 %v752
        %v1873 = vpop.f32.mrb[0].mxu0
        %v1874 = vpop.f32.mrb[0].mxu0
        %v1875 = vpop.f32.mrb[0].mxu0
        %v1876 = vadd.f32 0.0, %v1875
        %v1877 = vpop.f32.mrb[0].mxu0
        %1878 = vdwg.mxu0
        %1883 = vrot.lane.b32.xlu0 %v1855, 64
        %v1884 = vpop.permute.xlu0 %1883
        %1885 = vrot.lane.b32.xlu0 %v1862, 64
        %v1886 = vpop.permute.xlu0 %1885
        %1887 = vrot.lane.b32.xlu0 %v1869, 64
        %v1888 = vpop.permute.xlu0 %1887
        %1889 = vrot.lane.b32.xlu0 %v1876, 64
        %v1890 = vpop.permute.xlu0 %1889
        %v1895 = vadd.f32 %v1771, %v1884
        %v1896 = vadd.f32 %v1778, %v1886
        %v1897 = vadd.f32 %v1785, %v1888
        %v1898 = vadd.f32 %v1792, %v1890
        %v1899 = vld [vmem:[#allocation2] sm:$0xf]
        %v1900 = vld [vmem:[#allocation2 + $0x10] sm:$0xf]
        %v1901 = vld [vmem:[#allocation2 + $0x20] sm:$0xf]
        %v1902 = vld [vmem:[#allocation2 + $0x30] sm:$0xf]
        %v1907 = vrot.slane %v1895, 4
        %v1908 = vrot.slane %v1896, 4
        %v1909 = vrot.slane %v1897, 4
        %v1910 = vrot.slane %v1898, 4
        %v1915 = vadd.f32 %v1899, %v1907
        %v1916 = vadd.f32 %v1900, %v1908
        %v1917 = vadd.f32 %v1901, %v1909
        %v1918 = vadd.f32 %v1902, %v1910
        %1919 = vst.msk [vmem:[#allocation2] sm:$0xf] %vm672, %v1915
        %1920 = vst.msk [vmem:[#allocation2 + $0x10] sm:$0xf] %vm672, %v1916
        %1921 = vst.msk [vmem:[#allocation2 + $0x20] sm:$0xf] %vm672, %v1917
        %1922 = vst.msk [vmem:[#allocation2 + $0x30] sm:$0xf] %vm672, %v1918
        %v1923 = vld [vmem:[%s1405] sm:$0xf]
        %v1924 = vld [vmem:[%s1405 + $0x10] sm:$0xf]
        %v1925 = vld [vmem:[%s1405 + $0x20] sm:$0xf]
        %v1926 = vld [vmem:[%s1405 + $0x30] sm:$0xf]
        %v1927 = vld [vmem:[%s1405 + $0x40] sm:$0xf]
        %v1928 = vld [vmem:[%s1405 + $0x50] sm:$0xf]
        %v1929 = vld [vmem:[%s1405 + $0x60] sm:$0xf]
        %v1930 = vld [vmem:[%s1405 + $0x70] sm:$0xf]
        %v1939 = vrot.slane %v1799, 4
        %v1940 = vrot.slane %v1806, 4
        %v1941 = vrot.slane %v1813, 4
        %v1942 = vrot.slane %v1820, 4
        %v1943 = vrot.slane %v1827, 4
        %v1944 = vrot.slane %v1834, 4
        %v1945 = vrot.slane %v1841, 4
        %v1946 = vrot.slane %v1848, 4
        %v1955 = vadd.f32 %v1923, %v1939
        %v1956 = vadd.f32 %v1924, %v1940
        %v1957 = vadd.f32 %v1925, %v1941
        %v1958 = vadd.f32 %v1926, %v1942
        %v1959 = vadd.f32 %v1927, %v1943
        %v1960 = vadd.f32 %v1928, %v1944
        %v1961 = vadd.f32 %v1929, %v1945
        %v1962 = vadd.f32 %v1930, %v1946
        %1963 = vst.msk [vmem:[%s1405] sm:$0xf] %vm672, %v1955
        %1964 = vst.msk [vmem:[%s1405 + $0x10] sm:$0xf] %vm672, %v1956
        %1965 = vst.msk [vmem:[%s1405 + $0x20] sm:$0xf] %vm672, %v1957
        %1966 = vst.msk [vmem:[%s1405 + $0x30] sm:$0xf] %vm672, %v1958
        %1967 = vst.msk [vmem:[%s1405 + $0x40] sm:$0xf] %vm672, %v1959
        %1968 = vst.msk [vmem:[%s1405 + $0x50] sm:$0xf] %vm672, %v1960
        %1969 = vst.msk [vmem:[%s1405 + $0x60] sm:$0xf] %vm672, %v1961
        %1970 = vst.msk [vmem:[%s1405 + $0x70] sm:$0xf] %vm672, %v1962
        %1975 = vrot.lane.b32.xlu0 %v1771, 96
        %v1976 = vpop.permute.xlu0 %1975
        %1977 = vrot.lane.b32.xlu0 %v1778, 96
        %v1978 = vpop.permute.xlu0 %1977
        %1979 = vrot.lane.b32.xlu0 %v1785, 96
        %v1980 = vpop.permute.xlu0 %1979
        %1981 = vrot.lane.b32.xlu0 %v1792, 96
        %v1982 = vpop.permute.xlu0 %1981
        %v1987 = vadd.f32 %v1855, %v1976
        %v1988 = vadd.f32 %v1862, %v1978
        %v1989 = vadd.f32 %v1869, %v1980
        %v1990 = vadd.f32 %v1876, %v1982
        %v1991 = vld [vmem:[%s1462] sm:$0xf]
        %v1992 = vld [vmem:[%s1462 + $0x10] sm:$0xf]
        %v1993 = vld [vmem:[%s1462 + $0x20] sm:$0xf]
        %v1994 = vld [vmem:[%s1462 + $0x30] sm:$0xf]
        %v1999 = vrot.slane %v1987, 4
        %v2000 = vrot.slane %v1988, 4
        %v2001 = vrot.slane %v1989, 4
        %v2002 = vrot.slane %v1990, 4
        %v2007 = vadd.f32 %v1991, %v1999
        %v2008 = vadd.f32 %v1992, %v2000
        %v2009 = vadd.f32 %v1993, %v2001
        %v2010 = vadd.f32 %v1994, %v2002
        %2011 = vst.msk [vmem:[%s1462] sm:$0xf] %vm672, %v2007
        %2012 = vst.msk [vmem:[%s1462 + $0x10] sm:$0xf] %vm672, %v2008
        %2013 = vst.msk [vmem:[%s1462 + $0x20] sm:$0xf] %vm672, %v2009
        %2014 = vst.msk [vmem:[%s1462 + $0x30] sm:$0xf] %vm672, %v2010
        %v2015 = vld [vmem:[#allocation2] sm:$0xff]
        %v2016 = vld [vmem:[#allocation2 + $0x8] sm:$0xff]
        %v2017 = vld [vmem:[#allocation2 + $0x10] sm:$0xff]
        %v2018 = vld [vmem:[#allocation2 + $0x18] sm:$0xff]
        %v2019 = vld [vmem:[#allocation2 + $0x20] sm:$0xff]
        %v2020 = vld [vmem:[#allocation2 + $0x28] sm:$0xff]
        %v2021 = vld [vmem:[#allocation2 + $0x30] sm:$0xff]
        %v2022 = vld [vmem:[#allocation2 + $0x38] sm:$0xff]
        %v2023 = vld [vmem:[#allocation2 + $0x40] sm:$0xff]
        %v2024 = vld [vmem:[#allocation2 + $0x48] sm:$0xff]
        %v2025 = vld [vmem:[#allocation2 + $0x50] sm:$0xff]
        %v2026 = vld [vmem:[#allocation2 + $0x58] sm:$0xff]
        %v2027 = vld [vmem:[#allocation2 + $0x60] sm:$0xff]
        %v2028 = vld [vmem:[#allocation2 + $0x68] sm:$0xff]
        %v2029 = vld [vmem:[#allocation2 + $0x70] sm:$0xff]
        %v2030 = vld [vmem:[#allocation2 + $0x78] sm:$0xff]
        %v2031 = vld [vmem:[#allocation2 + $0x80] sm:$0xff]
        %v2032 = vld [vmem:[#allocation2 + $0x88] sm:$0xff]
        %v2033 = vld [vmem:[#allocation2 + $0x90] sm:$0xff]
        %v2034 = vld [vmem:[#allocation2 + $0x98] sm:$0xff]
        %v2035 = vld [vmem:[#allocation2 + $0xa0] sm:$0xff]
        %v2036 = vld [vmem:[#allocation2 + $0xa8] sm:$0xff]
        %v2037 = vld [vmem:[#allocation2 + $0xb0] sm:$0xff]
        %v2038 = vld [vmem:[#allocation2 + $0xb8] sm:$0xff]
        %v2039 = vld [vmem:[#allocation2 + $0xc0] sm:$0xff]
        %v2040 = vld [vmem:[#allocation2 + $0xc8] sm:$0xff]
        %v2041 = vld [vmem:[#allocation2 + $0xd0] sm:$0xff]
        %v2042 = vld [vmem:[#allocation2 + $0xd8] sm:$0xff]
        %v2043 = vld [vmem:[#allocation2 + $0xe0] sm:$0xff]
        %v2044 = vld [vmem:[#allocation2 + $0xe8] sm:$0xff]
        %v2045 = vld [vmem:[#allocation2 + $0xf0] sm:$0xff]
        %v2046 = vld [vmem:[#allocation2 + $0xf8] sm:$0xff]
        %s2047 = scalar_lea.vmem %s430, 2
        %v2048 = vld [vmem:[%s2047] sm:$0x1]
        %v2050 = vlaneseq
        %v2051 = vshrl.u32 %v2050, 7
        %v2052 = vsub.s32 0, %v2051
        %v2053 = vrot.slane %v2048, %v2052
        %v2055 = vmul.f32 %v2015, %v2053
        %v2056 = vmul.f32 %v2016, %v2053
        %v2057 = vmul.f32 %v2017, %v2053
        %v2058 = vmul.f32 %v2018, %v2053
        %v2059 = vmul.f32 %v2019, %v2053
        %v2060 = vmul.f32 %v2020, %v2053
        %v2061 = vmul.f32 %v2021, %v2053
        %v2062 = vmul.f32 %v2022, %v2053
        %v2063 = vmul.f32 %v2023, %v2053
        %v2064 = vmul.f32 %v2024, %v2053
        %v2065 = vmul.f32 %v2025, %v2053
        %v2066 = vmul.f32 %v2026, %v2053
        %v2067 = vmul.f32 %v2027, %v2053
        %v2068 = vmul.f32 %v2028, %v2053
        %v2069 = vmul.f32 %v2029, %v2053
        %v2070 = vmul.f32 %v2030, %v2053
        %v2071 = vmul.f32 %v2031, %v2053
        %v2072 = vmul.f32 %v2032, %v2053
        %v2073 = vmul.f32 %v2033, %v2053
        %v2074 = vmul.f32 %v2034, %v2053
        %v2075 = vmul.f32 %v2035, %v2053
        %v2076 = vmul.f32 %v2036, %v2053
        %v2077 = vmul.f32 %v2037, %v2053
        %v2078 = vmul.f32 %v2038, %v2053
        %v2079 = vmul.f32 %v2039, %v2053
        %v2080 = vmul.f32 %v2040, %v2053
        %v2081 = vmul.f32 %v2041, %v2053
        %v2082 = vmul.f32 %v2042, %v2053
        %v2083 = vmul.f32 %v2043, %v2053
        %v2084 = vmul.f32 %v2044, %v2053
        %v2085 = vmul.f32 %v2045, %v2053
        %v2086 = vmul.f32 %v2046, %v2053
        %s2087 = scalar_lea.vmem %s433, 2
        %v2088 = vld [vmem:[%s2087] sm:$0x1]
        %v2090 = vlaneseq
        %v2091 = vshrl.u32 %v2090, 7
        %v2092 = vsub.s32 0, %v2091
        %v2093 = vrot.slane %v2088, %v2092
        %v2095 = vadd.f32 %v2055, %v2093
        %v2096 = vadd.f32 %v2056, %v2093
        %v2097 = vadd.f32 %v2057, %v2093
        %v2098 = vadd.f32 %v2058, %v2093
        %v2099 = vadd.f32 %v2059, %v2093
        %v2100 = vadd.f32 %v2060, %v2093
        %v2101 = vadd.f32 %v2061, %v2093
        %v2102 = vadd.f32 %v2062, %v2093
        %v2103 = vadd.f32 %v2063, %v2093
        %v2104 = vadd.f32 %v2064, %v2093
        %v2105 = vadd.f32 %v2065, %v2093
        %v2106 = vadd.f32 %v2066, %v2093
        %v2107 = vadd.f32 %v2067, %v2093
        %v2108 = vadd.f32 %v2068, %v2093
        %v2109 = vadd.f32 %v2069, %v2093
        %v2110 = vadd.f32 %v2070, %v2093
        %v2111 = vadd.f32 %v2071, %v2093
        %v2112 = vadd.f32 %v2072, %v2093
        %v2113 = vadd.f32 %v2073, %v2093
        %v2114 = vadd.f32 %v2074, %v2093
        %v2115 = vadd.f32 %v2075, %v2093
        %v2116 = vadd.f32 %v2076, %v2093
        %v2117 = vadd.f32 %v2077, %v2093
        %v2118 = vadd.f32 %v2078, %v2093
        %v2119 = vadd.f32 %v2079, %v2093
        %v2120 = vadd.f32 %v2080, %v2093
        %v2121 = vadd.f32 %v2081, %v2093
        %v2122 = vadd.f32 %v2082, %v2093
        %v2123 = vadd.f32 %v2083, %v2093
        %v2124 = vadd.f32 %v2084, %v2093
        %v2125 = vadd.f32 %v2085, %v2093
        %v2126 = vadd.f32 %v2086, %v2093
        %v2127 = vmax.f32 %v2095, 0.0
        %v2128 = vmax.f32 %v2096, 0.0
        %v2129 = vmax.f32 %v2097, 0.0
        %v2130 = vmax.f32 %v2098, 0.0
        %v2131 = vmax.f32 %v2099, 0.0
        %v2132 = vmax.f32 %v2100, 0.0
        %v2133 = vmax.f32 %v2101, 0.0
        %v2134 = vmax.f32 %v2102, 0.0
        %v2135 = vmax.f32 %v2103, 0.0
        %v2136 = vmax.f32 %v2104, 0.0
        %v2137 = vmax.f32 %v2105, 0.0
        %v2138 = vmax.f32 %v2106, 0.0
        %v2139 = vmax.f32 %v2107, 0.0
        %v2140 = vmax.f32 %v2108, 0.0
        %v2141 = vmax.f32 %v2109, 0.0
        %v2142 = vmax.f32 %v2110, 0.0
        %v2143 = vmax.f32 %v2111, 0.0
        %v2144 = vmax.f32 %v2112, 0.0
        %v2145 = vmax.f32 %v2113, 0.0
        %v2146 = vmax.f32 %v2114, 0.0
        %v2147 = vmax.f32 %v2115, 0.0
        %v2148 = vmax.f32 %v2116, 0.0
        %v2149 = vmax.f32 %v2117, 0.0
        %v2150 = vmax.f32 %v2118, 0.0
        %v2151 = vmax.f32 %v2119, 0.0
        %v2152 = vmax.f32 %v2120, 0.0
        %v2153 = vmax.f32 %v2121, 0.0
        %v2154 = vmax.f32 %v2122, 0.0
        %v2155 = vmax.f32 %v2123, 0.0
        %v2156 = vmax.f32 %v2124, 0.0
        %v2157 = vmax.f32 %v2125, 0.0
        %v2158 = vmax.f32 %v2126, 0.0
        %v2159 = vpack.c.bf16 %v2128, %v2127
        %v2160 = vpack.c.bf16 %v2130, %v2129
        %v2161 = vpack.c.bf16 %v2132, %v2131
        %v2162 = vpack.c.bf16 %v2134, %v2133
        %v2163 = vpack.c.bf16 %v2136, %v2135
        %v2164 = vpack.c.bf16 %v2138, %v2137
        %v2165 = vpack.c.bf16 %v2140, %v2139
        %v2166 = vpack.c.bf16 %v2142, %v2141
        %v2167 = vpack.c.bf16 %v2144, %v2143
        %v2168 = vpack.c.bf16 %v2146, %v2145
        %v2169 = vpack.c.bf16 %v2148, %v2147
        %v2170 = vpack.c.bf16 %v2150, %v2149
        %v2171 = vpack.c.bf16 %v2152, %v2151
        %v2172 = vpack.c.bf16 %v2154, %v2153
        %v2173 = vpack.c.bf16 %v2156, %v2155
        %v2174 = vpack.c.bf16 %v2158, %v2157
        %v2191 = vunpack.c.l.b16 %v2159
        %v2192 = vunpack.c.h.b16 %v2159
        %v2193 = vunpack.c.l.b16 %v2160
        %v2194 = vunpack.c.h.b16 %v2160
        %v2195 = vunpack.c.l.b16 %v2161
        %v2196 = vunpack.c.h.b16 %v2161
        %v2197 = vunpack.c.l.b16 %v2162
        %v2198 = vunpack.c.h.b16 %v2162
        %v2199 = vunpack.c.l.b16 %v2163
        %v2200 = vunpack.c.h.b16 %v2163
        %v2201 = vunpack.c.l.b16 %v2164
        %v2202 = vunpack.c.h.b16 %v2164
        %v2203 = vunpack.c.l.b16 %v2165
        %v2204 = vunpack.c.h.b16 %v2165
        %v2205 = vunpack.c.l.b16 %v2166
        %v2206 = vunpack.c.h.b16 %v2166
        %v2207 = vunpack.c.l.b16 %v2167
        %v2208 = vunpack.c.h.b16 %v2167
        %v2209 = vunpack.c.l.b16 %v2168
        %v2210 = vunpack.c.h.b16 %v2168
        %v2211 = vunpack.c.l.b16 %v2169
        %v2212 = vunpack.c.h.b16 %v2169
        %v2213 = vunpack.c.l.b16 %v2170
        %v2214 = vunpack.c.h.b16 %v2170
        %v2215 = vunpack.c.l.b16 %v2171
        %v2216 = vunpack.c.h.b16 %v2171
        %v2217 = vunpack.c.l.b16 %v2172
        %v2218 = vunpack.c.h.b16 %v2172
        %v2219 = vunpack.c.l.b16 %v2173
        %v2220 = vunpack.c.h.b16 %v2173
        %v2221 = vunpack.c.l.b16 %v2174
        %v2222 = vunpack.c.h.b16 %v2174
        %v2223 = vpack.c.b16 %v2191, %v2191
        %v2224 = vpack.c.b16 %v2192, %v2192
        %v2225 = vpack.c.b16 %v2193, %v2193
        %v2226 = vpack.c.b16 %v2194, %v2194
        %v2227 = vpack.c.b16 %v2195, %v2195
        %v2228 = vpack.c.b16 %v2196, %v2196
        %v2229 = vpack.c.b16 %v2197, %v2197
        %v2230 = vpack.c.b16 %v2198, %v2198
        %v2231 = vpack.c.b16 %v2199, %v2199
        %v2232 = vpack.c.b16 %v2200, %v2200
        %v2233 = vpack.c.b16 %v2201, %v2201
        %v2234 = vpack.c.b16 %v2202, %v2202
        %v2235 = vpack.c.b16 %v2203, %v2203
        %v2236 = vpack.c.b16 %v2204, %v2204
        %v2237 = vpack.c.b16 %v2205, %v2205
        %v2238 = vpack.c.b16 %v2206, %v2206
        %v2239 = vpack.c.b16 %v2207, %v2207
        %v2240 = vpack.c.b16 %v2208, %v2208
        %v2241 = vpack.c.b16 %v2209, %v2209
        %v2242 = vpack.c.b16 %v2210, %v2210
        %v2243 = vpack.c.b16 %v2211, %v2211
        %v2244 = vpack.c.b16 %v2212, %v2212
        %v2245 = vpack.c.b16 %v2213, %v2213
        %v2246 = vpack.c.b16 %v2214, %v2214
        %v2247 = vpack.c.b16 %v2215, %v2215
        %v2248 = vpack.c.b16 %v2216, %v2216
        %v2249 = vpack.c.b16 %v2217, %v2217
        %v2250 = vpack.c.b16 %v2218, %v2218
        %v2251 = vpack.c.b16 %v2219, %v2219
        %v2252 = vpack.c.b16 %v2220, %v2220
        %v2253 = vpack.c.b16 %v2221, %v2221
        %v2254 = vpack.c.b16 %v2222, %v2222
        %s2287 = scalar_lea.vmem %s401, 256 [#allocation3]
        %2288 = vst.msk [vmem:[%s2287] sm:$0xf] %vm672, %v2223
        %2289 = vst.msk [vmem:[%s2287 + $0x4] sm:$0xf] %vm672, %v2224
        %2290 = vst.msk [vmem:[%s2287 + $0x8] sm:$0xf] %vm672, %v2225
        %2291 = vst.msk [vmem:[%s2287 + $0xc] sm:$0xf] %vm672, %v2226
        %2292 = vst.msk [vmem:[%s2287 + $0x10] sm:$0xf] %vm672, %v2227
        %2293 = vst.msk [vmem:[%s2287 + $0x14] sm:$0xf] %vm672, %v2228
        %2294 = vst.msk [vmem:[%s2287 + $0x18] sm:$0xf] %vm672, %v2229
        %2295 = vst.msk [vmem:[%s2287 + $0x1c] sm:$0xf] %vm672, %v2230
        %2296 = vst.msk [vmem:[%s2287 + $0x20] sm:$0xf] %vm672, %v2231
        %2297 = vst.msk [vmem:[%s2287 + $0x24] sm:$0xf] %vm672, %v2232
        %2298 = vst.msk [vmem:[%s2287 + $0x28] sm:$0xf] %vm672, %v2233
        %2299 = vst.msk [vmem:[%s2287 + $0x2c] sm:$0xf] %vm672, %v2234
        %2300 = vst.msk [vmem:[%s2287 + $0x30] sm:$0xf] %vm672, %v2235
        %2301 = vst.msk [vmem:[%s2287 + $0x34] sm:$0xf] %vm672, %v2236
        %2302 = vst.msk [vmem:[%s2287 + $0x38] sm:$0xf] %vm672, %v2237
        %2303 = vst.msk [vmem:[%s2287 + $0x3c] sm:$0xf] %vm672, %v2238
        %2304 = vst.msk [vmem:[%s2287 + $0x40] sm:$0xf] %vm672, %v2239
        %2305 = vst.msk [vmem:[%s2287 + $0x44] sm:$0xf] %vm672, %v2240
        %2306 = vst.msk [vmem:[%s2287 + $0x48] sm:$0xf] %vm672, %v2241
        %2307 = vst.msk [vmem:[%s2287 + $0x4c] sm:$0xf] %vm672, %v2242
        %2308 = vst.msk [vmem:[%s2287 + $0x50] sm:$0xf] %vm672, %v2243
        %2309 = vst.msk [vmem:[%s2287 + $0x54] sm:$0xf] %vm672, %v2244
        %2310 = vst.msk [vmem:[%s2287 + $0x58] sm:$0xf] %vm672, %v2245
        %2311 = vst.msk [vmem:[%s2287 + $0x5c] sm:$0xf] %vm672, %v2246
        %2312 = vst.msk [vmem:[%s2287 + $0x60] sm:$0xf] %vm672, %v2247
        %2313 = vst.msk [vmem:[%s2287 + $0x64] sm:$0xf] %vm672, %v2248
        %2314 = vst.msk [vmem:[%s2287 + $0x68] sm:$0xf] %vm672, %v2249
        %2315 = vst.msk [vmem:[%s2287 + $0x6c] sm:$0xf] %vm672, %v2250
        %2316 = vst.msk [vmem:[%s2287 + $0x70] sm:$0xf] %vm672, %v2251
        %2317 = vst.msk [vmem:[%s2287 + $0x74] sm:$0xf] %vm672, %v2252
        %2318 = vst.msk [vmem:[%s2287 + $0x78] sm:$0xf] %vm672, %v2253
        %2319 = vst.msk [vmem:[%s2287 + $0x7c] sm:$0xf] %vm672, %v2254
        %v2320 = vld [vmem:[%s423] sm:$0xf]
        %v2322 = vsel %vm611, %v2320, 0
        %2324 = vmatprep.subr.bf16.mxu0 0
        %2325 = vmatpush1.bf16.msra.mxu0 %v2322
        %2326 = vmatprep.subr.bf16.mxu0 0
        %2327 = vmatpush1.bf16.msra.mxu0 0
        %2328 = vmatprep.subr.bf16.mxu0 0
        %2329 = vmatpush1.bf16.msra.mxu0 0
        %2330 = vmatprep.subr.bf16.mxu0 0
        %2331 = vmatpush1.bf16.msra.mxu0 0
        %2332 = vmatprep.subr.bf16.mxu0 0
        %2333 = vmatpush1.bf16.msra.mxu0 0
        %2334 = vmatprep.subr.bf16.mxu0 0
        %2335 = vmatpush1.bf16.msra.mxu0 0
        %2336 = vmatprep.subr.bf16.mxu0 0
        %2337 = vmatpush1.bf16.msra.mxu0 0
        %2338 = vmatprep.subr.bf16.mxu0 0
        %2339 = vmatpush1.bf16.msra.mxu0 0
        %2340 = vmatprep.subr.bf16.mxu0 0
        %2341 = vmatpush1.bf16.msra.mxu0 0
        %2342 = vmatprep.subr.bf16.mxu0 0
        %2343 = vmatpush1.bf16.msra.mxu0 0
        %2344 = vmatprep.subr.bf16.mxu0 0
        %2345 = vmatpush1.bf16.msra.mxu0 0
        %2346 = vmatprep.subr.bf16.mxu0 0
        %2347 = vmatpush1.bf16.msra.mxu0 0
        %2348 = vmatprep.subr.bf16.mxu0 0
        %2349 = vmatpush1.bf16.msra.mxu0 0
        %2350 = vmatprep.subr.bf16.mxu0 0
        %2351 = vmatpush1.bf16.msra.mxu0 0
        %2352 = vmatprep.subr.bf16.mxu0 0
        %2353 = vmatpush1.bf16.msra.mxu0 0
        %2354 = vmatprep.subr.bf16.mxu0 0
        %2355 = vmatpush1.bf16.msra.mxu0 0
        %2356 = vmatprep.mubr.bf16.mxu0 0
        %2357 = vmatmul.mubr.bf16.gmra.mrb[0].mxu0 %v707
        %v2358 = vpop.f32.mrb[0].mxu0
        %v2359 = vadd.f32 0.0, %v2358
        %v2360 = vpop.f32.mrb[0].mxu0
        %v2361 = vpop.f32.mrb[0].mxu0
        %v2362 = vadd.f32 0.0, %v2361
        %v2363 = vpop.f32.mrb[0].mxu0
        %2364 = vmatprep.mubr.bf16.mxu0 0
        %2365 = vmatmul.mubr.bf16.gmra.mrb[0].mxu0 %v710
        %v2366 = vpop.f32.mrb[0].mxu0
        %v2367 = vadd.f32 0.0, %v2366
        %v2368 = vpop.f32.mrb[0].mxu0
        %v2369 = vpop.f32.mrb[0].mxu0
        %v2370 = vadd.f32 0.0, %v2369
        %v2371 = vpop.f32.mrb[0].mxu0
        %2372 = vmatprep.mubr.bf16.mxu0 0
        %2373 = vmatmul.mubr.bf16.gmra.mrb[0].mxu0 %v713
        %v2374 = vpop.f32.mrb[0].mxu0
        %v2375 = vadd.f32 0.0, %v2374
        %v2376 = vpop.f32.mrb[0].mxu0
        %v2377 = vpop.f32.mrb[0].mxu0
        %v2378 = vadd.f32 0.0, %v2377
        %v2379 = vpop.f32.mrb[0].mxu0
        %2380 = vmatprep.mubr.bf16.mxu0 0
        %2381 = vmatmul.mubr.bf16.gmra.mrb[0].mxu0 %v716
        %v2382 = vpop.f32.mrb[0].mxu0
        %v2383 = vadd.f32 0.0, %v2382
        %v2384 = vpop.f32.mrb[0].mxu0
        %v2385 = vpop.f32.mrb[0].mxu0
        %v2386 = vadd.f32 0.0, %v2385
        %v2387 = vpop.f32.mrb[0].mxu0
        %2388 = vmatprep.mubr.bf16.mxu0 0
        %2389 = vmatmul.mubr.bf16.gmra.mrb[0].mxu0 %v719
        %v2390 = vpop.f32.mrb[0].mxu0
        %v2391 = vadd.f32 0.0, %v2390
        %v2392 = vpop.f32.mrb[0].mxu0
        %v2393 = vpop.f32.mrb[0].mxu0
        %v2394 = vadd.f32 0.0, %v2393
        %v2395 = vpop.f32.mrb[0].mxu0
        %2396 = vmatprep.mubr.bf16.mxu0 0
        %2397 = vmatmul.mubr.bf16.gmra.mrb[0].mxu0 %v722
        %v2398 = vpop.f32.mrb[0].mxu0
        %v2399 = vadd.f32 0.0, %v2398
        %v2400 = vpop.f32.mrb[0].mxu0
        %v2401 = vpop.f32.mrb[0].mxu0
        %v2402 = vadd.f32 0.0, %v2401
        %v2403 = vpop.f32.mrb[0].mxu0
        %2404 = vmatprep.mubr.bf16.mxu0 0
        %2405 = vmatmul.mubr.bf16.gmra.mrb[0].mxu0 %v725
        %v2406 = vpop.f32.mrb[0].mxu0
        %v2407 = vadd.f32 0.0, %v2406
        %v2408 = vpop.f32.mrb[0].mxu0
        %v2409 = vpop.f32.mrb[0].mxu0
        %v2410 = vadd.f32 0.0, %v2409
        %v2411 = vpop.f32.mrb[0].mxu0
        %2412 = vmatprep.mubr.bf16.mxu0 0
        %2413 = vmatmul.mubr.bf16.gmra.mrb[0].mxu0 %v728
        %v2414 = vpop.f32.mrb[0].mxu0
        %v2415 = vadd.f32 0.0, %v2414
        %v2416 = vpop.f32.mrb[0].mxu0
        %v2417 = vpop.f32.mrb[0].mxu0
        %v2418 = vadd.f32 0.0, %v2417
        %v2419 = vpop.f32.mrb[0].mxu0
        %2420 = vmatprep.mubr.bf16.mxu0 0
        %2421 = vmatmul.mubr.bf16.gmra.mrb[0].mxu0 %v731
        %v2422 = vpop.f32.mrb[0].mxu0
        %v2423 = vadd.f32 0.0, %v2422
        %v2424 = vpop.f32.mrb[0].mxu0
        %v2425 = vpop.f32.mrb[0].mxu0
        %v2426 = vadd.f32 0.0, %v2425
        %v2427 = vpop.f32.mrb[0].mxu0
        %2428 = vmatprep.mubr.bf16.mxu0 0
        %2429 = vmatmul.mubr.bf16.gmra.mrb[0].mxu0 %v734
        %v2430 = vpop.f32.mrb[0].mxu0
        %v2431 = vadd.f32 0.0, %v2430
        %v2432 = vpop.f32.mrb[0].mxu0
        %v2433 = vpop.f32.mrb[0].mxu0
        %v2434 = vadd.f32 0.0, %v2433
        %v2435 = vpop.f32.mrb[0].mxu0
        %2436 = vmatprep.mubr.bf16.mxu0 0
        %2437 = vmatmul.mubr.bf16.gmra.mrb[0].mxu0 %v737
        %v2438 = vpop.f32.mrb[0].mxu0
        %v2439 = vadd.f32 0.0, %v2438
        %v2440 = vpop.f32.mrb[0].mxu0
        %v2441 = vpop.f32.mrb[0].mxu0
        %v2442 = vadd.f32 0.0, %v2441
        %v2443 = vpop.f32.mrb[0].mxu0
        %2444 = vmatprep.mubr.bf16.mxu0 0
        %2445 = vmatmul.mubr.bf16.gmra.mrb[0].mxu0 %v740
        %v2446 = vpop.f32.mrb[0].mxu0
        %v2447 = vadd.f32 0.0, %v2446
        %v2448 = vpop.f32.mrb[0].mxu0
        %v2449 = vpop.f32.mrb[0].mxu0
        %v2450 = vadd.f32 0.0, %v2449
        %v2451 = vpop.f32.mrb[0].mxu0
        %2452 = vmatprep.mubr.bf16.mxu0 0
        %2453 = vmatmul.mubr.bf16.gmra.mrb[0].mxu0 %v743
        %v2454 = vpop.f32.mrb[0].mxu0
        %v2455 = vadd.f32 0.0, %v2454
        %v2456 = vpop.f32.mrb[0].mxu0
        %v2457 = vpop.f32.mrb[0].mxu0
        %v2458 = vadd.f32 0.0, %v2457
        %v2459 = vpop.f32.mrb[0].mxu0
        %2460 = vmatprep.mubr.bf16.mxu0 0
        %2461 = vmatmul.mubr.bf16.gmra.mrb[0].mxu0 %v746
        %v2462 = vpop.f32.mrb[0].mxu0
        %v2463 = vadd.f32 0.0, %v2462
        %v2464 = vpop.f32.mrb[0].mxu0
        %v2465 = vpop.f32.mrb[0].mxu0
        %v2466 = vadd.f32 0.0, %v2465
        %v2467 = vpop.f32.mrb[0].mxu0
        %2468 = vmatprep.mubr.bf16.mxu0 0
        %2469 = vmatmul.mubr.bf16.gmra.mrb[0].mxu0 %v749
        %v2470 = vpop.f32.mrb[0].mxu0
        %v2471 = vadd.f32 0.0, %v2470
        %v2472 = vpop.f32.mrb[0].mxu0
        %v2473 = vpop.f32.mrb[0].mxu0
        %v2474 = vadd.f32 0.0, %v2473
        %v2475 = vpop.f32.mrb[0].mxu0
        %2476 = vmatprep.mubr.bf16.mxu0 0
        %2477 = vmatmul.mubr.bf16.gmra.mrb[0].mxu0 %v752
        %v2478 = vpop.f32.mrb[0].mxu0
        %v2479 = vadd.f32 0.0, %v2478
        %v2480 = vpop.f32.mrb[0].mxu0
        %v2481 = vpop.f32.mrb[0].mxu0
        %v2482 = vadd.f32 0.0, %v2481
        %v2483 = vpop.f32.mrb[0].mxu0
        %2484 = vdwg.mxu0
        %2485 = vst.msk [vmem:[#allocation2] sm:$0xff] %vm1396, %v2359
        %2486 = vst.msk [vmem:[#allocation2 + $0x8] sm:$0xff] %vm1396, %v2362
        %2487 = vst.msk [vmem:[#allocation2 + $0x10] sm:$0xff] %vm1396, %v2367
        %2488 = vst.msk [vmem:[#allocation2 + $0x18] sm:$0xff] %vm1396, %v2370
        %2489 = vst.msk [vmem:[#allocation2 + $0x20] sm:$0xff] %vm1396, %v2375
        %2490 = vst.msk [vmem:[#allocation2 + $0x28] sm:$0xff] %vm1396, %v2378
        %2491 = vst.msk [vmem:[#allocation2 + $0x30] sm:$0xff] %vm1396, %v2383
        %2492 = vst.msk [vmem:[#allocation2 + $0x38] sm:$0xff] %vm1396, %v2386
        %2493 = vst.msk [vmem:[#allocation2 + $0x40] sm:$0xff] %vm1396, %v2391
        %2494 = vst.msk [vmem:[#allocation2 + $0x48] sm:$0xff] %vm1396, %v2394
        %2495 = vst.msk [vmem:[#allocation2 + $0x50] sm:$0xff] %vm1396, %v2399
        %2496 = vst.msk [vmem:[#allocation2 + $0x58] sm:$0xff] %vm1396, %v2402
        %2497 = vst.msk [vmem:[#allocation2 + $0x60] sm:$0xff] %vm1396, %v2407
        %2498 = vst.msk [vmem:[#allocation2 + $0x68] sm:$0xff] %vm1396, %v2410
        %2499 = vst.msk [vmem:[#allocation2 + $0x70] sm:$0xff] %vm1396, %v2415
        %2500 = vst.msk [vmem:[#allocation2 + $0x78] sm:$0xff] %vm1396, %v2418
        %2501 = vst.msk [vmem:[#allocation2 + $0x80] sm:$0xff] %vm1396, %v2423
        %2502 = vst.msk [vmem:[#allocation2 + $0x88] sm:$0xff] %vm1396, %v2426
        %2503 = vst.msk [vmem:[#allocation2 + $0x90] sm:$0xff] %vm1396, %v2431
        %2504 = vst.msk [vmem:[#allocation2 + $0x98] sm:$0xff] %vm1396, %v2434
        %2505 = vst.msk [vmem:[#allocation2 + $0xa0] sm:$0xff] %vm1396, %v2439
        %2506 = vst.msk [vmem:[#allocation2 + $0xa8] sm:$0xff] %vm1396, %v2442
        %2507 = vst.msk [vmem:[#allocation2 + $0xb0] sm:$0xff] %vm1396, %v2447
        %2508 = vst.msk [vmem:[#allocation2 + $0xb8] sm:$0xff] %vm1396, %v2450
        %2509 = vst.msk [vmem:[#allocation2 + $0xc0] sm:$0xff] %vm1396, %v2455
        %2510 = vst.msk [vmem:[#allocation2 + $0xc8] sm:$0xff] %vm1396, %v2458
        %2511 = vst.msk [vmem:[#allocation2 + $0xd0] sm:$0xff] %vm1396, %v2463
        %2512 = vst.msk [vmem:[#allocation2 + $0xd8] sm:$0xff] %vm1396, %v2466
        %2513 = vst.msk [vmem:[#allocation2 + $0xe0] sm:$0xff] %vm1396, %v2471
        %2514 = vst.msk [vmem:[#allocation2 + $0xe8] sm:$0xff] %vm1396, %v2474
        %2515 = vst.msk [vmem:[#allocation2 + $0xf0] sm:$0xff] %vm1396, %v2479
        %2516 = vst.msk [vmem:[#allocation2 + $0xf8] sm:$0xff] %vm1396, %v2482
        %v2517 = vld [vmem:[#allocation2] sm:$0xff]
        %v2518 = vld [vmem:[#allocation2 + $0x8] sm:$0xff]
        %v2519 = vld [vmem:[#allocation2 + $0x10] sm:$0xff]
        %v2520 = vld [vmem:[#allocation2 + $0x18] sm:$0xff]
        %v2521 = vld [vmem:[#allocation2 + $0x20] sm:$0xff]
        %v2522 = vld [vmem:[#allocation2 + $0x28] sm:$0xff]
        %v2523 = vld [vmem:[#allocation2 + $0x30] sm:$0xff]
        %v2524 = vld [vmem:[#allocation2 + $0x38] sm:$0xff]
        %v2525 = vld [vmem:[#allocation2 + $0x40] sm:$0xff]
        %v2526 = vld [vmem:[#allocation2 + $0x48] sm:$0xff]
        %v2527 = vld [vmem:[#allocation2 + $0x50] sm:$0xff]
        %v2528 = vld [vmem:[#allocation2 + $0x58] sm:$0xff]
        %v2529 = vld [vmem:[#allocation2 + $0x60] sm:$0xff]
        %v2530 = vld [vmem:[#allocation2 + $0x68] sm:$0xff]
        %v2531 = vld [vmem:[#allocation2 + $0x70] sm:$0xff]
        %v2532 = vld [vmem:[#allocation2 + $0x78] sm:$0xff]
        %v2533 = vld [vmem:[#allocation2 + $0x80] sm:$0xff]
        %v2534 = vld [vmem:[#allocation2 + $0x88] sm:$0xff]
        %v2535 = vld [vmem:[#allocation2 + $0x90] sm:$0xff]
        %v2536 = vld [vmem:[#allocation2 + $0x98] sm:$0xff]
        %v2537 = vld [vmem:[#allocation2 + $0xa0] sm:$0xff]
        %v2538 = vld [vmem:[#allocation2 + $0xa8] sm:$0xff]
        %v2539 = vld [vmem:[#allocation2 + $0xb0] sm:$0xff]
        %v2540 = vld [vmem:[#allocation2 + $0xb8] sm:$0xff]
        %v2541 = vld [vmem:[#allocation2 + $0xc0] sm:$0xff]
        %v2542 = vld [vmem:[#allocation2 + $0xc8] sm:$0xff]
        %v2543 = vld [vmem:[#allocation2 + $0xd0] sm:$0xff]
        %v2544 = vld [vmem:[#allocation2 + $0xd8] sm:$0xff]
        %v2545 = vld [vmem:[#allocation2 + $0xe0] sm:$0xff]
        %v2546 = vld [vmem:[#allocation2 + $0xe8] sm:$0xff]
        %v2547 = vld [vmem:[#allocation2 + $0xf0] sm:$0xff]
        %v2548 = vld [vmem:[#allocation2 + $0xf8] sm:$0xff]
        %s2549 = scalar_lea.vmem %s430, 3
        %v2550 = vld [vmem:[%s2549] sm:$0x1]
        %v2552 = vlaneseq
        %v2553 = vshrl.u32 %v2552, 7
        %v2554 = vsub.s32 0, %v2553
        %v2555 = vrot.slane %v2550, %v2554
        %v2557 = vmul.f32 %v2517, %v2555
        %v2558 = vmul.f32 %v2518, %v2555
        %v2559 = vmul.f32 %v2519, %v2555
        %v2560 = vmul.f32 %v2520, %v2555
        %v2561 = vmul.f32 %v2521, %v2555
        %v2562 = vmul.f32 %v2522, %v2555
        %v2563 = vmul.f32 %v2523, %v2555
        %v2564 = vmul.f32 %v2524, %v2555
        %v2565 = vmul.f32 %v2525, %v2555
        %v2566 = vmul.f32 %v2526, %v2555
        %v2567 = vmul.f32 %v2527, %v2555
        %v2568 = vmul.f32 %v2528, %v2555
        %v2569 = vmul.f32 %v2529, %v2555
        %v2570 = vmul.f32 %v2530, %v2555
        %v2571 = vmul.f32 %v2531, %v2555
        %v2572 = vmul.f32 %v2532, %v2555
        %v2573 = vmul.f32 %v2533, %v2555
        %v2574 = vmul.f32 %v2534, %v2555
        %v2575 = vmul.f32 %v2535, %v2555
        %v2576 = vmul.f32 %v2536, %v2555
        %v2577 = vmul.f32 %v2537, %v2555
        %v2578 = vmul.f32 %v2538, %v2555
        %v2579 = vmul.f32 %v2539, %v2555
        %v2580 = vmul.f32 %v2540, %v2555
        %v2581 = vmul.f32 %v2541, %v2555
        %v2582 = vmul.f32 %v2542, %v2555
        %v2583 = vmul.f32 %v2543, %v2555
        %v2584 = vmul.f32 %v2544, %v2555
        %v2585 = vmul.f32 %v2545, %v2555
        %v2586 = vmul.f32 %v2546, %v2555
        %v2587 = vmul.f32 %v2547, %v2555
        %v2588 = vmul.f32 %v2548, %v2555
        %s2589 = scalar_lea.vmem %s433, 3
        %v2590 = vld [vmem:[%s2589] sm:$0x1]
        %v2592 = vlaneseq
        %v2593 = vshrl.u32 %v2592, 7
        %v2594 = vsub.s32 0, %v2593
        %v2595 = vrot.slane %v2590, %v2594
        %v2597 = vadd.f32 %v2557, %v2595
        %v2598 = vadd.f32 %v2558, %v2595
        %v2599 = vadd.f32 %v2559, %v2595
        %v2600 = vadd.f32 %v2560, %v2595
        %v2601 = vadd.f32 %v2561, %v2595
        %v2602 = vadd.f32 %v2562, %v2595
        %v2603 = vadd.f32 %v2563, %v2595
        %v2604 = vadd.f32 %v2564, %v2595
        %v2605 = vadd.f32 %v2565, %v2595
        %v2606 = vadd.f32 %v2566, %v2595
        %v2607 = vadd.f32 %v2567, %v2595
        %v2608 = vadd.f32 %v2568, %v2595
        %v2609 = vadd.f32 %v2569, %v2595
        %v2610 = vadd.f32 %v2570, %v2595
        %v2611 = vadd.f32 %v2571, %v2595
        %v2612 = vadd.f32 %v2572, %v2595
        %v2613 = vadd.f32 %v2573, %v2595
        %v2614 = vadd.f32 %v2574, %v2595
        %v2615 = vadd.f32 %v2575, %v2595
        %v2616 = vadd.f32 %v2576, %v2595
        %v2617 = vadd.f32 %v2577, %v2595
        %v2618 = vadd.f32 %v2578, %v2595
        %v2619 = vadd.f32 %v2579, %v2595
        %v2620 = vadd.f32 %v2580, %v2595
        %v2621 = vadd.f32 %v2581, %v2595
        %v2622 = vadd.f32 %v2582, %v2595
        %v2623 = vadd.f32 %v2583, %v2595
        %v2624 = vadd.f32 %v2584, %v2595
        %v2625 = vadd.f32 %v2585, %v2595
        %v2626 = vadd.f32 %v2586, %v2595
        %v2627 = vadd.f32 %v2587, %v2595
        %v2628 = vadd.f32 %v2588, %v2595
        %v2629 = vmax.f32 %v2597, 0.0
        %v2630 = vmax.f32 %v2598, 0.0
        %v2631 = vmax.f32 %v2599, 0.0
        %v2632 = vmax.f32 %v2600, 0.0
        %v2633 = vmax.f32 %v2601, 0.0
        %v2634 = vmax.f32 %v2602, 0.0
        %v2635 = vmax.f32 %v2603, 0.0
        %v2636 = vmax.f32 %v2604, 0.0
        %v2637 = vmax.f32 %v2605, 0.0
        %v2638 = vmax.f32 %v2606, 0.0
        %v2639 = vmax.f32 %v2607, 0.0
        %v2640 = vmax.f32 %v2608, 0.0
        %v2641 = vmax.f32 %v2609, 0.0
        %v2642 = vmax.f32 %v2610, 0.0
        %v2643 = vmax.f32 %v2611, 0.0
        %v2644 = vmax.f32 %v2612, 0.0
        %v2645 = vmax.f32 %v2613, 0.0
        %v2646 = vmax.f32 %v2614, 0.0
        %v2647 = vmax.f32 %v2615, 0.0
        %v2648 = vmax.f32 %v2616, 0.0
        %v2649 = vmax.f32 %v2617, 0.0
        %v2650 = vmax.f32 %v2618, 0.0
        %v2651 = vmax.f32 %v2619, 0.0
        %v2652 = vmax.f32 %v2620, 0.0
        %v2653 = vmax.f32 %v2621, 0.0
        %v2654 = vmax.f32 %v2622, 0.0
        %v2655 = vmax.f32 %v2623, 0.0
        %v2656 = vmax.f32 %v2624, 0.0
        %v2657 = vmax.f32 %v2625, 0.0
        %v2658 = vmax.f32 %v2626, 0.0
        %v2659 = vmax.f32 %v2627, 0.0
        %v2660 = vmax.f32 %v2628, 0.0
        %v2661 = vpack.c.bf16 %v2630, %v2629
        %v2662 = vpack.c.bf16 %v2632, %v2631
        %v2663 = vpack.c.bf16 %v2634, %v2633
        %v2664 = vpack.c.bf16 %v2636, %v2635
        %v2665 = vpack.c.bf16 %v2638, %v2637
        %v2666 = vpack.c.bf16 %v2640, %v2639
        %v2667 = vpack.c.bf16 %v2642, %v2641
        %v2668 = vpack.c.bf16 %v2644, %v2643
        %v2669 = vpack.c.bf16 %v2646, %v2645
        %v2670 = vpack.c.bf16 %v2648, %v2647
        %v2671 = vpack.c.bf16 %v2650, %v2649
        %v2672 = vpack.c.bf16 %v2652, %v2651
        %v2673 = vpack.c.bf16 %v2654, %v2653
        %v2674 = vpack.c.bf16 %v2656, %v2655
        %v2675 = vpack.c.bf16 %v2658, %v2657
        %v2676 = vpack.c.bf16 %v2660, %v2659
        %v2693 = vunpack.c.l.b16 %v2661
        %v2694 = vunpack.c.h.b16 %v2661
        %v2695 = vunpack.c.l.b16 %v2662
        %v2696 = vunpack.c.h.b16 %v2662
        %v2697 = vunpack.c.l.b16 %v2663
        %v2698 = vunpack.c.h.b16 %v2663
        %v2699 = vunpack.c.l.b16 %v2664
        %v2700 = vunpack.c.h.b16 %v2664
        %v2701 = vunpack.c.l.b16 %v2665
        %v2702 = vunpack.c.h.b16 %v2665
        %v2703 = vunpack.c.l.b16 %v2666
        %v2704 = vunpack.c.h.b16 %v2666
        %v2705 = vunpack.c.l.b16 %v2667
        %v2706 = vunpack.c.h.b16 %v2667
        %v2707 = vunpack.c.l.b16 %v2668
        %v2708 = vunpack.c.h.b16 %v2668
        %v2709 = vunpack.c.l.b16 %v2669
        %v2710 = vunpack.c.h.b16 %v2669
        %v2711 = vunpack.c.l.b16 %v2670
        %v2712 = vunpack.c.h.b16 %v2670
        %v2713 = vunpack.c.l.b16 %v2671
        %v2714 = vunpack.c.h.b16 %v2671
        %v2715 = vunpack.c.l.b16 %v2672
        %v2716 = vunpack.c.h.b16 %v2672
        %v2717 = vunpack.c.l.b16 %v2673
        %v2718 = vunpack.c.h.b16 %v2673
        %v2719 = vunpack.c.l.b16 %v2674
        %v2720 = vunpack.c.h.b16 %v2674
        %v2721 = vunpack.c.l.b16 %v2675
        %v2722 = vunpack.c.h.b16 %v2675
        %v2723 = vunpack.c.l.b16 %v2676
        %v2724 = vunpack.c.h.b16 %v2676
        %v2725 = vpack.c.b16 %v2693, %v2693
        %v2726 = vpack.c.b16 %v2694, %v2694
        %v2727 = vpack.c.b16 %v2695, %v2695
        %v2728 = vpack.c.b16 %v2696, %v2696
        %v2729 = vpack.c.b16 %v2697, %v2697
        %v2730 = vpack.c.b16 %v2698, %v2698
        %v2731 = vpack.c.b16 %v2699, %v2699
        %v2732 = vpack.c.b16 %v2700, %v2700
        %v2733 = vpack.c.b16 %v2701, %v2701
        %v2734 = vpack.c.b16 %v2702, %v2702
        %v2735 = vpack.c.b16 %v2703, %v2703
        %v2736 = vpack.c.b16 %v2704, %v2704
        %v2737 = vpack.c.b16 %v2705, %v2705
        %v2738 = vpack.c.b16 %v2706, %v2706
        %v2739 = vpack.c.b16 %v2707, %v2707
        %v2740 = vpack.c.b16 %v2708, %v2708
        %v2741 = vpack.c.b16 %v2709, %v2709
        %v2742 = vpack.c.b16 %v2710, %v2710
        %v2743 = vpack.c.b16 %v2711, %v2711
        %v2744 = vpack.c.b16 %v2712, %v2712
        %v2745 = vpack.c.b16 %v2713, %v2713
        %v2746 = vpack.c.b16 %v2714, %v2714
        %v2747 = vpack.c.b16 %v2715, %v2715
        %v2748 = vpack.c.b16 %v2716, %v2716
        %v2749 = vpack.c.b16 %v2717, %v2717
        %v2750 = vpack.c.b16 %v2718, %v2718
        %v2751 = vpack.c.b16 %v2719, %v2719
        %v2752 = vpack.c.b16 %v2720, %v2720
        %v2753 = vpack.c.b16 %v2721, %v2721
        %v2754 = vpack.c.b16 %v2722, %v2722
        %v2755 = vpack.c.b16 %v2723, %v2723
        %v2756 = vpack.c.b16 %v2724, %v2724
        %s2789 = scalar_lea.vmem %s401, 384 [#allocation3]
        %2790 = vst.msk [vmem:[%s2789] sm:$0xf] %vm672, %v2725
        %2791 = vst.msk [vmem:[%s2789 + $0x4] sm:$0xf] %vm672, %v2726
        %2792 = vst.msk [vmem:[%s2789 + $0x8] sm:$0xf] %vm672, %v2727
        %2793 = vst.msk [vmem:[%s2789 + $0xc] sm:$0xf] %vm672, %v2728
        %2794 = vst.msk [vmem:[%s2789 + $0x10] sm:$0xf] %vm672, %v2729
        %2795 = vst.msk [vmem:[%s2789 + $0x14] sm:$0xf] %vm672, %v2730
        %2796 = vst.msk [vmem:[%s2789 + $0x18] sm:$0xf] %vm672, %v2731
        %2797 = vst.msk [vmem:[%s2789 + $0x1c] sm:$0xf] %vm672, %v2732
        %2798 = vst.msk [vmem:[%s2789 + $0x20] sm:$0xf] %vm672, %v2733
        %2799 = vst.msk [vmem:[%s2789 + $0x24] sm:$0xf] %vm672, %v2734
        %2800 = vst.msk [vmem:[%s2789 + $0x28] sm:$0xf] %vm672, %v2735
        %2801 = vst.msk [vmem:[%s2789 + $0x2c] sm:$0xf] %vm672, %v2736
        %2802 = vst.msk [vmem:[%s2789 + $0x30] sm:$0xf] %vm672, %v2737
        %2803 = vst.msk [vmem:[%s2789 + $0x34] sm:$0xf] %vm672, %v2738
        %2804 = vst.msk [vmem:[%s2789 + $0x38] sm:$0xf] %vm672, %v2739
        %2805 = vst.msk [vmem:[%s2789 + $0x3c] sm:$0xf] %vm672, %v2740
        %2806 = vst.msk [vmem:[%s2789 + $0x40] sm:$0xf] %vm672, %v2741
        %2807 = vst.msk [vmem:[%s2789 + $0x44] sm:$0xf] %vm672, %v2742
        %2808 = vst.msk [vmem:[%s2789 + $0x48] sm:$0xf] %vm672, %v2743
        %2809 = vst.msk [vmem:[%s2789 + $0x4c] sm:$0xf] %vm672, %v2744
        %2810 = vst.msk [vmem:[%s2789 + $0x50] sm:$0xf] %vm672, %v2745
        %2811 = vst.msk [vmem:[%s2789 + $0x54] sm:$0xf] %vm672, %v2746
        %2812 = vst.msk [vmem:[%s2789 + $0x58] sm:$0xf] %vm672, %v2747
        %2813 = vst.msk [vmem:[%s2789 + $0x5c] sm:$0xf] %vm672, %v2748
        %2814 = vst.msk [vmem:[%s2789 + $0x60] sm:$0xf] %vm672, %v2749
        %2815 = vst.msk [vmem:[%s2789 + $0x64] sm:$0xf] %vm672, %v2750
        %2816 = vst.msk [vmem:[%s2789 + $0x68] sm:$0xf] %vm672, %v2751
        %2817 = vst.msk [vmem:[%s2789 + $0x6c] sm:$0xf] %vm672, %v2752
        %2818 = vst.msk [vmem:[%s2789 + $0x70] sm:$0xf] %vm672, %v2753
        %2819 = vst.msk [vmem:[%s2789 + $0x74] sm:$0xf] %vm672, %v2754
        %2820 = vst.msk [vmem:[%s2789 + $0x78] sm:$0xf] %vm672, %v2755
        %2821 = vst.msk [vmem:[%s2789 + $0x7c] sm:$0xf] %vm672, %v2756
        %v2822 = vld [vmem:[%s427] sm:$0xf]
        %v2824 = vsel %vm611, %v2822, 0
        %2826 = vmatprep.subr.bf16.mxu0 0
        %2827 = vmatpush1.bf16.msra.mxu0 %v2824
        %2828 = vmatprep.subr.bf16.mxu0 0
        %2829 = vmatpush1.bf16.msra.mxu0 0
        %2830 = vmatprep.subr.bf16.mxu0 0
        %2831 = vmatpush1.bf16.msra.mxu0 0
        %2832 = vmatprep.subr.bf16.mxu0 0
        %2833 = vmatpush1.bf16.msra.mxu0 0
        %2834 = vmatprep.subr.bf16.mxu0 0
        %2835 = vmatpush1.bf16.msra.mxu0 0
        %2836 = vmatprep.subr.bf16.mxu0 0
        %2837 = vmatpush1.bf16.msra.mxu0 0
        %2838 = vmatprep.subr.bf16.mxu0 0
        %2839 = vmatpush1.bf16.msra.mxu0 0
        %2840 = vmatprep.subr.bf16.mxu0 0
        %2841 = vmatpush1.bf16.msra.mxu0 0
        %2842 = vmatprep.subr.bf16.mxu0 0
        %2843 = vmatpush1.bf16.msra.mxu0 0
        %2844 = vmatprep.subr.bf16.mxu0 0
        %2845 = vmatpush1.bf16.msra.mxu0 0
        %2846 = vmatprep.subr.bf16.mxu0 0
        %2847 = vmatpush1.bf16.msra.mxu0 0
        %2848 = vmatprep.subr.bf16.mxu0 0
        %2849 = vmatpush1.bf16.msra.mxu0 0
        %2850 = vmatprep.subr.bf16.mxu0 0
        %2851 = vmatpush1.bf16.msra.mxu0 0
        %2852 = vmatprep.subr.bf16.mxu0 0
        %2853 = vmatpush1.bf16.msra.mxu0 0
        %2854 = vmatprep.subr.bf16.mxu0 0
        %2855 = vmatpush1.bf16.msra.mxu0 0
        %2856 = vmatprep.subr.bf16.mxu0 0
        %2857 = vmatpush1.bf16.msra.mxu0 0
        %2858 = vmatprep.mubr.bf16.mxu0 0
        %2859 = vmatmul.mubr.bf16.gmra.mrb[0].mxu0 %v707
        %v2860 = vpop.f32.mrb[0].mxu0
        %v2861 = vadd.f32 0.0, %v2860
        %v2862 = vpop.f32.mrb[0].mxu0
        %v2863 = vpop.f32.mrb[0].mxu0
        %v2864 = vadd.f32 0.0, %v2863
        %v2865 = vpop.f32.mrb[0].mxu0
        %2866 = vmatprep.mubr.bf16.mxu0 0
        %2867 = vmatmul.mubr.bf16.gmra.mrb[0].mxu0 %v710
        %v2868 = vpop.f32.mrb[0].mxu0
        %v2869 = vadd.f32 0.0, %v2868
        %v2870 = vpop.f32.mrb[0].mxu0
        %v2871 = vpop.f32.mrb[0].mxu0
        %v2872 = vadd.f32 0.0, %v2871
        %v2873 = vpop.f32.mrb[0].mxu0
        %2874 = vmatprep.mubr.bf16.mxu0 0
        %2875 = vmatmul.mubr.bf16.gmra.mrb[0].mxu0 %v713
        %v2876 = vpop.f32.mrb[0].mxu0
        %v2877 = vadd.f32 0.0, %v2876
        %v2878 = vpop.f32.mrb[0].mxu0
        %v2879 = vpop.f32.mrb[0].mxu0
        %v2880 = vadd.f32 0.0, %v2879
        %v2881 = vpop.f32.mrb[0].mxu0
        %2882 = vmatprep.mubr.bf16.mxu0 0
        %2883 = vmatmul.mubr.bf16.gmra.mrb[0].mxu0 %v716
        %v2884 = vpop.f32.mrb[0].mxu0
        %v2885 = vadd.f32 0.0, %v2884
        %v2886 = vpop.f32.mrb[0].mxu0
        %v2887 = vpop.f32.mrb[0].mxu0
        %v2888 = vadd.f32 0.0, %v2887
        %v2889 = vpop.f32.mrb[0].mxu0
        %2890 = vmatprep.mubr.bf16.mxu0 0
        %2891 = vmatmul.mubr.bf16.gmra.mrb[0].mxu0 %v719
        %v2892 = vpop.f32.mrb[0].mxu0
        %v2893 = vadd.f32 0.0, %v2892
        %v2894 = vpop.f32.mrb[0].mxu0
        %v2895 = vpop.f32.mrb[0].mxu0
        %v2896 = vadd.f32 0.0, %v2895
        %v2897 = vpop.f32.mrb[0].mxu0
        %2898 = vmatprep.mubr.bf16.mxu0 0
        %2899 = vmatmul.mubr.bf16.gmra.mrb[0].mxu0 %v722
        %v2900 = vpop.f32.mrb[0].mxu0
        %v2901 = vadd.f32 0.0, %v2900
        %v2902 = vpop.f32.mrb[0].mxu0
        %v2903 = vpop.f32.mrb[0].mxu0
        %v2904 = vadd.f32 0.0, %v2903
        %v2905 = vpop.f32.mrb[0].mxu0
        %2906 = vmatprep.mubr.bf16.mxu0 0
        %2907 = vmatmul.mubr.bf16.gmra.mrb[0].mxu0 %v725
        %v2908 = vpop.f32.mrb[0].mxu0
        %v2909 = vadd.f32 0.0, %v2908
        %v2910 = vpop.f32.mrb[0].mxu0
        %v2911 = vpop.f32.mrb[0].mxu0
        %v2912 = vadd.f32 0.0, %v2911
        %v2913 = vpop.f32.mrb[0].mxu0
        %2914 = vmatprep.mubr.bf16.mxu0 0
        %2915 = vmatmul.mubr.bf16.gmra.mrb[0].mxu0 %v728
        %v2916 = vpop.f32.mrb[0].mxu0
        %v2917 = vadd.f32 0.0, %v2916
        %v2918 = vpop.f32.mrb[0].mxu0
        %v2919 = vpop.f32.mrb[0].mxu0
        %v2920 = vadd.f32 0.0, %v2919
        %v2921 = vpop.f32.mrb[0].mxu0
        %2922 = vmatprep.mubr.bf16.mxu0 0
        %2923 = vmatmul.mubr.bf16.gmra.mrb[0].mxu0 %v731
        %v2924 = vpop.f32.mrb[0].mxu0
        %v2925 = vadd.f32 0.0, %v2924
        %v2926 = vpop.f32.mrb[0].mxu0
        %v2927 = vpop.f32.mrb[0].mxu0
        %v2928 = vadd.f32 0.0, %v2927
        %v2929 = vpop.f32.mrb[0].mxu0
        %2930 = vmatprep.mubr.bf16.mxu0 0
        %2931 = vmatmul.mubr.bf16.gmra.mrb[0].mxu0 %v734
        %v2932 = vpop.f32.mrb[0].mxu0
        %v2933 = vadd.f32 0.0, %v2932
        %v2934 = vpop.f32.mrb[0].mxu0
        %v2935 = vpop.f32.mrb[0].mxu0
        %v2936 = vadd.f32 0.0, %v2935
        %v2937 = vpop.f32.mrb[0].mxu0
        %2938 = vmatprep.mubr.bf16.mxu0 0
        %2939 = vmatmul.mubr.bf16.gmra.mrb[0].mxu0 %v737
        %v2940 = vpop.f32.mrb[0].mxu0
        %v2941 = vadd.f32 0.0, %v2940
        %v2942 = vpop.f32.mrb[0].mxu0
        %v2943 = vpop.f32.mrb[0].mxu0
        %v2944 = vadd.f32 0.0, %v2943
        %v2945 = vpop.f32.mrb[0].mxu0
        %2946 = vmatprep.mubr.bf16.mxu0 0
        %2947 = vmatmul.mubr.bf16.gmra.mrb[0].mxu0 %v740
        %v2948 = vpop.f32.mrb[0].mxu0
        %v2949 = vadd.f32 0.0, %v2948
        %v2950 = vpop.f32.mrb[0].mxu0
        %v2951 = vpop.f32.mrb[0].mxu0
        %v2952 = vadd.f32 0.0, %v2951
        %v2953 = vpop.f32.mrb[0].mxu0
        %2954 = vmatprep.mubr.bf16.mxu0 0
        %2955 = vmatmul.mubr.bf16.gmra.mrb[0].mxu0 %v743
        %v2956 = vpop.f32.mrb[0].mxu0
        %v2957 = vadd.f32 0.0, %v2956
        %v2958 = vpop.f32.mrb[0].mxu0
        %v2959 = vpop.f32.mrb[0].mxu0
        %v2960 = vadd.f32 0.0, %v2959
        %v2961 = vpop.f32.mrb[0].mxu0
        %2962 = vmatprep.mubr.bf16.mxu0 0
        %2963 = vmatmul.mubr.bf16.gmra.mrb[0].mxu0 %v746
        %v2964 = vpop.f32.mrb[0].mxu0
        %v2965 = vadd.f32 0.0, %v2964
        %v2966 = vpop.f32.mrb[0].mxu0
        %v2967 = vpop.f32.mrb[0].mxu0
        %v2968 = vadd.f32 0.0, %v2967
        %v2969 = vpop.f32.mrb[0].mxu0
        %2970 = vmatprep.mubr.bf16.mxu0 0
        %2971 = vmatmul.mubr.bf16.gmra.mrb[0].mxu0 %v749
        %v2972 = vpop.f32.mrb[0].mxu0
        %v2973 = vadd.f32 0.0, %v2972
        %v2974 = vpop.f32.mrb[0].mxu0
        %v2975 = vpop.f32.mrb[0].mxu0
        %v2976 = vadd.f32 0.0, %v2975
        %v2977 = vpop.f32.mrb[0].mxu0
        %2978 = vmatprep.mubr.bf16.mxu0 0
        %2979 = vmatmul.mubr.bf16.gmra.mrb[0].mxu0 %v752
        %v2980 = vpop.f32.mrb[0].mxu0
        %v2981 = vadd.f32 0.0, %v2980
        %v2982 = vpop.f32.mrb[0].mxu0
        %v2983 = vpop.f32.mrb[0].mxu0
        %v2984 = vadd.f32 0.0, %v2983
        %v2985 = vpop.f32.mrb[0].mxu0
        %2986 = vdwg.mxu0
        %2987 = vst.msk [vmem:[#allocation2] sm:$0xff] %vm1396, %v2861
        %2988 = vst.msk [vmem:[#allocation2 + $0x8] sm:$0xff] %vm1396, %v2864
        %2989 = vst.msk [vmem:[#allocation2 + $0x10] sm:$0xff] %vm1396, %v2869
        %2990 = vst.msk [vmem:[#allocation2 + $0x18] sm:$0xff] %vm1396, %v2872
        %2991 = vst.msk [vmem:[#allocation2 + $0x20] sm:$0xff] %vm1396, %v2877
        %2992 = vst.msk [vmem:[#allocation2 + $0x28] sm:$0xff] %vm1396, %v2880
        %2993 = vst.msk [vmem:[#allocation2 + $0x30] sm:$0xff] %vm1396, %v2885
        %2994 = vst.msk [vmem:[#allocation2 + $0x38] sm:$0xff] %vm1396, %v2888
        %2995 = vst.msk [vmem:[#allocation2 + $0x40] sm:$0xff] %vm1396, %v2893
        %2996 = vst.msk [vmem:[#allocation2 + $0x48] sm:$0xff] %vm1396, %v2896
        %2997 = vst.msk [vmem:[#allocation2 + $0x50] sm:$0xff] %vm1396, %v2901
        %2998 = vst.msk [vmem:[#allocation2 + $0x58] sm:$0xff] %vm1396, %v2904
        %2999 = vst.msk [vmem:[#allocation2 + $0x60] sm:$0xff] %vm1396, %v2909
        %3000 = vst.msk [vmem:[#allocation2 + $0x68] sm:$0xff] %vm1396, %v2912
        %3001 = vst.msk [vmem:[#allocation2 + $0x70] sm:$0xff] %vm1396, %v2917
        %3002 = vst.msk [vmem:[#allocation2 + $0x78] sm:$0xff] %vm1396, %v2920
        %3003 = vst.msk [vmem:[#allocation2 + $0x80] sm:$0xff] %vm1396, %v2925
        %3004 = vst.msk [vmem:[#allocation2 + $0x88] sm:$0xff] %vm1396, %v2928
        %3005 = vst.msk [vmem:[#allocation2 + $0x90] sm:$0xff] %vm1396, %v2933
        %3006 = vst.msk [vmem:[#allocation2 + $0x98] sm:$0xff] %vm1396, %v2936
        %3007 = vst.msk [vmem:[#allocation2 + $0xa0] sm:$0xff] %vm1396, %v2941
        %3008 = vst.msk [vmem:[#allocation2 + $0xa8] sm:$0xff] %vm1396, %v2944
        %3009 = vst.msk [vmem:[#allocation2 + $0xb0] sm:$0xff] %vm1396, %v2949
        %3010 = vst.msk [vmem:[#allocation2 + $0xb8] sm:$0xff] %vm1396, %v2952
        %3011 = vst.msk [vmem:[#allocation2 + $0xc0] sm:$0xff] %vm1396, %v2957
        %3012 = vst.msk [vmem:[#allocation2 + $0xc8] sm:$0xff] %vm1396, %v2960
        %3013 = vst.msk [vmem:[#allocation2 + $0xd0] sm:$0xff] %vm1396, %v2965
        %3014 = vst.msk [vmem:[#allocation2 + $0xd8] sm:$0xff] %vm1396, %v2968
        %3015 = vst.msk [vmem:[#allocation2 + $0xe0] sm:$0xff] %vm1396, %v2973
        %3016 = vst.msk [vmem:[#allocation2 + $0xe8] sm:$0xff] %vm1396, %v2976
        %3017 = vst.msk [vmem:[#allocation2 + $0xf0] sm:$0xff] %vm1396, %v2981
        %3018 = vst.msk [vmem:[#allocation2 + $0xf8] sm:$0xff] %vm1396, %v2984
        %v3019 = vld [vmem:[#allocation2] sm:$0xff]
        %v3020 = vld [vmem:[#allocation2 + $0x8] sm:$0xff]
        %v3021 = vld [vmem:[#allocation2 + $0x10] sm:$0xff]
        %v3022 = vld [vmem:[#allocation2 + $0x18] sm:$0xff]
        %v3023 = vld [vmem:[#allocation2 + $0x20] sm:$0xff]
        %v3024 = vld [vmem:[#allocation2 + $0x28] sm:$0xff]
        %v3025 = vld [vmem:[#allocation2 + $0x30] sm:$0xff]
        %v3026 = vld [vmem:[#allocation2 + $0x38] sm:$0xff]
        %v3027 = vld [vmem:[#allocation2 + $0x40] sm:$0xff]
        %v3028 = vld [vmem:[#allocation2 + $0x48] sm:$0xff]
        %v3029 = vld [vmem:[#allocation2 + $0x50] sm:$0xff]
        %v3030 = vld [vmem:[#allocation2 + $0x58] sm:$0xff]
        %v3031 = vld [vmem:[#allocation2 + $0x60] sm:$0xff]
        %v3032 = vld [vmem:[#allocation2 + $0x68] sm:$0xff]
        %v3033 = vld [vmem:[#allocation2 + $0x70] sm:$0xff]
        %v3034 = vld [vmem:[#allocation2 + $0x78] sm:$0xff]
        %v3035 = vld [vmem:[#allocation2 + $0x80] sm:$0xff]
        %v3036 = vld [vmem:[#allocation2 + $0x88] sm:$0xff]
        %v3037 = vld [vmem:[#allocation2 + $0x90] sm:$0xff]
        %v3038 = vld [vmem:[#allocation2 + $0x98] sm:$0xff]
        %v3039 = vld [vmem:[#allocation2 + $0xa0] sm:$0xff]
        %v3040 = vld [vmem:[#allocation2 + $0xa8] sm:$0xff]
        %v3041 = vld [vmem:[#allocation2 + $0xb0] sm:$0xff]
        %v3042 = vld [vmem:[#allocation2 + $0xb8] sm:$0xff]
        %v3043 = vld [vmem:[#allocation2 + $0xc0] sm:$0xff]
        %v3044 = vld [vmem:[#allocation2 + $0xc8] sm:$0xff]
        %v3045 = vld [vmem:[#allocation2 + $0xd0] sm:$0xff]
        %v3046 = vld [vmem:[#allocation2 + $0xd8] sm:$0xff]
        %v3047 = vld [vmem:[#allocation2 + $0xe0] sm:$0xff]
        %v3048 = vld [vmem:[#allocation2 + $0xe8] sm:$0xff]
        %v3049 = vld [vmem:[#allocation2 + $0xf0] sm:$0xff]
        %v3050 = vld [vmem:[#allocation2 + $0xf8] sm:$0xff]
        %s3051 = scalar_lea.vmem %s430, 4
        %v3052 = vld [vmem:[%s3051] sm:$0x1]
        %v3054 = vlaneseq
        %v3055 = vshrl.u32 %v3054, 7
        %v3056 = vsub.s32 0, %v3055
        %v3057 = vrot.slane %v3052, %v3056
        %v3059 = vmul.f32 %v3019, %v3057
        %v3060 = vmul.f32 %v3020, %v3057
        %v3061 = vmul.f32 %v3021, %v3057
        %v3062 = vmul.f32 %v3022, %v3057
        %v3063 = vmul.f32 %v3023, %v3057
        %v3064 = vmul.f32 %v3024, %v3057
        %v3065 = vmul.f32 %v3025, %v3057
        %v3066 = vmul.f32 %v3026, %v3057
        %v3067 = vmul.f32 %v3027, %v3057
        %v3068 = vmul.f32 %v3028, %v3057
        %v3069 = vmul.f32 %v3029, %v3057
        %v3070 = vmul.f32 %v3030, %v3057
        %v3071 = vmul.f32 %v3031, %v3057
        %v3072 = vmul.f32 %v3032, %v3057
        %v3073 = vmul.f32 %v3033, %v3057
        %v3074 = vmul.f32 %v3034, %v3057
        %v3075 = vmul.f32 %v3035, %v3057
        %v3076 = vmul.f32 %v3036, %v3057
        %v3077 = vmul.f32 %v3037, %v3057
        %v3078 = vmul.f32 %v3038, %v3057
        %v3079 = vmul.f32 %v3039, %v3057
        %v3080 = vmul.f32 %v3040, %v3057
        %v3081 = vmul.f32 %v3041, %v3057
        %v3082 = vmul.f32 %v3042, %v3057
        %v3083 = vmul.f32 %v3043, %v3057
        %v3084 = vmul.f32 %v3044, %v3057
        %v3085 = vmul.f32 %v3045, %v3057
        %v3086 = vmul.f32 %v3046, %v3057
        %v3087 = vmul.f32 %v3047, %v3057
        %v3088 = vmul.f32 %v3048, %v3057
        %v3089 = vmul.f32 %v3049, %v3057
        %v3090 = vmul.f32 %v3050, %v3057
        %s3091 = scalar_lea.vmem %s433, 4
        %v3092 = vld [vmem:[%s3091] sm:$0x1]
        %v3094 = vlaneseq
        %v3095 = vshrl.u32 %v3094, 7
        %v3096 = vsub.s32 0, %v3095
        %v3097 = vrot.slane %v3092, %v3096
        %v3099 = vadd.f32 %v3059, %v3097
        %v3100 = vadd.f32 %v3060, %v3097
        %v3101 = vadd.f32 %v3061, %v3097
        %v3102 = vadd.f32 %v3062, %v3097
        %v3103 = vadd.f32 %v3063, %v3097
        %v3104 = vadd.f32 %v3064, %v3097
        %v3105 = vadd.f32 %v3065, %v3097
        %v3106 = vadd.f32 %v3066, %v3097
        %v3107 = vadd.f32 %v3067, %v3097
        %v3108 = vadd.f32 %v3068, %v3097
        %v3109 = vadd.f32 %v3069, %v3097
        %v3110 = vadd.f32 %v3070, %v3097
        %v3111 = vadd.f32 %v3071, %v3097
        %v3112 = vadd.f32 %v3072, %v3097
        %v3113 = vadd.f32 %v3073, %v3097
        %v3114 = vadd.f32 %v3074, %v3097
        %v3115 = vadd.f32 %v3075, %v3097
        %v3116 = vadd.f32 %v3076, %v3097
        %v3117 = vadd.f32 %v3077, %v3097
        %v3118 = vadd.f32 %v3078, %v3097
        %v3119 = vadd.f32 %v3079, %v3097
        %v3120 = vadd.f32 %v3080, %v3097
        %v3121 = vadd.f32 %v3081, %v3097
        %v3122 = vadd.f32 %v3082, %v3097
        %v3123 = vadd.f32 %v3083, %v3097
        %v3124 = vadd.f32 %v3084, %v3097
        %v3125 = vadd.f32 %v3085, %v3097
        %v3126 = vadd.f32 %v3086, %v3097
        %v3127 = vadd.f32 %v3087, %v3097
        %v3128 = vadd.f32 %v3088, %v3097
        %v3129 = vadd.f32 %v3089, %v3097
        %v3130 = vadd.f32 %v3090, %v3097
        %v3131 = vmax.f32 %v3099, 0.0
        %v3132 = vmax.f32 %v3100, 0.0
        %v3133 = vmax.f32 %v3101, 0.0
        %v3134 = vmax.f32 %v3102, 0.0
        %v3135 = vmax.f32 %v3103, 0.0
        %v3136 = vmax.f32 %v3104, 0.0
        %v3137 = vmax.f32 %v3105, 0.0
        %v3138 = vmax.f32 %v3106, 0.0
        %v3139 = vmax.f32 %v3107, 0.0
        %v3140 = vmax.f32 %v3108, 0.0
        %v3141 = vmax.f32 %v3109, 0.0
        %v3142 = vmax.f32 %v3110, 0.0
        %v3143 = vmax.f32 %v3111, 0.0
        %v3144 = vmax.f32 %v3112, 0.0
        %v3145 = vmax.f32 %v3113, 0.0
        %v3146 = vmax.f32 %v3114, 0.0
        %v3147 = vmax.f32 %v3115, 0.0
        %v3148 = vmax.f32 %v3116, 0.0
        %v3149 = vmax.f32 %v3117, 0.0
        %v3150 = vmax.f32 %v3118, 0.0
        %v3151 = vmax.f32 %v3119, 0.0
        %v3152 = vmax.f32 %v3120, 0.0
        %v3153 = vmax.f32 %v3121, 0.0
        %v3154 = vmax.f32 %v3122, 0.0
        %v3155 = vmax.f32 %v3123, 0.0
        %v3156 = vmax.f32 %v3124, 0.0
        %v3157 = vmax.f32 %v3125, 0.0
        %v3158 = vmax.f32 %v3126, 0.0
        %v3159 = vmax.f32 %v3127, 0.0
        %v3160 = vmax.f32 %v3128, 0.0
        %v3161 = vmax.f32 %v3129, 0.0
        %v3162 = vmax.f32 %v3130, 0.0
        %v3163 = vpack.c.bf16 %v3132, %v3131
        %v3164 = vpack.c.bf16 %v3134, %v3133
        %v3165 = vpack.c.bf16 %v3136, %v3135
        %v3166 = vpack.c.bf16 %v3138, %v3137
        %v3167 = vpack.c.bf16 %v3140, %v3139
        %v3168 = vpack.c.bf16 %v3142, %v3141
        %v3169 = vpack.c.bf16 %v3144, %v3143
        %v3170 = vpack.c.bf16 %v3146, %v3145
        %v3171 = vpack.c.bf16 %v3148, %v3147
        %v3172 = vpack.c.bf16 %v3150, %v3149
        %v3173 = vpack.c.bf16 %v3152, %v3151
        %v3174 = vpack.c.bf16 %v3154, %v3153
        %v3175 = vpack.c.bf16 %v3156, %v3155
        %v3176 = vpack.c.bf16 %v3158, %v3157
        %v3177 = vpack.c.bf16 %v3160, %v3159
        %v3178 = vpack.c.bf16 %v3162, %v3161
        %v3195 = vunpack.c.l.b16 %v3163
        %v3196 = vunpack.c.h.b16 %v3163
        %v3197 = vunpack.c.l.b16 %v3164
        %v3198 = vunpack.c.h.b16 %v3164
        %v3199 = vunpack.c.l.b16 %v3165
        %v3200 = vunpack.c.h.b16 %v3165
        %v3201 = vunpack.c.l.b16 %v3166
        %v3202 = vunpack.c.h.b16 %v3166
        %v3203 = vunpack.c.l.b16 %v3167
        %v3204 = vunpack.c.h.b16 %v3167
        %v3205 = vunpack.c.l.b16 %v3168
        %v3206 = vunpack.c.h.b16 %v3168
        %v3207 = vunpack.c.l.b16 %v3169
        %v3208 = vunpack.c.h.b16 %v3169
        %v3209 = vunpack.c.l.b16 %v3170
        %v3210 = vunpack.c.h.b16 %v3170
        %v3211 = vunpack.c.l.b16 %v3171
        %v3212 = vunpack.c.h.b16 %v3171
        %v3213 = vunpack.c.l.b16 %v3172
        %v3214 = vunpack.c.h.b16 %v3172
        %v3215 = vunpack.c.l.b16 %v3173
        %v3216 = vunpack.c.h.b16 %v3173
        %v3217 = vunpack.c.l.b16 %v3174
        %v3218 = vunpack.c.h.b16 %v3174
        %v3219 = vunpack.c.l.b16 %v3175
        %v3220 = vunpack.c.h.b16 %v3175
        %v3221 = vunpack.c.l.b16 %v3176
        %v3222 = vunpack.c.h.b16 %v3176
        %v3223 = vunpack.c.l.b16 %v3177
        %v3224 = vunpack.c.h.b16 %v3177
        %v3225 = vunpack.c.l.b16 %v3178
        %v3226 = vunpack.c.h.b16 %v3178
        %v3227 = vpack.c.b16 %v3195, %v3195
        %v3228 = vpack.c.b16 %v3196, %v3196
        %v3229 = vpack.c.b16 %v3197, %v3197
        %v3230 = vpack.c.b16 %v3198, %v3198
        %v3231 = vpack.c.b16 %v3199, %v3199
        %v3232 = vpack.c.b16 %v3200, %v3200
        %v3233 = vpack.c.b16 %v3201, %v3201
        %v3234 = vpack.c.b16 %v3202, %v3202
        %v3235 = vpack.c.b16 %v3203, %v3203
        %v3236 = vpack.c.b16 %v3204, %v3204
        %v3237 = vpack.c.b16 %v3205, %v3205
        %v3238 = vpack.c.b16 %v3206, %v3206
        %v3239 = vpack.c.b16 %v3207, %v3207
        %v3240 = vpack.c.b16 %v3208, %v3208
        %v3241 = vpack.c.b16 %v3209, %v3209
        %v3242 = vpack.c.b16 %v3210, %v3210
        %v3243 = vpack.c.b16 %v3211, %v3211
        %v3244 = vpack.c.b16 %v3212, %v3212
        %v3245 = vpack.c.b16 %v3213, %v3213
        %v3246 = vpack.c.b16 %v3214, %v3214
        %v3247 = vpack.c.b16 %v3215, %v3215
        %v3248 = vpack.c.b16 %v3216, %v3216
        %v3249 = vpack.c.b16 %v3217, %v3217
        %v3250 = vpack.c.b16 %v3218, %v3218
        %v3251 = vpack.c.b16 %v3219, %v3219
        %v3252 = vpack.c.b16 %v3220, %v3220
        %v3253 = vpack.c.b16 %v3221, %v3221
        %v3254 = vpack.c.b16 %v3222, %v3222
        %v3255 = vpack.c.b16 %v3223, %v3223
        %v3256 = vpack.c.b16 %v3224, %v3224
        %v3257 = vpack.c.b16 %v3225, %v3225
        %v3258 = vpack.c.b16 %v3226, %v3226
        %s3291 = scalar_lea.vmem %s401, 512 [#allocation3]
        %3292 = vst.msk [vmem:[%s3291] sm:$0xf] %vm672, %v3227
        %3293 = vst.msk [vmem:[%s3291 + $0x4] sm:$0xf] %vm672, %v3228
        %3294 = vst.msk [vmem:[%s3291 + $0x8] sm:$0xf] %vm672, %v3229
        %3295 = vst.msk [vmem:[%s3291 + $0xc] sm:$0xf] %vm672, %v3230
        %3296 = vst.msk [vmem:[%s3291 + $0x10] sm:$0xf] %vm672, %v3231
        %3297 = vst.msk [vmem:[%s3291 + $0x14] sm:$0xf] %vm672, %v3232
        %3298 = vst.msk [vmem:[%s3291 + $0x18] sm:$0xf] %vm672, %v3233
        %3299 = vst.msk [vmem:[%s3291 + $0x1c] sm:$0xf] %vm672, %v3234
        %3300 = vst.msk [vmem:[%s3291 + $0x20] sm:$0xf] %vm672, %v3235
        %3301 = vst.msk [vmem:[%s3291 + $0x24] sm:$0xf] %vm672, %v3236
        %3302 = vst.msk [vmem:[%s3291 + $0x28] sm:$0xf] %vm672, %v3237
        %3303 = vst.msk [vmem:[%s3291 + $0x2c] sm:$0xf] %vm672, %v3238
        %3304 = vst.msk [vmem:[%s3291 + $0x30] sm:$0xf] %vm672, %v3239
        %3305 = vst.msk [vmem:[%s3291 + $0x34] sm:$0xf] %vm672, %v3240
        %3306 = vst.msk [vmem:[%s3291 + $0x38] sm:$0xf] %vm672, %v3241
        %3307 = vst.msk [vmem:[%s3291 + $0x3c] sm:$0xf] %vm672, %v3242
        %3308 = vst.msk [vmem:[%s3291 + $0x40] sm:$0xf] %vm672, %v3243
        %3309 = vst.msk [vmem:[%s3291 + $0x44] sm:$0xf] %vm672, %v3244
        %3310 = vst.msk [vmem:[%s3291 + $0x48] sm:$0xf] %vm672, %v3245
        %3311 = vst.msk [vmem:[%s3291 + $0x4c] sm:$0xf] %vm672, %v3246
        %3312 = vst.msk [vmem:[%s3291 + $0x50] sm:$0xf] %vm672, %v3247
        %3313 = vst.msk [vmem:[%s3291 + $0x54] sm:$0xf] %vm672, %v3248
        %3314 = vst.msk [vmem:[%s3291 + $0x58] sm:$0xf] %vm672, %v3249
        %3315 = vst.msk [vmem:[%s3291 + $0x5c] sm:$0xf] %vm672, %v3250
        %3316 = vst.msk [vmem:[%s3291 + $0x60] sm:$0xf] %vm672, %v3251
        %3317 = vst.msk [vmem:[%s3291 + $0x64] sm:$0xf] %vm672, %v3252
        %3318 = vst.msk [vmem:[%s3291 + $0x68] sm:$0xf] %vm672, %v3253
        %3319 = vst.msk [vmem:[%s3291 + $0x6c] sm:$0xf] %vm672, %v3254
        %3320 = vst.msk [vmem:[%s3291 + $0x70] sm:$0xf] %vm672, %v3255
        %3321 = vst.msk [vmem:[%s3291 + $0x74] sm:$0xf] %vm672, %v3256
        %3322 = vst.msk [vmem:[%s3291 + $0x78] sm:$0xf] %vm672, %v3257
        %3323 = vst.msk [vmem:[%s3291 + $0x7c] sm:$0xf] %vm672, %v3258
        %s3324 = sand.u32 %s252, 1
        %s3325 = scalar_lea.sflag [#allocation4], %s3324
        %s3326 = sand.u32 %s252, 1
        %s3327 = smul.addr %s3326, 640
        %s3328 = scalar_lea.vmem [#allocation3], %s3327
        // Predicated region
        $region53: #{tpu_custom_call.1} parent=51 // pred_check
          %p3329 = pneg %p262
        $region54: #{tpu_custom_call.1} parent=51 // pred_check_branch
          %3331 = sbr.rel (%p3329) target = $region56
        $region55: #{tpu_custom_call.1} parent=51 // pred_region
          %s3333 = ssub.s32 10240, 10240
          %3334 = vsyncadd %s3325, %s3333
          %s3335 = smul.addr %s27, 160
          %s3336 = sadd.s32 %s26, %s3335
          %s3337 = smul.addr %s3336, 64
          %s3338 = scalar_lea.hbm %s8, %s3337
          %s3339 = sshll.u32 %s3328, 4
          %s3340 = int_to_ptr.vmem [resolvable:$true] %s3339
          %3345 = dma.vmem_to_hbm [thread:$0]  %s3340, 10240, %s3338, %s3325, 64, 64, 4
        $region56: #{tpu_custom_call.1} parent=51 // pred_fallthru
          _
      $region52: #{tpu_custom_call.1} parent=5 // pred_fallthru
        _
      %p3346 = scmp.le.s32.totalorder 2, %s17
      // Predicated region
      $region57: #{tpu_custom_call.1} parent=5 // pred_check
        %p3347 = pneg %p3346
      $region58: #{tpu_custom_call.1} parent=5 // pred_check_branch
        %3349 = sbr.rel (%p3347) target = $region60
      $region59: #{tpu_custom_call.1} parent=5 // pred_region
        %s3350 = ssub.s32 %s17, 2
        // Predicated region
        $region61: #{tpu_custom_call.1} parent=59 // pred_check
          %p3351 = pneg %p268
        $region62: #{tpu_custom_call.1} parent=59 // pred_check_branch
          %3353 = sbr.rel (%p3351) target = $region64
        $region63: #{tpu_custom_call.1} parent=59 // pred_region
          %s3354 = sand.u32 %s253, 1
          %s3355 = scalar_lea.sflag [#allocation4], %s3354
          %s3356 = sand.u32 %s253, 1
          %s3357 = smul.addr %s3356, 640
          %s3358 = scalar_lea.vmem [#allocation3], %s3357
          %3359 = dma.done %s3355, 10240
        $region64: #{tpu_custom_call.1} parent=59 // pred_fallthru
          _
      $region60: #{tpu_custom_call.1} parent=5 // pred_fallthru
        _
    $region6: #{tpu_custom_call.1} parent=1 // loop_footer
      %s21 = sadd.s32 1, %s17
    $region7: #{tpu_custom_call.1} parent=1 // loop_footer_branch
      %16 = sbr.rel target = $region3
    $region8: #{tpu_custom_call.1} parent=1 // loop_exit
      _
    %3360 = vsyncpa [#allocation4], 1
    %s3361 = scalar_lea.sflag [#allocation4], 1
    %3362 = vsyncpa %s3361, 1

</llo_original>
